<compile_context>
chip_gen: v5e
topology: v5e:2x2
jax: 0.10.0
libtpu: 0.0.40
codegen_flags: <defaults>
</compile_context>

<pallas_src>
import functools

import jax
import jax.numpy as jnp
from jax import lax
from jax.experimental import pallas as pl
from jax.experimental.pallas import tpu as pltpu


def _round_up(x, m):
    return ((x + m - 1) // m) * m


def _hardswish(x):
    return x * (jnp.clip(x + 3.0, 0.0, 6.0) * (1.0 / 6.0))


def _hardsigmoid(x):
    return jnp.clip(x + 3.0, 0.0, 6.0) * (1.0 / 6.0)


# -----------------------------------------------------------------------------
# fused CBANet kernel (one grid step == one batch element, channels-first)
# -----------------------------------------------------------------------------
def _make_kernel(H, W, K, pad_off, pad_len):
    HW = H * W
    R = K // 2

    def kernel(x_ref, w1t_ref, b1r_ref, w2_ref, b2c_ref, wfc_ref,
               wpt_ref, bpc_ref, spw_ref, sb_ref, o_ref, pad_ref):
        xv = x_ref[0]                                              # (C, HW) f32, HW on lanes

        # ---------------- ChannelAttention ----------------
        # adaptive_avg_pool2d(x, 1): per-channel mean over spatial positions.
        pooled = jnp.mean(xv, axis=1, keepdims=True)               # (C, 1)
        # Conv2d(C, Cs, 1) + Hardswish   (VPU broadcast + sublane reduce)
        h = jnp.sum(w1t_ref[...] * pooled, axis=0, keepdims=True) + b1r_ref[...]   # (1, Cs)
        h = _hardswish(h)
        # Conv2d(Cs, C, 1) + Hardsigmoid (VPU broadcast + lane reduce)
        ca = jnp.sum(w2_ref[...] * h, axis=1, keepdims=True) + b2c_ref[...]        # (C, 1)
        ca = _hardsigmoid(ca)
        y = xv * ca                                                # (C, HW)

        # ---------------- SpatialAttention: per-position maps ----------------
        mean_row = jnp.mean(y, axis=0, keepdims=True)              # (1, HW) channel mean
        fc_row = _hardswish(
            jnp.sum(y * wfc_ref[...], axis=0, keepdims=True) + sb_ref[0])          # (1, HW)

        # Lane-major zero-padded maps: only the halo needs zeroing (the
        # interior is fully overwritten every grid step).
        pad_ref[0:2, 0:pad_off] = jnp.zeros((2, pad_off), jnp.float32)
        pad_ref[0:2, pad_off + HW:pad_len] = jnp.zeros(
            (2, pad_len - pad_off - HW), jnp.float32)
        pad_ref[0:1, pad_off:pad_off + HW] = mean_row
        pad_ref[1:2, pad_off:pad_off + HW] = fc_row

        # KxK conv (stride 1, pad K//2): 49 taps, each a (1, HW) lane slice of
        # the padded buffer.  H-boundary: zero halo.  W-boundary: 7 lane masks.
        col = lax.broadcasted_iota(jnp.int32, (1, HW), 1) % W
        cmasks = [jnp.logical_and(col + dw >= 0, col + dw < W)
                  for dw in range(-R, R + 1)]

        acc = jnp.zeros((1, HW), jnp.float32)
        for dh in range(-R, R + 1):
            for dw in range(-R, R + 1):
                t = (dh + R) * K + (dw + R)
                k0 = pad_off + dh * W + dw
                tap = (spw_ref[0, t] * pad_ref[0:1, k0:k0 + HW]
                       + spw_ref[1, t] * pad_ref[1:2, k0:k0 + HW])
                acc = acc + jnp.where(cmasks[dw + R], tap, 0.0)
        s = _hardsigmoid(acc + sb_ref[1])                          # (1, HW)

        # -------- spatial scale + 1x1 projection with folded BatchNorm --------
        z = (y * s).astype(jnp.bfloat16)                           # (C, HW) bf16
        o_ref[0] = (jnp.dot(wpt_ref[...], z, preferred_element_type=jnp.float32)
                    + bpc_ref[...])                                # (Cout, HW) f32

    return kernel


# -----------------------------------------------------------------------------
# public wrapper: NCHW in -> NCHW out (reshapes only, no transposes)
# -----------------------------------------------------------------------------
def cbanet_forward(x_nchw, params, kernel_size=7):
    N, C, H, W = x_nchw.shape
    HW = H * W
    K = kernel_size
    R = K // 2
    Cs = params["ca_w1"].shape[0]
    Cout = params["proj_w"].shape[0]

    halo = R * W + R
    pad_off = _round_up(max(halo, 1), 128)
    pad_len = _round_up(pad_off + HW + halo, 128)

    # NCHW -> (N, C, H*W): a pure reshape, no HBM transpose round trip.
    x3 = x_nchw.reshape(N, C, HW).astype(jnp.float32)

    # ---- tiny weight preprocessing (folded under jit) ----
    w1t = jnp.transpose(params["ca_w1"][:, :, 0, 0])               # (C, Cs)
    b1r = params["ca_b1"].reshape(1, Cs)
    w2 = params["ca_w2"][:, :, 0, 0]                               # (C, Cs)
    b2c = params["ca_b2"].reshape(C, 1)
    wfc = params["fc_w"][0, :, 0, 0].reshape(C, 1)                 # (C, 1)
    spw = params["sp_w"][0].reshape(2, K * K)                      # (2, K*K): ch0=mean, ch1=fc
    sb = jnp.stack([params["fc_b"][0], params["sp_b"][0]])         # (2,): [fc bias, spatial bias]
    # fold eval-mode BatchNorm2d into the 1x1 projection; bf16 MXU operands
    scale = params["bn_gamma"] * lax.rsqrt(params["bn_var"] + 1e-5)
    wpt = (params["proj_w"][:, :, 0, 0] * scale[:, None]).astype(jnp.bfloat16)     # (Cout, C)
    bpc = ((params["proj_b"] - params["bn_mean"]) * scale
           + params["bn_beta"]).reshape(Cout, 1)                   # (Cout, 1) f32

    kernel = _make_kernel(H, W, K, pad_off, pad_len)

    out = pl.pallas_call(
        kernel,
        out_shape=jax.ShapeDtypeStruct((N, Cout, HW), jnp.float32),
        grid_spec=pltpu.PrefetchScalarGridSpec(
            num_scalar_prefetch=0,
            grid=(N,),
            in_specs=[
                pl.BlockSpec((1, C, HW), lambda n: (n, 0, 0)),      # x (one image / step)
                pl.BlockSpec((C, Cs), lambda n: (0, 0)),            # channel-MLP W1^T
                pl.BlockSpec((1, Cs), lambda n: (0, 0)),            # channel-MLP b1
                pl.BlockSpec((C, Cs), lambda n: (0, 0)),            # channel-MLP W2
                pl.BlockSpec((C, 1), lambda n: (0, 0)),             # channel-MLP b2
                pl.BlockSpec((C, 1), lambda n: (0, 0)),             # spatial fc weight
                pl.BlockSpec((Cout, C), lambda n: (0, 0)),          # projection (BN folded, bf16)
                pl.BlockSpec((Cout, 1), lambda n: (0, 0)),          # projection bias (BN folded)
                pl.BlockSpec(memory_space=pltpu.MemorySpace.SMEM),  # 7x7 weights (2, K*K)
                pl.BlockSpec(memory_space=pltpu.MemorySpace.SMEM),  # [fc bias, spatial bias]
            ],
            out_specs=pl.BlockSpec((1, Cout, HW), lambda n: (n, 0, 0)),
            scratch_shapes=[pltpu.VMEM((2, pad_len), jnp.float32)],
        ),
        compiler_params=pltpu.CompilerParams(dimension_semantics=("parallel",)),
    )(x3, w1t, b1r, w2, b2c, wfc, wpt, bpc, spw, sb)

    return out.reshape(N, Cout, H, W)                               # NCHW


# -----------------------------------------------------------------------------
# pure-JAX reference of the PyTorch forward (f32, HIGHEST precision)
# -----------------------------------------------------------------------------
def cbanet_reference(x, params, kernel_size=7):
    K = kernel_size
    R = K // 2
    hp = lax.Precision.HIGHEST
    x = x.astype(jnp.float32)

    # ChannelAttention
    pooled = x.mean(axis=(2, 3))                                   # (N, C)
    h = _hardswish(jnp.einsum("nc,jc->nj", pooled, params["ca_w1"][:, :, 0, 0],
                              precision=hp) + params["ca_b1"])
    ca = _hardsigmoid(jnp.einsum("nj,cj->nc", h, params["ca_w2"][:, :, 0, 0],
                                 precision=hp) + params["ca_b2"])
    y = x * ca[:, :, None, None]

    # SpatialAttention
    mean_map = y.mean(axis=1, keepdims=True)                       # (N,1,H,W)
    fc_map = _hardswish(jnp.einsum("nchw,c->nhw", y, params["fc_w"][0, :, 0, 0],
                                   precision=hp)[:, None] + params["fc_b"][0])
    f = jnp.concatenate([mean_map, fc_map], axis=1)                # (N,2,H,W)
    s = _hardsigmoid(
        lax.conv_general_dilated(f, params["sp_w"], (1, 1), [(R, R), (R, R)],
                                 dimension_numbers=("NCHW", "OIHW", "NCHW"),
                                 precision=hp) + params["sp_b"][0])
    z = y * s

    # 1x1 projection + eval-mode BatchNorm
    out = (jnp.einsum("nchw,oc->nohw", z, params["proj_w"][:, :, 0, 0], precision=hp)
           + params["proj_b"][None, :, None, None])
    scale = params["bn_gamma"] * lax.rsqrt(params["bn_var"] + 1e-5)
    out = ((out - params["bn_mean"][None, :, None, None]) * scale[None, :, None, None]
           + params["bn_beta"][None, :, None, None])
    return out


# -----------------------------------------------------------------------------
# deterministic parameter init (matches PyTorch module's parameter shapes)
# -----------------------------------------------------------------------------
def init_params(key, in_planes, out_planes, kernel_size=7, shrink_factor=4):
    Cs = max(in_planes // shrink_factor, 1)
    ks = jax.random.split(key, 14)

    def conv_w(k, cout, cin, kh, kw):
        fan_in = float(cin * kh * kw)
        return jax.random.normal(k, (cout, cin, kh, kw), jnp.float32) / (fan_in ** 0.5)

    def bias(k, n):
        return 0.02 * jax.random.normal(k, (n,), jnp.float32)

    return dict(
        ca_w1=conv_w(ks[0], Cs, in_planes, 1, 1), ca_b1=bias(ks[1], Cs),
        ca_w2=conv_w(ks[2], in_planes, Cs, 1, 1), ca_b2=bias(ks[3], in_planes),
        fc_w=conv_w(ks[4], 1, in_planes, 1, 1), fc_b=bias(ks[5], 1),
        sp_w=conv_w(ks[6], 1, 2, kernel_size, kernel_size), sp_b=bias(ks[7], 1),
        proj_w=conv_w(ks[8], out_planes, in_planes, 1, 1), proj_b=bias(ks[9], out_planes),
        bn_gamma=1.0 + 0.1 * jax.random.normal(ks[10], (out_planes,), jnp.float32),
        bn_beta=0.05 * jax.random.normal(ks[11], (out_planes,), jnp.float32),
        bn_mean=0.05 * jax.random.normal(ks[12], (out_planes,), jnp.float32),
        bn_var=0.5 + jax.random.uniform(ks[13], (out_planes,), jnp.float32),
    )


# -----------------------------------------------------------------------------
if __name__ == "__main__":
    IN_PLANES, OUT_PLANES, KSIZE, SHRINK = 32, 128, 7, 4
    N, H, W = 2, 16, 16

    key = jax.random.PRNGKey(0)
    kx, kp = jax.random.split(key)
    x = jax.random.normal(kx, (N, IN_PLANES, H, W), jnp.float32)
    params = init_params(kp, IN_PLANES, OUT_PLANES, KSIZE, SHRINK)

    fwd = jax.jit(functools.partial(cbanet_forward, kernel_size=KSIZE))
    out = jax.block_until_ready(fwd(x, params))

    assert out.shape == (N, OUT_PLANES, H, W), out.shape
    assert bool(jnp.all(jnp.isfinite(out)))

    # numeric check vs pure-JAX reference (bf16 projection => loose tolerance)
    ref = cbanet_reference(x, params, KSIZE)
    err = float(jnp.max(jnp.abs(out - ref)))
    ref_mag = float(jnp.max(jnp.abs(ref)))
    assert err <= 3e-2 * ref_mag + 3e-3, (err, ref_mag)

    print("KERNEL_OK")
</pallas_src>

<mosaic_0001>
module attributes {stable_mosaic.version = 11 : i64} {
  func.func @kernel(%arg0: i32, %arg1: memref<1x32x256xf32, #tpu.memory_space<vmem>>, %arg2: memref<32x8xf32, #tpu.memory_space<vmem>>, %arg3: memref<1x8xf32, #tpu.memory_space<vmem>>, %arg4: memref<32x8xf32, #tpu.memory_space<vmem>>, %arg5: memref<32x1xf32, #tpu.memory_space<vmem>>, %arg6: memref<32x1xf32, #tpu.memory_space<vmem>>, %arg7: memref<128x32xbf16, #tpu.memory_space<vmem>>, %arg8: memref<128x1xf32, #tpu.memory_space<vmem>>, %arg9: memref<2x49xf32, #tpu.memory_space<smem>>, %arg10: memref<2xf32, #tpu.memory_space<smem>>, %arg11: memref<1x128x256xf32, #tpu.memory_space<vmem>>, %arg12: memref<2x512xf32, #tpu.memory_space<vmem>>) attributes {dimension_semantics = [#tpu.dimension_semantics<parallel>], iteration_bounds = array<i64: 2>, scalar_prefetch = 0 : i64, scratch_operands = 1 : i64, tpu.core_type = #tpu.core_type<tc>, window_params = [{transform_indices = @transform_0, window_bounds = array<i64: 1, 32, 256>}, {pipeline_mode = #tpu.pipeline_mode<synchronous>, transform_indices = @transform_1, window_bounds = array<i64: 32, 8>}, {pipeline_mode = #tpu.pipeline_mode<synchronous>, transform_indices = @transform_2, window_bounds = array<i64: 1, 8>}, {pipeline_mode = #tpu.pipeline_mode<synchronous>, transform_indices = @transform_3, window_bounds = array<i64: 32, 8>}, {pipeline_mode = #tpu.pipeline_mode<synchronous>, transform_indices = @transform_4, window_bounds = array<i64: 32, 1>}, {pipeline_mode = #tpu.pipeline_mode<synchronous>, transform_indices = @transform_5, window_bounds = array<i64: 32, 1>}, {pipeline_mode = #tpu.pipeline_mode<synchronous>, transform_indices = @transform_6, window_bounds = array<i64: 128, 32>}, {pipeline_mode = #tpu.pipeline_mode<synchronous>, transform_indices = @transform_7, window_bounds = array<i64: 128, 1>}, {transform_indices = @transform_8, window_bounds = array<i64: 2, 49>}, {transform_indices = @transform_9, window_bounds = array<i64: 2>}, {transform_indices = @transform_10, window_bounds = array<i64: 1, 128, 256>}]} {
    %c0 = arith.constant 0 : index
    %c0_0 = arith.constant 0 : index
    %c0_1 = arith.constant 0 : index
    %0 = vector.load %arg1[%c0, %c0_0, %c0_1] : memref<1x32x256xf32, #tpu.memory_space<vmem>>, vector<1x32x256xf32>
    %1 = vector.shape_cast %0 : vector<1x32x256xf32> to vector<32x256xf32>
    %cst = arith.constant dense<0.000000e+00> : vector<32xf32>
    %2 = vector.multi_reduction <add>, %1, %cst [1] : vector<32x256xf32> to vector<32xf32>
    %3 = vector.shape_cast %2 : vector<32xf32> to vector<32x1xf32>
    %cst_2 = arith.constant 2.560000e+02 : f32
    %4 = vector.broadcast %cst_2 : f32 to vector<32x1xf32>
    %5 = arith.divf %3, %4 : vector<32x1xf32>
    %c0_3 = arith.constant 0 : index
    %c0_4 = arith.constant 0 : index
    %6 = vector.load %arg2[%c0_3, %c0_4] : memref<32x8xf32, #tpu.memory_space<vmem>>, vector<32x8xf32>
    %7 = vector.broadcast %5 : vector<32x1xf32> to vector<32x8xf32>
    %8 = arith.mulf %6, %7 : vector<32x8xf32>
    %cst_5 = arith.constant dense<0.000000e+00> : vector<8xf32>
    %9 = vector.multi_reduction <add>, %8, %cst_5 [0] : vector<32x8xf32> to vector<8xf32>
    %10 = vector.shape_cast %9 : vector<8xf32> to vector<1x8xf32>
    %c0_6 = arith.constant 0 : index
    %c0_7 = arith.constant 0 : index
    %11 = vector.load %arg3[%c0_6, %c0_7] : memref<1x8xf32, #tpu.memory_space<vmem>>, vector<1x8xf32>
    %12 = arith.addf %10, %11 : vector<1x8xf32>
    %cst_8 = arith.constant 3.000000e+00 : f32
    %13 = vector.broadcast %cst_8 : f32 to vector<1x8xf32>
    %14 = arith.addf %12, %13 : vector<1x8xf32>
    %cst_9 = arith.constant 0.000000e+00 : f32
    %cst_10 = arith.constant 6.000000e+00 : f32
    %15 = vector.broadcast %cst_9 : f32 to vector<1x8xf32>
    %16 = arith.maximumf %15, %14 : vector<1x8xf32>
    %17 = vector.broadcast %cst_10 : f32 to vector<1x8xf32>
    %18 = arith.minimumf %17, %16 : vector<1x8xf32>
    %cst_11 = arith.constant 0.166666672 : f32
    %19 = vector.broadcast %cst_11 : f32 to vector<1x8xf32>
    %20 = arith.mulf %18, %19 : vector<1x8xf32>
    %21 = arith.mulf %12, %20 : vector<1x8xf32>
    %c0_12 = arith.constant 0 : index
    %c0_13 = arith.constant 0 : index
    %22 = vector.load %arg4[%c0_12, %c0_13] : memref<32x8xf32, #tpu.memory_space<vmem>>, vector<32x8xf32>
    %23 = vector.broadcast %21 : vector<1x8xf32> to vector<32x8xf32>
    %24 = arith.mulf %22, %23 : vector<32x8xf32>
    %cst_14 = arith.constant dense<0.000000e+00> : vector<32xf32>
    %25 = vector.multi_reduction <add>, %24, %cst_14 [1] : vector<32x8xf32> to vector<32xf32>
    %26 = vector.shape_cast %25 : vector<32xf32> to vector<32x1xf32>
    %c0_15 = arith.constant 0 : index
    %c0_16 = arith.constant 0 : index
    %27 = vector.load %arg5[%c0_15, %c0_16] : memref<32x1xf32, #tpu.memory_space<vmem>>, vector<32x1xf32>
    %28 = arith.addf %26, %27 : vector<32x1xf32>
    %cst_17 = arith.constant 3.000000e+00 : f32
    %29 = vector.broadcast %cst_17 : f32 to vector<32x1xf32>
    %30 = arith.addf %28, %29 : vector<32x1xf32>
    %cst_18 = arith.constant 0.000000e+00 : f32
    %cst_19 = arith.constant 6.000000e+00 : f32
    %31 = vector.broadcast %cst_18 : f32 to vector<32x1xf32>
    %32 = arith.maximumf %31, %30 : vector<32x1xf32>
    %33 = vector.broadcast %cst_19 : f32 to vector<32x1xf32>
    %34 = arith.minimumf %33, %32 : vector<32x1xf32>
    %cst_20 = arith.constant 0.166666672 : f32
    %35 = vector.broadcast %cst_20 : f32 to vector<32x1xf32>
    %36 = arith.mulf %34, %35 : vector<32x1xf32>
    %37 = vector.broadcast %36 : vector<32x1xf32> to vector<32x256xf32>
    %38 = arith.mulf %1, %37 : vector<32x256xf32>
    %cst_21 = arith.constant dense<0.000000e+00> : vector<256xf32>
    %39 = vector.multi_reduction <add>, %38, %cst_21 [0] : vector<32x256xf32> to vector<256xf32>
    %40 = vector.shape_cast %39 : vector<256xf32> to vector<1x256xf32>
    %cst_22 = arith.constant 3.200000e+01 : f32
    %41 = vector.broadcast %cst_22 : f32 to vector<1x256xf32>
    %42 = arith.divf %40, %41 : vector<1x256xf32>
    %c0_23 = arith.constant 0 : index
    %c0_24 = arith.constant 0 : index
    %43 = vector.load %arg6[%c0_23, %c0_24] : memref<32x1xf32, #tpu.memory_space<vmem>>, vector<32x1xf32>
    %44 = vector.broadcast %43 : vector<32x1xf32> to vector<32x256xf32>
    %45 = arith.mulf %38, %44 : vector<32x256xf32>
    %cst_25 = arith.constant dense<0.000000e+00> : vector<256xf32>
    %46 = vector.multi_reduction <add>, %45, %cst_25 [0] : vector<32x256xf32> to vector<256xf32>
    %47 = vector.shape_cast %46 : vector<256xf32> to vector<1x256xf32>
    %c0_26 = arith.constant 0 : index
    %48 = memref.load %arg10[%c0_26] : memref<2xf32, #tpu.memory_space<smem>>
    %49 = vector.broadcast %48 : f32 to vector<1x256xf32>
    %50 = arith.addf %47, %49 : vector<1x256xf32>
    %cst_27 = arith.constant 3.000000e+00 : f32
    %51 = vector.broadcast %cst_27 : f32 to vector<1x256xf32>
    %52 = arith.addf %50, %51 : vector<1x256xf32>
    %cst_28 = arith.constant 0.000000e+00 : f32
    %cst_29 = arith.constant 6.000000e+00 : f32
    %53 = vector.broadcast %cst_28 : f32 to vector<1x256xf32>
    %54 = arith.maximumf %53, %52 : vector<1x256xf32>
    %55 = vector.broadcast %cst_29 : f32 to vector<1x256xf32>
    %56 = arith.minimumf %55, %54 : vector<1x256xf32>
    %cst_30 = arith.constant 0.166666672 : f32
    %57 = vector.broadcast %cst_30 : f32 to vector<1x256xf32>
    %58 = arith.mulf %56, %57 : vector<1x256xf32>
    %59 = arith.mulf %50, %58 : vector<1x256xf32>
    %cst_31 = arith.constant 0.000000e+00 : f32
    %60 = vector.broadcast %cst_31 : f32 to vector<2x128xf32>
    %c0_32 = arith.constant 0 : index
    %c0_33 = arith.constant 0 : index
    %61 = vector.load %arg12[%c0_32, %c0_33] : memref<2x512xf32, #tpu.memory_space<vmem>>, vector<2x128xf32>
    tpu.vector_store %arg12[%c0_32, %c0_33], %60 {strides = array<i32>} : memref<2x512xf32, #tpu.memory_space<vmem>>, vector<2x128xf32>,
    %cst_34 = arith.constant 0.000000e+00 : f32
    %62 = vector.broadcast %cst_34 : f32 to vector<2x128xf32>
    %c0_35 = arith.constant 0 : index
    %c384 = arith.constant 384 : index
    %63 = vector.load %arg12[%c0_35, %c384] : memref<2x512xf32, #tpu.memory_space<vmem>>, vector<2x128xf32>
    tpu.vector_store %arg12[%c0_35, %c384], %62 {strides = array<i32>} : memref<2x512xf32, #tpu.memory_space<vmem>>, vector<2x128xf32>,
    %c0_36 = arith.constant 0 : index
    %c128 = arith.constant 128 : index
    %64 = vector.load %arg12[%c0_36, %c128] : memref<2x512xf32, #tpu.memory_space<vmem>>, vector<1x256xf32>
    tpu.vector_store %arg12[%c0_36, %c128], %42 {strides = array<i32>} : memref<2x512xf32, #tpu.memory_space<vmem>>, vector<1x256xf32>,
    %c1 = arith.constant 1 : index
    %c128_37 = arith.constant 128 : index
    %65 = vector.load %arg12[%c1, %c128_37] : memref<2x512xf32, #tpu.memory_space<vmem>>, vector<1x256xf32>
    tpu.vector_store %arg12[%c1, %c128_37], %59 {strides = array<i32>} : memref<2x512xf32, #tpu.memory_space<vmem>>, vector<1x256xf32>,
    %66 = tpu.iota {dimensions = array<i32: 1>} : vector<1x256xi32>
    %c16_i32 = arith.constant 16 : i32
    %c0_i32 = arith.constant 0 : i32
    %67 = arith.cmpi eq, %c16_i32, %c0_i32 : i32
    %c1_i32 = arith.constant 1 : i32
    %68 = arith.select %67, %c1_i32, %c16_i32 : i32
    %69 = vector.broadcast %68 : i32 to vector<1x256xi32>
    %70 = arith.remsi %66, %69 : vector<1x256xi32>
    %c0_i32_38 = arith.constant 0 : i32
    %71 = vector.broadcast %c0_i32_38 : i32 to vector<1x256xi32>
    %72 = arith.cmpi ne, %70, %71 : vector<1x256xi32>
    %c0_i32_39 = arith.constant 0 : i32
    %73 = vector.broadcast %c0_i32_39 : i32 to vector<1x256xi32>
    %74 = arith.cmpi slt, %70, %73 : vector<1x256xi32>
    %c0_i32_40 = arith.constant 0 : i32
    %75 = arith.cmpi slt, %68, %c0_i32_40 : i32
    %76 = vector.broadcast %75 : i1 to vector<1x256xi1>
    %77 = vector.broadcast %76 : vector<1x256xi1> to vector<1x256xi1>
    %78 = arith.xori %74, %77 : vector<1x256xi1>
    %79 = arith.andi %78, %72 : vector<1x256xi1>
    %80 = vector.broadcast %68 : i32 to vector<1x256xi32>
    %81 = arith.addi %70, %80 : vector<1x256xi32>
    %82 = arith.select %79, %81, %70 : vector<1x256xi1>, vector<1x256xi32>
    %c-3_i32 = arith.constant -3 : i32
    %83 = vector.broadcast %c-3_i32 : i32 to vector<1x256xi32>
    %84 = arith.addi %82, %83 : vector<1x256xi32>
    %c0_i32_41 = arith.constant 0 : i32
    %85 = vector.broadcast %c0_i32_41 : i32 to vector<1x256xi32>
    %86 = arith.cmpi sge, %84, %85 : vector<1x256xi32>
    %c-3_i32_42 = arith.constant -3 : i32
    %87 = vector.broadcast %c-3_i32_42 : i32 to vector<1x256xi32>
    %88 = arith.addi %82, %87 : vector<1x256xi32>
    %c16_i32_43 = arith.constant 16 : i32
    %89 = vector.broadcast %c16_i32_43 : i32 to vector<1x256xi32>
    %90 = arith.cmpi slt, %88, %89 : vector<1x256xi32>
    %91 = arith.andi %86, %90 : vector<1x256xi1>
    %c-2_i32 = arith.constant -2 : i32
    %92 = vector.broadcast %c-2_i32 : i32 to vector<1x256xi32>
    %93 = arith.addi %82, %92 : vector<1x256xi32>
    %c0_i32_44 = arith.constant 0 : i32
    %94 = vector.broadcast %c0_i32_44 : i32 to vector<1x256xi32>
    %95 = arith.cmpi sge, %93, %94 : vector<1x256xi32>
    %c-2_i32_45 = arith.constant -2 : i32
    %96 = vector.broadcast %c-2_i32_45 : i32 to vector<1x256xi32>
    %97 = arith.addi %82, %96 : vector<1x256xi32>
    %c16_i32_46 = arith.constant 16 : i32
    %98 = vector.broadcast %c16_i32_46 : i32 to vector<1x256xi32>
    %99 = arith.cmpi slt, %97, %98 : vector<1x256xi32>
    %100 = arith.andi %95, %99 : vector<1x256xi1>
    %c-1_i32 = arith.constant -1 : i32
    %101 = vector.broadcast %c-1_i32 : i32 to vector<1x256xi32>
    %102 = arith.addi %82, %101 : vector<1x256xi32>
    %c0_i32_47 = arith.constant 0 : i32
    %103 = vector.broadcast %c0_i32_47 : i32 to vector<1x256xi32>
    %104 = arith.cmpi sge, %102, %103 : vector<1x256xi32>
    %c-1_i32_48 = arith.constant -1 : i32
    %105 = vector.broadcast %c-1_i32_48 : i32 to vector<1x256xi32>
    %106 = arith.addi %82, %105 : vector<1x256xi32>
    %c16_i32_49 = arith.constant 16 : i32
    %107 = vector.broadcast %c16_i32_49 : i32 to vector<1x256xi32>
    %108 = arith.cmpi slt, %106, %107 : vector<1x256xi32>
    %109 = arith.andi %104, %108 : vector<1x256xi1>
    %c0_i32_50 = arith.constant 0 : i32
    %110 = vector.broadcast %c0_i32_50 : i32 to vector<1x256xi32>
    %111 = arith.addi %82, %110 : vector<1x256xi32>
    %c0_i32_51 = arith.constant 0 : i32
    %112 = vector.broadcast %c0_i32_51 : i32 to vector<1x256xi32>
    %113 = arith.cmpi sge, %111, %112 : vector<1x256xi32>
    %c0_i32_52 = arith.constant 0 : i32
    %114 = vector.broadcast %c0_i32_52 : i32 to vector<1x256xi32>
    %115 = arith.addi %82, %114 : vector<1x256xi32>
    %c16_i32_53 = arith.constant 16 : i32
    %116 = vector.broadcast %c16_i32_53 : i32 to vector<1x256xi32>
    %117 = arith.cmpi slt, %115, %116 : vector<1x256xi32>
    %118 = arith.andi %113, %117 : vector<1x256xi1>
    %c1_i32_54 = arith.constant 1 : i32
    %119 = vector.broadcast %c1_i32_54 : i32 to vector<1x256xi32>
    %120 = arith.addi %82, %119 : vector<1x256xi32>
    %c0_i32_55 = arith.constant 0 : i32
    %121 = vector.broadcast %c0_i32_55 : i32 to vector<1x256xi32>
    %122 = arith.cmpi sge, %120, %121 : vector<1x256xi32>
    %c1_i32_56 = arith.constant 1 : i32
    %123 = vector.broadcast %c1_i32_56 : i32 to vector<1x256xi32>
    %124 = arith.addi %82, %123 : vector<1x256xi32>
    %c16_i32_57 = arith.constant 16 : i32
    %125 = vector.broadcast %c16_i32_57 : i32 to vector<1x256xi32>
    %126 = arith.cmpi slt, %124, %125 : vector<1x256xi32>
    %127 = arith.andi %122, %126 : vector<1x256xi1>
    %c2_i32 = arith.constant 2 : i32
    %128 = vector.broadcast %c2_i32 : i32 to vector<1x256xi32>
    %129 = arith.addi %82, %128 : vector<1x256xi32>
    %c0_i32_58 = arith.constant 0 : i32
    %130 = vector.broadcast %c0_i32_58 : i32 to vector<1x256xi32>
    %131 = arith.cmpi sge, %129, %130 : vector<1x256xi32>
    %c2_i32_59 = arith.constant 2 : i32
    %132 = vector.broadcast %c2_i32_59 : i32 to vector<1x256xi32>
    %133 = arith.addi %82, %132 : vector<1x256xi32>
    %c16_i32_60 = arith.constant 16 : i32
    %134 = vector.broadcast %c16_i32_60 : i32 to vector<1x256xi32>
    %135 = arith.cmpi slt, %133, %134 : vector<1x256xi32>
    %136 = arith.andi %131, %135 : vector<1x256xi1>
    %c3_i32 = arith.constant 3 : i32
    %137 = vector.broadcast %c3_i32 : i32 to vector<1x256xi32>
    %138 = arith.addi %82, %137 : vector<1x256xi32>
    %c0_i32_61 = arith.constant 0 : i32
    %139 = vector.broadcast %c0_i32_61 : i32 to vector<1x256xi32>
    %140 = arith.cmpi sge, %138, %139 : vector<1x256xi32>
    %c3_i32_62 = arith.constant 3 : i32
    %141 = vector.broadcast %c3_i32_62 : i32 to vector<1x256xi32>
    %142 = arith.addi %82, %141 : vector<1x256xi32>
    %c16_i32_63 = arith.constant 16 : i32
    %143 = vector.broadcast %c16_i32_63 : i32 to vector<1x256xi32>
    %144 = arith.cmpi slt, %142, %143 : vector<1x256xi32>
    %145 = arith.andi %140, %144 : vector<1x256xi1>
    %cst_64 = arith.constant 0.000000e+00 : f32
    %146 = vector.broadcast %cst_64 : f32 to vector<1x256xf32>
    %c0_65 = arith.constant 0 : index
    %c0_66 = arith.constant 0 : index
    %147 = memref.load %arg9[%c0_65, %c0_66] : memref<2x49xf32, #tpu.memory_space<smem>>
    %c0_67 = arith.constant 0 : index
    %c77 = arith.constant 77 : index
    %148 = vector.load %arg12[%c0_67, %c77] : memref<2x512xf32, #tpu.memory_space<vmem>>, vector<1x256xf32>
    %149 = vector.broadcast %147 : f32 to vector<1x256xf32>
    %150 = arith.mulf %149, %148 : vector<1x256xf32>
    %c1_68 = arith.constant 1 : index
    %c0_69 = arith.constant 0 : index
    %151 = memref.load %arg9[%c1_68, %c0_69] : memref<2x49xf32, #tpu.memory_space<smem>>
    %c1_70 = arith.constant 1 : index
    %c77_71 = arith.constant 77 : index
    %152 = vector.load %arg12[%c1_70, %c77_71] : memref<2x512xf32, #tpu.memory_space<vmem>>, vector<1x256xf32>
    %153 = vector.broadcast %151 : f32 to vector<1x256xf32>
    %154 = arith.mulf %153, %152 : vector<1x256xf32>
    %155 = arith.addf %150, %154 : vector<1x256xf32>
    %cst_72 = arith.constant 0.000000e+00 : f32
    %156 = vector.broadcast %cst_72 : f32 to vector<1x256xf32>
    %157 = arith.select %91, %155, %156 : vector<1x256xi1>, vector<1x256xf32>
    %158 = arith.addf %146, %157 : vector<1x256xf32>
    %c0_73 = arith.constant 0 : index
    %c1_74 = arith.constant 1 : index
    %159 = memref.load %arg9[%c0_73, %c1_74] : memref<2x49xf32, #tpu.memory_space<smem>>
    %c0_75 = arith.constant 0 : index
    %c78 = arith.constant 78 : index
    %160 = vector.load %arg12[%c0_75, %c78] : memref<2x512xf32, #tpu.memory_space<vmem>>, vector<1x256xf32>
    %161 = vector.broadcast %159 : f32 to vector<1x256xf32>
    %162 = arith.mulf %161, %160 : vector<1x256xf32>
    %c1_76 = arith.constant 1 : index
    %c1_77 = arith.constant 1 : index
    %163 = memref.load %arg9[%c1_76, %c1_77] : memref<2x49xf32, #tpu.memory_space<smem>>
    %c1_78 = arith.constant 1 : index
    %c78_79 = arith.constant 78 : index
    %164 = vector.load %arg12[%c1_78, %c78_79] : memref<2x512xf32, #tpu.memory_space<vmem>>, vector<1x256xf32>
    %165 = vector.broadcast %163 : f32 to vector<1x256xf32>
    %166 = arith.mulf %165, %164 : vector<1x256xf32>
    %167 = arith.addf %162, %166 : vector<1x256xf32>
    %cst_80 = arith.constant 0.000000e+00 : f32
    %168 = vector.broadcast %cst_80 : f32 to vector<1x256xf32>
    %169 = arith.select %100, %167, %168 : vector<1x256xi1>, vector<1x256xf32>
    %170 = arith.addf %158, %169 : vector<1x256xf32>
    %c0_81 = arith.constant 0 : index
    %c2 = arith.constant 2 : index
    %171 = memref.load %arg9[%c0_81, %c2] : memref<2x49xf32, #tpu.memory_space<smem>>
    %c0_82 = arith.constant 0 : index
    %c79 = arith.constant 79 : index
    %172 = vector.load %arg12[%c0_82, %c79] : memref<2x512xf32, #tpu.memory_space<vmem>>, vector<1x256xf32>
    %173 = vector.broadcast %171 : f32 to vector<1x256xf32>
    %174 = arith.mulf %173, %172 : vector<1x256xf32>
    %c1_83 = arith.constant 1 : index
    %c2_84 = arith.constant 2 : index
    %175 = memref.load %arg9[%c1_83, %c2_84] : memref<2x49xf32, #tpu.memory_space<smem>>
    %c1_85 = arith.constant 1 : index
    %c79_86 = arith.constant 79 : index
    %176 = vector.load %arg12[%c1_85, %c79_86] : memref<2x512xf32, #tpu.memory_space<vmem>>, vector<1x256xf32>
    %177 = vector.broadcast %175 : f32 to vector<1x256xf32>
    %178 = arith.mulf %177, %176 : vector<1x256xf32>
    %179 = arith.addf %174, %178 : vector<1x256xf32>
    %cst_87 = arith.constant 0.000000e+00 : f32
    %180 = vector.broadcast %cst_87 : f32 to vector<1x256xf32>
    %181 = arith.select %109, %179, %180 : vector<1x256xi1>, vector<1x256xf32>
    %182 = arith.addf %170, %181 : vector<1x256xf32>
    %c0_88 = arith.constant 0 : index
    %c3 = arith.constant 3 : index
    %183 = memref.load %arg9[%c0_88, %c3] : memref<2x49xf32, #tpu.memory_space<smem>>
    %c0_89 = arith.constant 0 : index
    %c80 = arith.constant 80 : index
    %184 = vector.load %arg12[%c0_89, %c80] : memref<2x512xf32, #tpu.memory_space<vmem>>, vector<1x256xf32>
    %185 = vector.broadcast %183 : f32 to vector<1x256xf32>
    %186 = arith.mulf %185, %184 : vector<1x256xf32>
    %c1_90 = arith.constant 1 : index
    %c3_91 = arith.constant 3 : index
    %187 = memref.load %arg9[%c1_90, %c3_91] : memref<2x49xf32, #tpu.memory_space<smem>>
    %c1_92 = arith.constant 1 : index
    %c80_93 = arith.constant 80 : index
    %188 = vector.load %arg12[%c1_92, %c80_93] : memref<2x512xf32, #tpu.memory_space<vmem>>, vector<1x256xf32>
    %189 = vector.broadcast %187 : f32 to vector<1x256xf32>
    %190 = arith.mulf %189, %188 : vector<1x256xf32>
    %191 = arith.addf %186, %190 : vector<1x256xf32>
    %cst_94 = arith.constant 0.000000e+00 : f32
    %192 = vector.broadcast %cst_94 : f32 to vector<1x256xf32>
    %193 = arith.select %118, %191, %192 : vector<1x256xi1>, vector<1x256xf32>
    %194 = arith.addf %182, %193 : vector<1x256xf32>
    %c0_95 = arith.constant 0 : index
    %c4 = arith.constant 4 : index
    %195 = memref.load %arg9[%c0_95, %c4] : memref<2x49xf32, #tpu.memory_space<smem>>
    %c0_96 = arith.constant 0 : index
    %c81 = arith.constant 81 : index
    %196 = vector.load %arg12[%c0_96, %c81] : memref<2x512xf32, #tpu.memory_space<vmem>>, vector<1x256xf32>
    %197 = vector.broadcast %195 : f32 to vector<1x256xf32>
    %198 = arith.mulf %197, %196 : vector<1x256xf32>
    %c1_97 = arith.constant 1 : index
    %c4_98 = arith.constant 4 : index
    %199 = memref.load %arg9[%c1_97, %c4_98] : memref<2x49xf32, #tpu.memory_space<smem>>
    %c1_99 = arith.constant 1 : index
    %c81_100 = arith.constant 81 : index
    %200 = vector.load %arg12[%c1_99, %c81_100] : memref<2x512xf32, #tpu.memory_space<vmem>>, vector<1x256xf32>
    %201 = vector.broadcast %199 : f32 to vector<1x256xf32>
    %202 = arith.mulf %201, %200 : vector<1x256xf32>
    %203 = arith.addf %198, %202 : vector<1x256xf32>
    %cst_101 = arith.constant 0.000000e+00 : f32
    %204 = vector.broadcast %cst_101 : f32 to vector<1x256xf32>
    %205 = arith.select %127, %203, %204 : vector<1x256xi1>, vector<1x256xf32>
    %206 = arith.addf %194, %205 : vector<1x256xf32>
    %c0_102 = arith.constant 0 : index
    %c5 = arith.constant 5 : index
    %207 = memref.load %arg9[%c0_102, %c5] : memref<2x49xf32, #tpu.memory_space<smem>>
    %c0_103 = arith.constant 0 : index
    %c82 = arith.constant 82 : index
    %208 = vector.load %arg12[%c0_103, %c82] : memref<2x512xf32, #tpu.memory_space<vmem>>, vector<1x256xf32>
    %209 = vector.broadcast %207 : f32 to vector<1x256xf32>
    %210 = arith.mulf %209, %208 : vector<1x256xf32>
    %c1_104 = arith.constant 1 : index
    %c5_105 = arith.constant 5 : index
    %211 = memref.load %arg9[%c1_104, %c5_105] : memref<2x49xf32, #tpu.memory_space<smem>>
    %c1_106 = arith.constant 1 : index
    %c82_107 = arith.constant 82 : index
    %212 = vector.load %arg12[%c1_106, %c82_107] : memref<2x512xf32, #tpu.memory_space<vmem>>, vector<1x256xf32>
    %213 = vector.broadcast %211 : f32 to vector<1x256xf32>
    %214 = arith.mulf %213, %212 : vector<1x256xf32>
    %215 = arith.addf %210, %214 : vector<1x256xf32>
    %cst_108 = arith.constant 0.000000e+00 : f32
    %216 = vector.broadcast %cst_108 : f32 to vector<1x256xf32>
    %217 = arith.select %136, %215, %216 : vector<1x256xi1>, vector<1x256xf32>
    %218 = arith.addf %206, %217 : vector<1x256xf32>
    %c0_109 = arith.constant 0 : index
    %c6 = arith.constant 6 : index
    %219 = memref.load %arg9[%c0_109, %c6] : memref<2x49xf32, #tpu.memory_space<smem>>
    %c0_110 = arith.constant 0 : index
    %c83 = arith.constant 83 : index
    %220 = vector.load %arg12[%c0_110, %c83] : memref<2x512xf32, #tpu.memory_space<vmem>>, vector<1x256xf32>
    %221 = vector.broadcast %219 : f32 to vector<1x256xf32>
    %222 = arith.mulf %221, %220 : vector<1x256xf32>
    %c1_111 = arith.constant 1 : index
    %c6_112 = arith.constant 6 : index
    %223 = memref.load %arg9[%c1_111, %c6_112] : memref<2x49xf32, #tpu.memory_space<smem>>
    %c1_113 = arith.constant 1 : index
    %c83_114 = arith.constant 83 : index
    %224 = vector.load %arg12[%c1_113, %c83_114] : memref<2x512xf32, #tpu.memory_space<vmem>>, vector<1x256xf32>
    %225 = vector.broadcast %223 : f32 to vector<1x256xf32>
    %226 = arith.mulf %225, %224 : vector<1x256xf32>
    %227 = arith.addf %222, %226 : vector<1x256xf32>
    %cst_115 = arith.constant 0.000000e+00 : f32
    %228 = vector.broadcast %cst_115 : f32 to vector<1x256xf32>
    %229 = arith.select %145, %227, %228 : vector<1x256xi1>, vector<1x256xf32>
    %230 = arith.addf %218, %229 : vector<1x256xf32>
    %c0_116 = arith.constant 0 : index
    %c7 = arith.constant 7 : index
    %231 = memref.load %arg9[%c0_116, %c7] : memref<2x49xf32, #tpu.memory_space<smem>>
    %c0_117 = arith.constant 0 : index
    %c93 = arith.constant 93 : index
    %232 = vector.load %arg12[%c0_117, %c93] : memref<2x512xf32, #tpu.memory_space<vmem>>, vector<1x256xf32>
    %233 = vector.broadcast %231 : f32 to vector<1x256xf32>
    %234 = arith.mulf %233, %232 : vector<1x256xf32>
    %c1_118 = arith.constant 1 : index
    %c7_119 = arith.constant 7 : index
    %235 = memref.load %arg9[%c1_118, %c7_119] : memref<2x49xf32, #tpu.memory_space<smem>>
    %c1_120 = arith.constant 1 : index
    %c93_121 = arith.constant 93 : index
    %236 = vector.load %arg12[%c1_120, %c93_121] : memref<2x512xf32, #tpu.memory_space<vmem>>, vector<1x256xf32>
    %237 = vector.broadcast %235 : f32 to vector<1x256xf32>
    %238 = arith.mulf %237, %236 : vector<1x256xf32>
    %239 = arith.addf %234, %238 : vector<1x256xf32>
    %cst_122 = arith.constant 0.000000e+00 : f32
    %240 = vector.broadcast %cst_122 : f32 to vector<1x256xf32>
    %241 = arith.select %91, %239, %240 : vector<1x256xi1>, vector<1x256xf32>
    %242 = arith.addf %230, %241 : vector<1x256xf32>
    %c0_123 = arith.constant 0 : index
    %c8 = arith.constant 8 : index
    %243 = memref.load %arg9[%c0_123, %c8] : memref<2x49xf32, #tpu.memory_space<smem>>
    %c0_124 = arith.constant 0 : index
    %c94 = arith.constant 94 : index
    %244 = vector.load %arg12[%c0_124, %c94] : memref<2x512xf32, #tpu.memory_space<vmem>>, vector<1x256xf32>
    %245 = vector.broadcast %243 : f32 to vector<1x256xf32>
    %246 = arith.mulf %245, %244 : vector<1x256xf32>
    %c1_125 = arith.constant 1 : index
    %c8_126 = arith.constant 8 : index
    %247 = memref.load %arg9[%c1_125, %c8_126] : memref<2x49xf32, #tpu.memory_space<smem>>
    %c1_127 = arith.constant 1 : index
    %c94_128 = arith.constant 94 : index
    %248 = vector.load %arg12[%c1_127, %c94_128] : memref<2x512xf32, #tpu.memory_space<vmem>>, vector<1x256xf32>
    %249 = vector.broadcast %247 : f32 to vector<1x256xf32>
    %250 = arith.mulf %249, %248 : vector<1x256xf32>
    %251 = arith.addf %246, %250 : vector<1x256xf32>
    %cst_129 = arith.constant 0.000000e+00 : f32
    %252 = vector.broadcast %cst_129 : f32 to vector<1x256xf32>
    %253 = arith.select %100, %251, %252 : vector<1x256xi1>, vector<1x256xf32>
    %254 = arith.addf %242, %253 : vector<1x256xf32>
    %c0_130 = arith.constant 0 : index
    %c9 = arith.constant 9 : index
    %255 = memref.load %arg9[%c0_130, %c9] : memref<2x49xf32, #tpu.memory_space<smem>>
    %c0_131 = arith.constant 0 : index
    %c95 = arith.constant 95 : index
    %256 = vector.load %arg12[%c0_131, %c95] : memref<2x512xf32, #tpu.memory_space<vmem>>, vector<1x256xf32>
    %257 = vector.broadcast %255 : f32 to vector<1x256xf32>
    %258 = arith.mulf %257, %256 : vector<1x256xf32>
    %c1_132 = arith.constant 1 : index
    %c9_133 = arith.constant 9 : index
    %259 = memref.load %arg9[%c1_132, %c9_133] : memref<2x49xf32, #tpu.memory_space<smem>>
    %c1_134 = arith.constant 1 : index
    %c95_135 = arith.constant 95 : index
    %260 = vector.load %arg12[%c1_134, %c95_135] : memref<2x512xf32, #tpu.memory_space<vmem>>, vector<1x256xf32>
    %261 = vector.broadcast %259 : f32 to vector<1x256xf32>
    %262 = arith.mulf %261, %260 : vector<1x256xf32>
    %263 = arith.addf %258, %262 : vector<1x256xf32>
    %cst_136 = arith.constant 0.000000e+00 : f32
    %264 = vector.broadcast %cst_136 : f32 to vector<1x256xf32>
    %265 = arith.select %109, %263, %264 : vector<1x256xi1>, vector<1x256xf32>
    %266 = arith.addf %254, %265 : vector<1x256xf32>
    %c0_137 = arith.constant 0 : index
    %c10 = arith.constant 10 : index
    %267 = memref.load %arg9[%c0_137, %c10] : memref<2x49xf32, #tpu.memory_space<smem>>
    %c0_138 = arith.constant 0 : index
    %c96 = arith.constant 96 : index
    %268 = vector.load %arg12[%c0_138, %c96] : memref<2x512xf32, #tpu.memory_space<vmem>>, vector<1x256xf32>
    %269 = vector.broadcast %267 : f32 to vector<1x256xf32>
    %270 = arith.mulf %269, %268 : vector<1x256xf32>
    %c1_139 = arith.constant 1 : index
    %c10_140 = arith.constant 10 : index
    %271 = memref.load %arg9[%c1_139, %c10_140] : memref<2x49xf32, #tpu.memory_space<smem>>
    %c1_141 = arith.constant 1 : index
    %c96_142 = arith.constant 96 : index
    %272 = vector.load %arg12[%c1_141, %c96_142] : memref<2x512xf32, #tpu.memory_space<vmem>>, vector<1x256xf32>
    %273 = vector.broadcast %271 : f32 to vector<1x256xf32>
    %274 = arith.mulf %273, %272 : vector<1x256xf32>
    %275 = arith.addf %270, %274 : vector<1x256xf32>
    %cst_143 = arith.constant 0.000000e+00 : f32
    %276 = vector.broadcast %cst_143 : f32 to vector<1x256xf32>
    %277 = arith.select %118, %275, %276 : vector<1x256xi1>, vector<1x256xf32>
    %278 = arith.addf %266, %277 : vector<1x256xf32>
    %c0_144 = arith.constant 0 : index
    %c11 = arith.constant 11 : index
    %279 = memref.load %arg9[%c0_144, %c11] : memref<2x49xf32, #tpu.memory_space<smem>>
    %c0_145 = arith.constant 0 : index
    %c97 = arith.constant 97 : index
    %280 = vector.load %arg12[%c0_145, %c97] : memref<2x512xf32, #tpu.memory_space<vmem>>, vector<1x256xf32>
    %281 = vector.broadcast %279 : f32 to vector<1x256xf32>
    %282 = arith.mulf %281, %280 : vector<1x256xf32>
    %c1_146 = arith.constant 1 : index
    %c11_147 = arith.constant 11 : index
    %283 = memref.load %arg9[%c1_146, %c11_147] : memref<2x49xf32, #tpu.memory_space<smem>>
    %c1_148 = arith.constant 1 : index
    %c97_149 = arith.constant 97 : index
    %284 = vector.load %arg12[%c1_148, %c97_149] : memref<2x512xf32, #tpu.memory_space<vmem>>, vector<1x256xf32>
    %285 = vector.broadcast %283 : f32 to vector<1x256xf32>
    %286 = arith.mulf %285, %284 : vector<1x256xf32>
    %287 = arith.addf %282, %286 : vector<1x256xf32>
    %cst_150 = arith.constant 0.000000e+00 : f32
    %288 = vector.broadcast %cst_150 : f32 to vector<1x256xf32>
    %289 = arith.select %127, %287, %288 : vector<1x256xi1>, vector<1x256xf32>
    %290 = arith.addf %278, %289 : vector<1x256xf32>
    %c0_151 = arith.constant 0 : index
    %c12 = arith.constant 12 : index
    %291 = memref.load %arg9[%c0_151, %c12] : memref<2x49xf32, #tpu.memory_space<smem>>
    %c0_152 = arith.constant 0 : index
    %c98 = arith.constant 98 : index
    %292 = vector.load %arg12[%c0_152, %c98] : memref<2x512xf32, #tpu.memory_space<vmem>>, vector<1x256xf32>
    %293 = vector.broadcast %291 : f32 to vector<1x256xf32>
    %294 = arith.mulf %293, %292 : vector<1x256xf32>
    %c1_153 = arith.constant 1 : index
    %c12_154 = arith.constant 12 : index
    %295 = memref.load %arg9[%c1_153, %c12_154] : memref<2x49xf32, #tpu.memory_space<smem>>
    %c1_155 = arith.constant 1 : index
    %c98_156 = arith.constant 98 : index
    %296 = vector.load %arg12[%c1_155, %c98_156] : memref<2x512xf32, #tpu.memory_space<vmem>>, vector<1x256xf32>
    %297 = vector.broadcast %295 : f32 to vector<1x256xf32>
    %298 = arith.mulf %297, %296 : vector<1x256xf32>
    %299 = arith.addf %294, %298 : vector<1x256xf32>
    %cst_157 = arith.constant 0.000000e+00 : f32
    %300 = vector.broadcast %cst_157 : f32 to vector<1x256xf32>
    %301 = arith.select %136, %299, %300 : vector<1x256xi1>, vector<1x256xf32>
    %302 = arith.addf %290, %301 : vector<1x256xf32>
    %c0_158 = arith.constant 0 : index
    %c13 = arith.constant 13 : index
    %303 = memref.load %arg9[%c0_158, %c13] : memref<2x49xf32, #tpu.memory_space<smem>>
    %c0_159 = arith.constant 0 : index
    %c99 = arith.constant 99 : index
    %304 = vector.load %arg12[%c0_159, %c99] : memref<2x512xf32, #tpu.memory_space<vmem>>, vector<1x256xf32>
    %305 = vector.broadcast %303 : f32 to vector<1x256xf32>
    %306 = arith.mulf %305, %304 : vector<1x256xf32>
    %c1_160 = arith.constant 1 : index
    %c13_161 = arith.constant 13 : index
    %307 = memref.load %arg9[%c1_160, %c13_161] : memref<2x49xf32, #tpu.memory_space<smem>>
    %c1_162 = arith.constant 1 : index
    %c99_163 = arith.constant 99 : index
    %308 = vector.load %arg12[%c1_162, %c99_163] : memref<2x512xf32, #tpu.memory_space<vmem>>, vector<1x256xf32>
    %309 = vector.broadcast %307 : f32 to vector<1x256xf32>
    %310 = arith.mulf %309, %308 : vector<1x256xf32>
    %311 = arith.addf %306, %310 : vector<1x256xf32>
    %cst_164 = arith.constant 0.000000e+00 : f32
    %312 = vector.broadcast %cst_164 : f32 to vector<1x256xf32>
    %313 = arith.select %145, %311, %312 : vector<1x256xi1>, vector<1x256xf32>
    %314 = arith.addf %302, %313 : vector<1x256xf32>
    %c0_165 = arith.constant 0 : index
    %c14 = arith.constant 14 : index
    %315 = memref.load %arg9[%c0_165, %c14] : memref<2x49xf32, #tpu.memory_space<smem>>
    %c0_166 = arith.constant 0 : index
    %c109 = arith.constant 109 : index
    %316 = vector.load %arg12[%c0_166, %c109] : memref<2x512xf32, #tpu.memory_space<vmem>>, vector<1x256xf32>
    %317 = vector.broadcast %315 : f32 to vector<1x256xf32>
    %318 = arith.mulf %317, %316 : vector<1x256xf32>
    %c1_167 = arith.constant 1 : index
    %c14_168 = arith.constant 14 : index
    %319 = memref.load %arg9[%c1_167, %c14_168] : memref<2x49xf32, #tpu.memory_space<smem>>
    %c1_169 = arith.constant 1 : index
    %c109_170 = arith.constant 109 : index
    %320 = vector.load %arg12[%c1_169, %c109_170] : memref<2x512xf32, #tpu.memory_space<vmem>>, vector<1x256xf32>
    %321 = vector.broadcast %319 : f32 to vector<1x256xf32>
    %322 = arith.mulf %321, %320 : vector<1x256xf32>
    %323 = arith.addf %318, %322 : vector<1x256xf32>
    %cst_171 = arith.constant 0.000000e+00 : f32
    %324 = vector.broadcast %cst_171 : f32 to vector<1x256xf32>
    %325 = arith.select %91, %323, %324 : vector<1x256xi1>, vector<1x256xf32>
    %326 = arith.addf %314, %325 : vector<1x256xf32>
    %c0_172 = arith.constant 0 : index
    %c15 = arith.constant 15 : index
    %327 = memref.load %arg9[%c0_172, %c15] : memref<2x49xf32, #tpu.memory_space<smem>>
    %c0_173 = arith.constant 0 : index
    %c110 = arith.constant 110 : index
    %328 = vector.load %arg12[%c0_173, %c110] : memref<2x512xf32, #tpu.memory_space<vmem>>, vector<1x256xf32>
    %329 = vector.broadcast %327 : f32 to vector<1x256xf32>
    %330 = arith.mulf %329, %328 : vector<1x256xf32>
    %c1_174 = arith.constant 1 : index
    %c15_175 = arith.constant 15 : index
    %331 = memref.load %arg9[%c1_174, %c15_175] : memref<2x49xf32, #tpu.memory_space<smem>>
    %c1_176 = arith.constant 1 : index
    %c110_177 = arith.constant 110 : index
    %332 = vector.load %arg12[%c1_176, %c110_177] : memref<2x512xf32, #tpu.memory_space<vmem>>, vector<1x256xf32>
    %333 = vector.broadcast %331 : f32 to vector<1x256xf32>
    %334 = arith.mulf %333, %332 : vector<1x256xf32>
    %335 = arith.addf %330, %334 : vector<1x256xf32>
    %cst_178 = arith.constant 0.000000e+00 : f32
    %336 = vector.broadcast %cst_178 : f32 to vector<1x256xf32>
    %337 = arith.select %100, %335, %336 : vector<1x256xi1>, vector<1x256xf32>
    %338 = arith.addf %326, %337 : vector<1x256xf32>
    %c0_179 = arith.constant 0 : index
    %c16 = arith.constant 16 : index
    %339 = memref.load %arg9[%c0_179, %c16] : memref<2x49xf32, #tpu.memory_space<smem>>
    %c0_180 = arith.constant 0 : index
    %c111 = arith.constant 111 : index
    %340 = vector.load %arg12[%c0_180, %c111] : memref<2x512xf32, #tpu.memory_space<vmem>>, vector<1x256xf32>
    %341 = vector.broadcast %339 : f32 to vector<1x256xf32>
    %342 = arith.mulf %341, %340 : vector<1x256xf32>
    %c1_181 = arith.constant 1 : index
    %c16_182 = arith.constant 16 : index
    %343 = memref.load %arg9[%c1_181, %c16_182] : memref<2x49xf32, #tpu.memory_space<smem>>
    %c1_183 = arith.constant 1 : index
    %c111_184 = arith.constant 111 : index
    %344 = vector.load %arg12[%c1_183, %c111_184] : memref<2x512xf32, #tpu.memory_space<vmem>>, vector<1x256xf32>
    %345 = vector.broadcast %343 : f32 to vector<1x256xf32>
    %346 = arith.mulf %345, %344 : vector<1x256xf32>
    %347 = arith.addf %342, %346 : vector<1x256xf32>
    %cst_185 = arith.constant 0.000000e+00 : f32
    %348 = vector.broadcast %cst_185 : f32 to vector<1x256xf32>
    %349 = arith.select %109, %347, %348 : vector<1x256xi1>, vector<1x256xf32>
    %350 = arith.addf %338, %349 : vector<1x256xf32>
    %c0_186 = arith.constant 0 : index
    %c17 = arith.constant 17 : index
    %351 = memref.load %arg9[%c0_186, %c17] : memref<2x49xf32, #tpu.memory_space<smem>>
    %c0_187 = arith.constant 0 : index
    %c112 = arith.constant 112 : index
    %352 = vector.load %arg12[%c0_187, %c112] : memref<2x512xf32, #tpu.memory_space<vmem>>, vector<1x256xf32>
    %353 = vector.broadcast %351 : f32 to vector<1x256xf32>
    %354 = arith.mulf %353, %352 : vector<1x256xf32>
    %c1_188 = arith.constant 1 : index
    %c17_189 = arith.constant 17 : index
    %355 = memref.load %arg9[%c1_188, %c17_189] : memref<2x49xf32, #tpu.memory_space<smem>>
    %c1_190 = arith.constant 1 : index
    %c112_191 = arith.constant 112 : index
    %356 = vector.load %arg12[%c1_190, %c112_191] : memref<2x512xf32, #tpu.memory_space<vmem>>, vector<1x256xf32>
    %357 = vector.broadcast %355 : f32 to vector<1x256xf32>
    %358 = arith.mulf %357, %356 : vector<1x256xf32>
    %359 = arith.addf %354, %358 : vector<1x256xf32>
    %cst_192 = arith.constant 0.000000e+00 : f32
    %360 = vector.broadcast %cst_192 : f32 to vector<1x256xf32>
    %361 = arith.select %118, %359, %360 : vector<1x256xi1>, vector<1x256xf32>
    %362 = arith.addf %350, %361 : vector<1x256xf32>
    %c0_193 = arith.constant 0 : index
    %c18 = arith.constant 18 : index
    %363 = memref.load %arg9[%c0_193, %c18] : memref<2x49xf32, #tpu.memory_space<smem>>
    %c0_194 = arith.constant 0 : index
    %c113 = arith.constant 113 : index
    %364 = vector.load %arg12[%c0_194, %c113] : memref<2x512xf32, #tpu.memory_space<vmem>>, vector<1x256xf32>
    %365 = vector.broadcast %363 : f32 to vector<1x256xf32>
    %366 = arith.mulf %365, %364 : vector<1x256xf32>
    %c1_195 = arith.constant 1 : index
    %c18_196 = arith.constant 18 : index
    %367 = memref.load %arg9[%c1_195, %c18_196] : memref<2x49xf32, #tpu.memory_space<smem>>
    %c1_197 = arith.constant 1 : index
    %c113_198 = arith.constant 113 : index
    %368 = vector.load %arg12[%c1_197, %c113_198] : memref<2x512xf32, #tpu.memory_space<vmem>>, vector<1x256xf32>
    %369 = vector.broadcast %367 : f32 to vector<1x256xf32>
    %370 = arith.mulf %369, %368 : vector<1x256xf32>
    %371 = arith.addf %366, %370 : vector<1x256xf32>
    %cst_199 = arith.constant 0.000000e+00 : f32
    %372 = vector.broadcast %cst_199 : f32 to vector<1x256xf32>
    %373 = arith.select %127, %371, %372 : vector<1x256xi1>, vector<1x256xf32>
    %374 = arith.addf %362, %373 : vector<1x256xf32>
    %c0_200 = arith.constant 0 : index
    %c19 = arith.constant 19 : index
    %375 = memref.load %arg9[%c0_200, %c19] : memref<2x49xf32, #tpu.memory_space<smem>>
    %c0_201 = arith.constant 0 : index
    %c114 = arith.constant 114 : index
    %376 = vector.load %arg12[%c0_201, %c114] : memref<2x512xf32, #tpu.memory_space<vmem>>, vector<1x256xf32>
    %377 = vector.broadcast %375 : f32 to vector<1x256xf32>
    %378 = arith.mulf %377, %376 : vector<1x256xf32>
    %c1_202 = arith.constant 1 : index
    %c19_203 = arith.constant 19 : index
    %379 = memref.load %arg9[%c1_202, %c19_203] : memref<2x49xf32, #tpu.memory_space<smem>>
    %c1_204 = arith.constant 1 : index
    %c114_205 = arith.constant 114 : index
    %380 = vector.load %arg12[%c1_204, %c114_205] : memref<2x512xf32, #tpu.memory_space<vmem>>, vector<1x256xf32>
    %381 = vector.broadcast %379 : f32 to vector<1x256xf32>
    %382 = arith.mulf %381, %380 : vector<1x256xf32>
    %383 = arith.addf %378, %382 : vector<1x256xf32>
    %cst_206 = arith.constant 0.000000e+00 : f32
    %384 = vector.broadcast %cst_206 : f32 to vector<1x256xf32>
    %385 = arith.select %136, %383, %384 : vector<1x256xi1>, vector<1x256xf32>
    %386 = arith.addf %374, %385 : vector<1x256xf32>
    %c0_207 = arith.constant 0 : index
    %c20 = arith.constant 20 : index
    %387 = memref.load %arg9[%c0_207, %c20] : memref<2x49xf32, #tpu.memory_space<smem>>
    %c0_208 = arith.constant 0 : index
    %c115 = arith.constant 115 : index
    %388 = vector.load %arg12[%c0_208, %c115] : memref<2x512xf32, #tpu.memory_space<vmem>>, vector<1x256xf32>
    %389 = vector.broadcast %387 : f32 to vector<1x256xf32>
    %390 = arith.mulf %389, %388 : vector<1x256xf32>
    %c1_209 = arith.constant 1 : index
    %c20_210 = arith.constant 20 : index
    %391 = memref.load %arg9[%c1_209, %c20_210] : memref<2x49xf32, #tpu.memory_space<smem>>
    %c1_211 = arith.constant 1 : index
    %c115_212 = arith.constant 115 : index
    %392 = vector.load %arg12[%c1_211, %c115_212] : memref<2x512xf32, #tpu.memory_space<vmem>>, vector<1x256xf32>
    %393 = vector.broadcast %391 : f32 to vector<1x256xf32>
    %394 = arith.mulf %393, %392 : vector<1x256xf32>
    %395 = arith.addf %390, %394 : vector<1x256xf32>
    %cst_213 = arith.constant 0.000000e+00 : f32
    %396 = vector.broadcast %cst_213 : f32 to vector<1x256xf32>
    %397 = arith.select %145, %395, %396 : vector<1x256xi1>, vector<1x256xf32>
    %398 = arith.addf %386, %397 : vector<1x256xf32>
    %c0_214 = arith.constant 0 : index
    %c21 = arith.constant 21 : index
    %399 = memref.load %arg9[%c0_214, %c21] : memref<2x49xf32, #tpu.memory_space<smem>>
    %c0_215 = arith.constant 0 : index
    %c125 = arith.constant 125 : index
    %400 = vector.load %arg12[%c0_215, %c125] : memref<2x512xf32, #tpu.memory_space<vmem>>, vector<1x256xf32>
    %401 = vector.broadcast %399 : f32 to vector<1x256xf32>
    %402 = arith.mulf %401, %400 : vector<1x256xf32>
    %c1_216 = arith.constant 1 : index
    %c21_217 = arith.constant 21 : index
    %403 = memref.load %arg9[%c1_216, %c21_217] : memref<2x49xf32, #tpu.memory_space<smem>>
    %c1_218 = arith.constant 1 : index
    %c125_219 = arith.constant 125 : index
    %404 = vector.load %arg12[%c1_218, %c125_219] : memref<2x512xf32, #tpu.memory_space<vmem>>, vector<1x256xf32>
    %405 = vector.broadcast %403 : f32 to vector<1x256xf32>
    %406 = arith.mulf %405, %404 : vector<1x256xf32>
    %407 = arith.addf %402, %406 : vector<1x256xf32>
    %cst_220 = arith.constant 0.000000e+00 : f32
    %408 = vector.broadcast %cst_220 : f32 to vector<1x256xf32>
    %409 = arith.select %91, %407, %408 : vector<1x256xi1>, vector<1x256xf32>
    %410 = arith.addf %398, %409 : vector<1x256xf32>
    %c0_221 = arith.constant 0 : index
    %c22 = arith.constant 22 : index
    %411 = memref.load %arg9[%c0_221, %c22] : memref<2x49xf32, #tpu.memory_space<smem>>
    %c0_222 = arith.constant 0 : index
    %c126 = arith.constant 126 : index
    %412 = vector.load %arg12[%c0_222, %c126] : memref<2x512xf32, #tpu.memory_space<vmem>>, vector<1x256xf32>
    %413 = vector.broadcast %411 : f32 to vector<1x256xf32>
    %414 = arith.mulf %413, %412 : vector<1x256xf32>
    %c1_223 = arith.constant 1 : index
    %c22_224 = arith.constant 22 : index
    %415 = memref.load %arg9[%c1_223, %c22_224] : memref<2x49xf32, #tpu.memory_space<smem>>
    %c1_225 = arith.constant 1 : index
    %c126_226 = arith.constant 126 : index
    %416 = vector.load %arg12[%c1_225, %c126_226] : memref<2x512xf32, #tpu.memory_space<vmem>>, vector<1x256xf32>
    %417 = vector.broadcast %415 : f32 to vector<1x256xf32>
    %418 = arith.mulf %417, %416 : vector<1x256xf32>
    %419 = arith.addf %414, %418 : vector<1x256xf32>
    %cst_227 = arith.constant 0.000000e+00 : f32
    %420 = vector.broadcast %cst_227 : f32 to vector<1x256xf32>
    %421 = arith.select %100, %419, %420 : vector<1x256xi1>, vector<1x256xf32>
    %422 = arith.addf %410, %421 : vector<1x256xf32>
    %c0_228 = arith.constant 0 : index
    %c23 = arith.constant 23 : index
    %423 = memref.load %arg9[%c0_228, %c23] : memref<2x49xf32, #tpu.memory_space<smem>>
    %c0_229 = arith.constant 0 : index
    %c127 = arith.constant 127 : index
    %424 = vector.load %arg12[%c0_229, %c127] : memref<2x512xf32, #tpu.memory_space<vmem>>, vector<1x256xf32>
    %425 = vector.broadcast %423 : f32 to vector<1x256xf32>
    %426 = arith.mulf %425, %424 : vector<1x256xf32>
    %c1_230 = arith.constant 1 : index
    %c23_231 = arith.constant 23 : index
    %427 = memref.load %arg9[%c1_230, %c23_231] : memref<2x49xf32, #tpu.memory_space<smem>>
    %c1_232 = arith.constant 1 : index
    %c127_233 = arith.constant 127 : index
    %428 = vector.load %arg12[%c1_232, %c127_233] : memref<2x512xf32, #tpu.memory_space<vmem>>, vector<1x256xf32>
    %429 = vector.broadcast %427 : f32 to vector<1x256xf32>
    %430 = arith.mulf %429, %428 : vector<1x256xf32>
    %431 = arith.addf %426, %430 : vector<1x256xf32>
    %cst_234 = arith.constant 0.000000e+00 : f32
    %432 = vector.broadcast %cst_234 : f32 to vector<1x256xf32>
    %433 = arith.select %109, %431, %432 : vector<1x256xi1>, vector<1x256xf32>
    %434 = arith.addf %422, %433 : vector<1x256xf32>
    %c0_235 = arith.constant 0 : index
    %c24 = arith.constant 24 : index
    %435 = memref.load %arg9[%c0_235, %c24] : memref<2x49xf32, #tpu.memory_space<smem>>
    %c0_236 = arith.constant 0 : index
    %c128_237 = arith.constant 128 : index
    %436 = vector.load %arg12[%c0_236, %c128_237] : memref<2x512xf32, #tpu.memory_space<vmem>>, vector<1x256xf32>
    %437 = vector.broadcast %435 : f32 to vector<1x256xf32>
    %438 = arith.mulf %437, %436 : vector<1x256xf32>
    %c1_238 = arith.constant 1 : index
    %c24_239 = arith.constant 24 : index
    %439 = memref.load %arg9[%c1_238, %c24_239] : memref<2x49xf32, #tpu.memory_space<smem>>
    %c1_240 = arith.constant 1 : index
    %c128_241 = arith.constant 128 : index
    %440 = vector.load %arg12[%c1_240, %c128_241] : memref<2x512xf32, #tpu.memory_space<vmem>>, vector<1x256xf32>
    %441 = vector.broadcast %439 : f32 to vector<1x256xf32>
    %442 = arith.mulf %441, %440 : vector<1x256xf32>
    %443 = arith.addf %438, %442 : vector<1x256xf32>
    %cst_242 = arith.constant 0.000000e+00 : f32
    %444 = vector.broadcast %cst_242 : f32 to vector<1x256xf32>
    %445 = arith.select %118, %443, %444 : vector<1x256xi1>, vector<1x256xf32>
    %446 = arith.addf %434, %445 : vector<1x256xf32>
    %c0_243 = arith.constant 0 : index
    %c25 = arith.constant 25 : index
    %447 = memref.load %arg9[%c0_243, %c25] : memref<2x49xf32, #tpu.memory_space<smem>>
    %c0_244 = arith.constant 0 : index
    %c129 = arith.constant 129 : index
    %448 = vector.load %arg12[%c0_244, %c129] : memref<2x512xf32, #tpu.memory_space<vmem>>, vector<1x256xf32>
    %449 = vector.broadcast %447 : f32 to vector<1x256xf32>
    %450 = arith.mulf %449, %448 : vector<1x256xf32>
    %c1_245 = arith.constant 1 : index
    %c25_246 = arith.constant 25 : index
    %451 = memref.load %arg9[%c1_245, %c25_246] : memref<2x49xf32, #tpu.memory_space<smem>>
    %c1_247 = arith.constant 1 : index
    %c129_248 = arith.constant 129 : index
    %452 = vector.load %arg12[%c1_247, %c129_248] : memref<2x512xf32, #tpu.memory_space<vmem>>, vector<1x256xf32>
    %453 = vector.broadcast %451 : f32 to vector<1x256xf32>
    %454 = arith.mulf %453, %452 : vector<1x256xf32>
    %455 = arith.addf %450, %454 : vector<1x256xf32>
    %cst_249 = arith.constant 0.000000e+00 : f32
    %456 = vector.broadcast %cst_249 : f32 to vector<1x256xf32>
    %457 = arith.select %127, %455, %456 : vector<1x256xi1>, vector<1x256xf32>
    %458 = arith.addf %446, %457 : vector<1x256xf32>
    %c0_250 = arith.constant 0 : index
    %c26 = arith.constant 26 : index
    %459 = memref.load %arg9[%c0_250, %c26] : memref<2x49xf32, #tpu.memory_space<smem>>
    %c0_251 = arith.constant 0 : index
    %c130 = arith.constant 130 : index
    %460 = vector.load %arg12[%c0_251, %c130] : memref<2x512xf32, #tpu.memory_space<vmem>>, vector<1x256xf32>
    %461 = vector.broadcast %459 : f32 to vector<1x256xf32>
    %462 = arith.mulf %461, %460 : vector<1x256xf32>
    %c1_252 = arith.constant 1 : index
    %c26_253 = arith.constant 26 : index
    %463 = memref.load %arg9[%c1_252, %c26_253] : memref<2x49xf32, #tpu.memory_space<smem>>
    %c1_254 = arith.constant 1 : index
    %c130_255 = arith.constant 130 : index
    %464 = vector.load %arg12[%c1_254, %c130_255] : memref<2x512xf32, #tpu.memory_space<vmem>>, vector<1x256xf32>
    %465 = vector.broadcast %463 : f32 to vector<1x256xf32>
    %466 = arith.mulf %465, %464 : vector<1x256xf32>
    %467 = arith.addf %462, %466 : vector<1x256xf32>
    %cst_256 = arith.constant 0.000000e+00 : f32
    %468 = vector.broadcast %cst_256 : f32 to vector<1x256xf32>
    %469 = arith.select %136, %467, %468 : vector<1x256xi1>, vector<1x256xf32>
    %470 = arith.addf %458, %469 : vector<1x256xf32>
    %c0_257 = arith.constant 0 : index
    %c27 = arith.constant 27 : index
    %471 = memref.load %arg9[%c0_257, %c27] : memref<2x49xf32, #tpu.memory_space<smem>>
    %c0_258 = arith.constant 0 : index
    %c131 = arith.constant 131 : index
    %472 = vector.load %arg12[%c0_258, %c131] : memref<2x512xf32, #tpu.memory_space<vmem>>, vector<1x256xf32>
    %473 = vector.broadcast %471 : f32 to vector<1x256xf32>
    %474 = arith.mulf %473, %472 : vector<1x256xf32>
    %c1_259 = arith.constant 1 : index
    %c27_260 = arith.constant 27 : index
    %475 = memref.load %arg9[%c1_259, %c27_260] : memref<2x49xf32, #tpu.memory_space<smem>>
    %c1_261 = arith.constant 1 : index
    %c131_262 = arith.constant 131 : index
    %476 = vector.load %arg12[%c1_261, %c131_262] : memref<2x512xf32, #tpu.memory_space<vmem>>, vector<1x256xf32>
    %477 = vector.broadcast %475 : f32 to vector<1x256xf32>
    %478 = arith.mulf %477, %476 : vector<1x256xf32>
    %479 = arith.addf %474, %478 : vector<1x256xf32>
    %cst_263 = arith.constant 0.000000e+00 : f32
    %480 = vector.broadcast %cst_263 : f32 to vector<1x256xf32>
    %481 = arith.select %145, %479, %480 : vector<1x256xi1>, vector<1x256xf32>
    %482 = arith.addf %470, %481 : vector<1x256xf32>
    %c0_264 = arith.constant 0 : index
    %c28 = arith.constant 28 : index
    %483 = memref.load %arg9[%c0_264, %c28] : memref<2x49xf32, #tpu.memory_space<smem>>
    %c0_265 = arith.constant 0 : index
    %c141 = arith.constant 141 : index
    %484 = vector.load %arg12[%c0_265, %c141] : memref<2x512xf32, #tpu.memory_space<vmem>>, vector<1x256xf32>
    %485 = vector.broadcast %483 : f32 to vector<1x256xf32>
    %486 = arith.mulf %485, %484 : vector<1x256xf32>
    %c1_266 = arith.constant 1 : index
    %c28_267 = arith.constant 28 : index
    %487 = memref.load %arg9[%c1_266, %c28_267] : memref<2x49xf32, #tpu.memory_space<smem>>
    %c1_268 = arith.constant 1 : index
    %c141_269 = arith.constant 141 : index
    %488 = vector.load %arg12[%c1_268, %c141_269] : memref<2x512xf32, #tpu.memory_space<vmem>>, vector<1x256xf32>
    %489 = vector.broadcast %487 : f32 to vector<1x256xf32>
    %490 = arith.mulf %489, %488 : vector<1x256xf32>
    %491 = arith.addf %486, %490 : vector<1x256xf32>
    %cst_270 = arith.constant 0.000000e+00 : f32
    %492 = vector.broadcast %cst_270 : f32 to vector<1x256xf32>
    %493 = arith.select %91, %491, %492 : vector<1x256xi1>, vector<1x256xf32>
    %494 = arith.addf %482, %493 : vector<1x256xf32>
    %c0_271 = arith.constant 0 : index
    %c29 = arith.constant 29 : index
    %495 = memref.load %arg9[%c0_271, %c29] : memref<2x49xf32, #tpu.memory_space<smem>>
    %c0_272 = arith.constant 0 : index
    %c142 = arith.constant 142 : index
    %496 = vector.load %arg12[%c0_272, %c142] : memref<2x512xf32, #tpu.memory_space<vmem>>, vector<1x256xf32>
    %497 = vector.broadcast %495 : f32 to vector<1x256xf32>
    %498 = arith.mulf %497, %496 : vector<1x256xf32>
    %c1_273 = arith.constant 1 : index
    %c29_274 = arith.constant 29 : index
    %499 = memref.load %arg9[%c1_273, %c29_274] : memref<2x49xf32, #tpu.memory_space<smem>>
    %c1_275 = arith.constant 1 : index
    %c142_276 = arith.constant 142 : index
    %500 = vector.load %arg12[%c1_275, %c142_276] : memref<2x512xf32, #tpu.memory_space<vmem>>, vector<1x256xf32>
    %501 = vector.broadcast %499 : f32 to vector<1x256xf32>
    %502 = arith.mulf %501, %500 : vector<1x256xf32>
    %503 = arith.addf %498, %502 : vector<1x256xf32>
    %cst_277 = arith.constant 0.000000e+00 : f32
    %504 = vector.broadcast %cst_277 : f32 to vector<1x256xf32>
    %505 = arith.select %100, %503, %504 : vector<1x256xi1>, vector<1x256xf32>
    %506 = arith.addf %494, %505 : vector<1x256xf32>
    %c0_278 = arith.constant 0 : index
    %c30 = arith.constant 30 : index
    %507 = memref.load %arg9[%c0_278, %c30] : memref<2x49xf32, #tpu.memory_space<smem>>
    %c0_279 = arith.constant 0 : index
    %c143 = arith.constant 143 : index
    %508 = vector.load %arg12[%c0_279, %c143] : memref<2x512xf32, #tpu.memory_space<vmem>>, vector<1x256xf32>
    %509 = vector.broadcast %507 : f32 to vector<1x256xf32>
    %510 = arith.mulf %509, %508 : vector<1x256xf32>
    %c1_280 = arith.constant 1 : index
    %c30_281 = arith.constant 30 : index
    %511 = memref.load %arg9[%c1_280, %c30_281] : memref<2x49xf32, #tpu.memory_space<smem>>
    %c1_282 = arith.constant 1 : index
    %c143_283 = arith.constant 143 : index
    %512 = vector.load %arg12[%c1_282, %c143_283] : memref<2x512xf32, #tpu.memory_space<vmem>>, vector<1x256xf32>
    %513 = vector.broadcast %511 : f32 to vector<1x256xf32>
    %514 = arith.mulf %513, %512 : vector<1x256xf32>
    %515 = arith.addf %510, %514 : vector<1x256xf32>
    %cst_284 = arith.constant 0.000000e+00 : f32
    %516 = vector.broadcast %cst_284 : f32 to vector<1x256xf32>
    %517 = arith.select %109, %515, %516 : vector<1x256xi1>, vector<1x256xf32>
    %518 = arith.addf %506, %517 : vector<1x256xf32>
    %c0_285 = arith.constant 0 : index
    %c31 = arith.constant 31 : index
    %519 = memref.load %arg9[%c0_285, %c31] : memref<2x49xf32, #tpu.memory_space<smem>>
    %c0_286 = arith.constant 0 : index
    %c144 = arith.constant 144 : index
    %520 = vector.load %arg12[%c0_286, %c144] : memref<2x512xf32, #tpu.memory_space<vmem>>, vector<1x256xf32>
    %521 = vector.broadcast %519 : f32 to vector<1x256xf32>
    %522 = arith.mulf %521, %520 : vector<1x256xf32>
    %c1_287 = arith.constant 1 : index
    %c31_288 = arith.constant 31 : index
    %523 = memref.load %arg9[%c1_287, %c31_288] : memref<2x49xf32, #tpu.memory_space<smem>>
    %c1_289 = arith.constant 1 : index
    %c144_290 = arith.constant 144 : index
    %524 = vector.load %arg12[%c1_289, %c144_290] : memref<2x512xf32, #tpu.memory_space<vmem>>, vector<1x256xf32>
    %525 = vector.broadcast %523 : f32 to vector<1x256xf32>
    %526 = arith.mulf %525, %524 : vector<1x256xf32>
    %527 = arith.addf %522, %526 : vector<1x256xf32>
    %cst_291 = arith.constant 0.000000e+00 : f32
    %528 = vector.broadcast %cst_291 : f32 to vector<1x256xf32>
    %529 = arith.select %118, %527, %528 : vector<1x256xi1>, vector<1x256xf32>
    %530 = arith.addf %518, %529 : vector<1x256xf32>
    %c0_292 = arith.constant 0 : index
    %c32 = arith.constant 32 : index
    %531 = memref.load %arg9[%c0_292, %c32] : memref<2x49xf32, #tpu.memory_space<smem>>
    %c0_293 = arith.constant 0 : index
    %c145 = arith.constant 145 : index
    %532 = vector.load %arg12[%c0_293, %c145] : memref<2x512xf32, #tpu.memory_space<vmem>>, vector<1x256xf32>
    %533 = vector.broadcast %531 : f32 to vector<1x256xf32>
    %534 = arith.mulf %533, %532 : vector<1x256xf32>
    %c1_294 = arith.constant 1 : index
    %c32_295 = arith.constant 32 : index
    %535 = memref.load %arg9[%c1_294, %c32_295] : memref<2x49xf32, #tpu.memory_space<smem>>
    %c1_296 = arith.constant 1 : index
    %c145_297 = arith.constant 145 : index
    %536 = vector.load %arg12[%c1_296, %c145_297] : memref<2x512xf32, #tpu.memory_space<vmem>>, vector<1x256xf32>
    %537 = vector.broadcast %535 : f32 to vector<1x256xf32>
    %538 = arith.mulf %537, %536 : vector<1x256xf32>
    %539 = arith.addf %534, %538 : vector<1x256xf32>
    %cst_298 = arith.constant 0.000000e+00 : f32
    %540 = vector.broadcast %cst_298 : f32 to vector<1x256xf32>
    %541 = arith.select %127, %539, %540 : vector<1x256xi1>, vector<1x256xf32>
    %542 = arith.addf %530, %541 : vector<1x256xf32>
    %c0_299 = arith.constant 0 : index
    %c33 = arith.constant 33 : index
    %543 = memref.load %arg9[%c0_299, %c33] : memref<2x49xf32, #tpu.memory_space<smem>>
    %c0_300 = arith.constant 0 : index
    %c146 = arith.constant 146 : index
    %544 = vector.load %arg12[%c0_300, %c146] : memref<2x512xf32, #tpu.memory_space<vmem>>, vector<1x256xf32>
    %545 = vector.broadcast %543 : f32 to vector<1x256xf32>
    %546 = arith.mulf %545, %544 : vector<1x256xf32>
    %c1_301 = arith.constant 1 : index
    %c33_302 = arith.constant 33 : index
    %547 = memref.load %arg9[%c1_301, %c33_302] : memref<2x49xf32, #tpu.memory_space<smem>>
    %c1_303 = arith.constant 1 : index
    %c146_304 = arith.constant 146 : index
    %548 = vector.load %arg12[%c1_303, %c146_304] : memref<2x512xf32, #tpu.memory_space<vmem>>, vector<1x256xf32>
    %549 = vector.broadcast %547 : f32 to vector<1x256xf32>
    %550 = arith.mulf %549, %548 : vector<1x256xf32>
    %551 = arith.addf %546, %550 : vector<1x256xf32>
    %cst_305 = arith.constant 0.000000e+00 : f32
    %552 = vector.broadcast %cst_305 : f32 to vector<1x256xf32>
    %553 = arith.select %136, %551, %552 : vector<1x256xi1>, vector<1x256xf32>
    %554 = arith.addf %542, %553 : vector<1x256xf32>
    %c0_306 = arith.constant 0 : index
    %c34 = arith.constant 34 : index
    %555 = memref.load %arg9[%c0_306, %c34] : memref<2x49xf32, #tpu.memory_space<smem>>
    %c0_307 = arith.constant 0 : index
    %c147 = arith.constant 147 : index
    %556 = vector.load %arg12[%c0_307, %c147] : memref<2x512xf32, #tpu.memory_space<vmem>>, vector<1x256xf32>
    %557 = vector.broadcast %555 : f32 to vector<1x256xf32>
    %558 = arith.mulf %557, %556 : vector<1x256xf32>
    %c1_308 = arith.constant 1 : index
    %c34_309 = arith.constant 34 : index
    %559 = memref.load %arg9[%c1_308, %c34_309] : memref<2x49xf32, #tpu.memory_space<smem>>
    %c1_310 = arith.constant 1 : index
    %c147_311 = arith.constant 147 : index
    %560 = vector.load %arg12[%c1_310, %c147_311] : memref<2x512xf32, #tpu.memory_space<vmem>>, vector<1x256xf32>
    %561 = vector.broadcast %559 : f32 to vector<1x256xf32>
    %562 = arith.mulf %561, %560 : vector<1x256xf32>
    %563 = arith.addf %558, %562 : vector<1x256xf32>
    %cst_312 = arith.constant 0.000000e+00 : f32
    %564 = vector.broadcast %cst_312 : f32 to vector<1x256xf32>
    %565 = arith.select %145, %563, %564 : vector<1x256xi1>, vector<1x256xf32>
    %566 = arith.addf %554, %565 : vector<1x256xf32>
    %c0_313 = arith.constant 0 : index
    %c35 = arith.constant 35 : index
    %567 = memref.load %arg9[%c0_313, %c35] : memref<2x49xf32, #tpu.memory_space<smem>>
    %c0_314 = arith.constant 0 : index
    %c157 = arith.constant 157 : index
    %568 = vector.load %arg12[%c0_314, %c157] : memref<2x512xf32, #tpu.memory_space<vmem>>, vector<1x256xf32>
    %569 = vector.broadcast %567 : f32 to vector<1x256xf32>
    %570 = arith.mulf %569, %568 : vector<1x256xf32>
    %c1_315 = arith.constant 1 : index
    %c35_316 = arith.constant 35 : index
    %571 = memref.load %arg9[%c1_315, %c35_316] : memref<2x49xf32, #tpu.memory_space<smem>>
    %c1_317 = arith.constant 1 : index
    %c157_318 = arith.constant 157 : index
    %572 = vector.load %arg12[%c1_317, %c157_318] : memref<2x512xf32, #tpu.memory_space<vmem>>, vector<1x256xf32>
    %573 = vector.broadcast %571 : f32 to vector<1x256xf32>
    %574 = arith.mulf %573, %572 : vector<1x256xf32>
    %575 = arith.addf %570, %574 : vector<1x256xf32>
    %cst_319 = arith.constant 0.000000e+00 : f32
    %576 = vector.broadcast %cst_319 : f32 to vector<1x256xf32>
    %577 = arith.select %91, %575, %576 : vector<1x256xi1>, vector<1x256xf32>
    %578 = arith.addf %566, %577 : vector<1x256xf32>
    %c0_320 = arith.constant 0 : index
    %c36 = arith.constant 36 : index
    %579 = memref.load %arg9[%c0_320, %c36] : memref<2x49xf32, #tpu.memory_space<smem>>
    %c0_321 = arith.constant 0 : index
    %c158 = arith.constant 158 : index
    %580 = vector.load %arg12[%c0_321, %c158] : memref<2x512xf32, #tpu.memory_space<vmem>>, vector<1x256xf32>
    %581 = vector.broadcast %579 : f32 to vector<1x256xf32>
    %582 = arith.mulf %581, %580 : vector<1x256xf32>
    %c1_322 = arith.constant 1 : index
    %c36_323 = arith.constant 36 : index
    %583 = memref.load %arg9[%c1_322, %c36_323] : memref<2x49xf32, #tpu.memory_space<smem>>
    %c1_324 = arith.constant 1 : index
    %c158_325 = arith.constant 158 : index
    %584 = vector.load %arg12[%c1_324, %c158_325] : memref<2x512xf32, #tpu.memory_space<vmem>>, vector<1x256xf32>
    %585 = vector.broadcast %583 : f32 to vector<1x256xf32>
    %586 = arith.mulf %585, %584 : vector<1x256xf32>
    %587 = arith.addf %582, %586 : vector<1x256xf32>
    %cst_326 = arith.constant 0.000000e+00 : f32
    %588 = vector.broadcast %cst_326 : f32 to vector<1x256xf32>
    %589 = arith.select %100, %587, %588 : vector<1x256xi1>, vector<1x256xf32>
    %590 = arith.addf %578, %589 : vector<1x256xf32>
    %c0_327 = arith.constant 0 : index
    %c37 = arith.constant 37 : index
    %591 = memref.load %arg9[%c0_327, %c37] : memref<2x49xf32, #tpu.memory_space<smem>>
    %c0_328 = arith.constant 0 : index
    %c159 = arith.constant 159 : index
    %592 = vector.load %arg12[%c0_328, %c159] : memref<2x512xf32, #tpu.memory_space<vmem>>, vector<1x256xf32>
    %593 = vector.broadcast %591 : f32 to vector<1x256xf32>
    %594 = arith.mulf %593, %592 : vector<1x256xf32>
    %c1_329 = arith.constant 1 : index
    %c37_330 = arith.constant 37 : index
    %595 = memref.load %arg9[%c1_329, %c37_330] : memref<2x49xf32, #tpu.memory_space<smem>>
    %c1_331 = arith.constant 1 : index
    %c159_332 = arith.constant 159 : index
    %596 = vector.load %arg12[%c1_331, %c159_332] : memref<2x512xf32, #tpu.memory_space<vmem>>, vector<1x256xf32>
    %597 = vector.broadcast %595 : f32 to vector<1x256xf32>
    %598 = arith.mulf %597, %596 : vector<1x256xf32>
    %599 = arith.addf %594, %598 : vector<1x256xf32>
    %cst_333 = arith.constant 0.000000e+00 : f32
    %600 = vector.broadcast %cst_333 : f32 to vector<1x256xf32>
    %601 = arith.select %109, %599, %600 : vector<1x256xi1>, vector<1x256xf32>
    %602 = arith.addf %590, %601 : vector<1x256xf32>
    %c0_334 = arith.constant 0 : index
    %c38 = arith.constant 38 : index
    %603 = memref.load %arg9[%c0_334, %c38] : memref<2x49xf32, #tpu.memory_space<smem>>
    %c0_335 = arith.constant 0 : index
    %c160 = arith.constant 160 : index
    %604 = vector.load %arg12[%c0_335, %c160] : memref<2x512xf32, #tpu.memory_space<vmem>>, vector<1x256xf32>
    %605 = vector.broadcast %603 : f32 to vector<1x256xf32>
    %606 = arith.mulf %605, %604 : vector<1x256xf32>
    %c1_336 = arith.constant 1 : index
    %c38_337 = arith.constant 38 : index
    %607 = memref.load %arg9[%c1_336, %c38_337] : memref<2x49xf32, #tpu.memory_space<smem>>
    %c1_338 = arith.constant 1 : index
    %c160_339 = arith.constant 160 : index
    %608 = vector.load %arg12[%c1_338, %c160_339] : memref<2x512xf32, #tpu.memory_space<vmem>>, vector<1x256xf32>
    %609 = vector.broadcast %607 : f32 to vector<1x256xf32>
    %610 = arith.mulf %609, %608 : vector<1x256xf32>
    %611 = arith.addf %606, %610 : vector<1x256xf32>
    %cst_340 = arith.constant 0.000000e+00 : f32
    %612 = vector.broadcast %cst_340 : f32 to vector<1x256xf32>
    %613 = arith.select %118, %611, %612 : vector<1x256xi1>, vector<1x256xf32>
    %614 = arith.addf %602, %613 : vector<1x256xf32>
    %c0_341 = arith.constant 0 : index
    %c39 = arith.constant 39 : index
    %615 = memref.load %arg9[%c0_341, %c39] : memref<2x49xf32, #tpu.memory_space<smem>>
    %c0_342 = arith.constant 0 : index
    %c161 = arith.constant 161 : index
    %616 = vector.load %arg12[%c0_342, %c161] : memref<2x512xf32, #tpu.memory_space<vmem>>, vector<1x256xf32>
    %617 = vector.broadcast %615 : f32 to vector<1x256xf32>
    %618 = arith.mulf %617, %616 : vector<1x256xf32>
    %c1_343 = arith.constant 1 : index
    %c39_344 = arith.constant 39 : index
    %619 = memref.load %arg9[%c1_343, %c39_344] : memref<2x49xf32, #tpu.memory_space<smem>>
    %c1_345 = arith.constant 1 : index
    %c161_346 = arith.constant 161 : index
    %620 = vector.load %arg12[%c1_345, %c161_346] : memref<2x512xf32, #tpu.memory_space<vmem>>, vector<1x256xf32>
    %621 = vector.broadcast %619 : f32 to vector<1x256xf32>
    %622 = arith.mulf %621, %620 : vector<1x256xf32>
    %623 = arith.addf %618, %622 : vector<1x256xf32>
    %cst_347 = arith.constant 0.000000e+00 : f32
    %624 = vector.broadcast %cst_347 : f32 to vector<1x256xf32>
    %625 = arith.select %127, %623, %624 : vector<1x256xi1>, vector<1x256xf32>
    %626 = arith.addf %614, %625 : vector<1x256xf32>
    %c0_348 = arith.constant 0 : index
    %c40 = arith.constant 40 : index
    %627 = memref.load %arg9[%c0_348, %c40] : memref<2x49xf32, #tpu.memory_space<smem>>
    %c0_349 = arith.constant 0 : index
    %c162 = arith.constant 162 : index
    %628 = vector.load %arg12[%c0_349, %c162] : memref<2x512xf32, #tpu.memory_space<vmem>>, vector<1x256xf32>
    %629 = vector.broadcast %627 : f32 to vector<1x256xf32>
    %630 = arith.mulf %629, %628 : vector<1x256xf32>
    %c1_350 = arith.constant 1 : index
    %c40_351 = arith.constant 40 : index
    %631 = memref.load %arg9[%c1_350, %c40_351] : memref<2x49xf32, #tpu.memory_space<smem>>
    %c1_352 = arith.constant 1 : index
    %c162_353 = arith.constant 162 : index
    %632 = vector.load %arg12[%c1_352, %c162_353] : memref<2x512xf32, #tpu.memory_space<vmem>>, vector<1x256xf32>
    %633 = vector.broadcast %631 : f32 to vector<1x256xf32>
    %634 = arith.mulf %633, %632 : vector<1x256xf32>
    %635 = arith.addf %630, %634 : vector<1x256xf32>
    %cst_354 = arith.constant 0.000000e+00 : f32
    %636 = vector.broadcast %cst_354 : f32 to vector<1x256xf32>
    %637 = arith.select %136, %635, %636 : vector<1x256xi1>, vector<1x256xf32>
    %638 = arith.addf %626, %637 : vector<1x256xf32>
    %c0_355 = arith.constant 0 : index
    %c41 = arith.constant 41 : index
    %639 = memref.load %arg9[%c0_355, %c41] : memref<2x49xf32, #tpu.memory_space<smem>>
    %c0_356 = arith.constant 0 : index
    %c163 = arith.constant 163 : index
    %640 = vector.load %arg12[%c0_356, %c163] : memref<2x512xf32, #tpu.memory_space<vmem>>, vector<1x256xf32>
    %641 = vector.broadcast %639 : f32 to vector<1x256xf32>
    %642 = arith.mulf %641, %640 : vector<1x256xf32>
    %c1_357 = arith.constant 1 : index
    %c41_358 = arith.constant 41 : index
    %643 = memref.load %arg9[%c1_357, %c41_358] : memref<2x49xf32, #tpu.memory_space<smem>>
    %c1_359 = arith.constant 1 : index
    %c163_360 = arith.constant 163 : index
    %644 = vector.load %arg12[%c1_359, %c163_360] : memref<2x512xf32, #tpu.memory_space<vmem>>, vector<1x256xf32>
    %645 = vector.broadcast %643 : f32 to vector<1x256xf32>
    %646 = arith.mulf %645, %644 : vector<1x256xf32>
    %647 = arith.addf %642, %646 : vector<1x256xf32>
    %cst_361 = arith.constant 0.000000e+00 : f32
    %648 = vector.broadcast %cst_361 : f32 to vector<1x256xf32>
    %649 = arith.select %145, %647, %648 : vector<1x256xi1>, vector<1x256xf32>
    %650 = arith.addf %638, %649 : vector<1x256xf32>
    %c0_362 = arith.constant 0 : index
    %c42 = arith.constant 42 : index
    %651 = memref.load %arg9[%c0_362, %c42] : memref<2x49xf32, #tpu.memory_space<smem>>
    %c0_363 = arith.constant 0 : index
    %c173 = arith.constant 173 : index
    %652 = vector.load %arg12[%c0_363, %c173] : memref<2x512xf32, #tpu.memory_space<vmem>>, vector<1x256xf32>
    %653 = vector.broadcast %651 : f32 to vector<1x256xf32>
    %654 = arith.mulf %653, %652 : vector<1x256xf32>
    %c1_364 = arith.constant 1 : index
    %c42_365 = arith.constant 42 : index
    %655 = memref.load %arg9[%c1_364, %c42_365] : memref<2x49xf32, #tpu.memory_space<smem>>
    %c1_366 = arith.constant 1 : index
    %c173_367 = arith.constant 173 : index
    %656 = vector.load %arg12[%c1_366, %c173_367] : memref<2x512xf32, #tpu.memory_space<vmem>>, vector<1x256xf32>
    %657 = vector.broadcast %655 : f32 to vector<1x256xf32>
    %658 = arith.mulf %657, %656 : vector<1x256xf32>
    %659 = arith.addf %654, %658 : vector<1x256xf32>
    %cst_368 = arith.constant 0.000000e+00 : f32
    %660 = vector.broadcast %cst_368 : f32 to vector<1x256xf32>
    %661 = arith.select %91, %659, %660 : vector<1x256xi1>, vector<1x256xf32>
    %662 = arith.addf %650, %661 : vector<1x256xf32>
    %c0_369 = arith.constant 0 : index
    %c43 = arith.constant 43 : index
    %663 = memref.load %arg9[%c0_369, %c43] : memref<2x49xf32, #tpu.memory_space<smem>>
    %c0_370 = arith.constant 0 : index
    %c174 = arith.constant 174 : index
    %664 = vector.load %arg12[%c0_370, %c174] : memref<2x512xf32, #tpu.memory_space<vmem>>, vector<1x256xf32>
    %665 = vector.broadcast %663 : f32 to vector<1x256xf32>
    %666 = arith.mulf %665, %664 : vector<1x256xf32>
    %c1_371 = arith.constant 1 : index
    %c43_372 = arith.constant 43 : index
    %667 = memref.load %arg9[%c1_371, %c43_372] : memref<2x49xf32, #tpu.memory_space<smem>>
    %c1_373 = arith.constant 1 : index
    %c174_374 = arith.constant 174 : index
    %668 = vector.load %arg12[%c1_373, %c174_374] : memref<2x512xf32, #tpu.memory_space<vmem>>, vector<1x256xf32>
    %669 = vector.broadcast %667 : f32 to vector<1x256xf32>
    %670 = arith.mulf %669, %668 : vector<1x256xf32>
    %671 = arith.addf %666, %670 : vector<1x256xf32>
    %cst_375 = arith.constant 0.000000e+00 : f32
    %672 = vector.broadcast %cst_375 : f32 to vector<1x256xf32>
    %673 = arith.select %100, %671, %672 : vector<1x256xi1>, vector<1x256xf32>
    %674 = arith.addf %662, %673 : vector<1x256xf32>
    %c0_376 = arith.constant 0 : index
    %c44 = arith.constant 44 : index
    %675 = memref.load %arg9[%c0_376, %c44] : memref<2x49xf32, #tpu.memory_space<smem>>
    %c0_377 = arith.constant 0 : index
    %c175 = arith.constant 175 : index
    %676 = vector.load %arg12[%c0_377, %c175] : memref<2x512xf32, #tpu.memory_space<vmem>>, vector<1x256xf32>
    %677 = vector.broadcast %675 : f32 to vector<1x256xf32>
    %678 = arith.mulf %677, %676 : vector<1x256xf32>
    %c1_378 = arith.constant 1 : index
    %c44_379 = arith.constant 44 : index
    %679 = memref.load %arg9[%c1_378, %c44_379] : memref<2x49xf32, #tpu.memory_space<smem>>
    %c1_380 = arith.constant 1 : index
    %c175_381 = arith.constant 175 : index
    %680 = vector.load %arg12[%c1_380, %c175_381] : memref<2x512xf32, #tpu.memory_space<vmem>>, vector<1x256xf32>
    %681 = vector.broadcast %679 : f32 to vector<1x256xf32>
    %682 = arith.mulf %681, %680 : vector<1x256xf32>
    %683 = arith.addf %678, %682 : vector<1x256xf32>
    %cst_382 = arith.constant 0.000000e+00 : f32
    %684 = vector.broadcast %cst_382 : f32 to vector<1x256xf32>
    %685 = arith.select %109, %683, %684 : vector<1x256xi1>, vector<1x256xf32>
    %686 = arith.addf %674, %685 : vector<1x256xf32>
    %c0_383 = arith.constant 0 : index
    %c45 = arith.constant 45 : index
    %687 = memref.load %arg9[%c0_383, %c45] : memref<2x49xf32, #tpu.memory_space<smem>>
    %c0_384 = arith.constant 0 : index
    %c176 = arith.constant 176 : index
    %688 = vector.load %arg12[%c0_384, %c176] : memref<2x512xf32, #tpu.memory_space<vmem>>, vector<1x256xf32>
    %689 = vector.broadcast %687 : f32 to vector<1x256xf32>
    %690 = arith.mulf %689, %688 : vector<1x256xf32>
    %c1_385 = arith.constant 1 : index
    %c45_386 = arith.constant 45 : index
    %691 = memref.load %arg9[%c1_385, %c45_386] : memref<2x49xf32, #tpu.memory_space<smem>>
    %c1_387 = arith.constant 1 : index
    %c176_388 = arith.constant 176 : index
    %692 = vector.load %arg12[%c1_387, %c176_388] : memref<2x512xf32, #tpu.memory_space<vmem>>, vector<1x256xf32>
    %693 = vector.broadcast %691 : f32 to vector<1x256xf32>
    %694 = arith.mulf %693, %692 : vector<1x256xf32>
    %695 = arith.addf %690, %694 : vector<1x256xf32>
    %cst_389 = arith.constant 0.000000e+00 : f32
    %696 = vector.broadcast %cst_389 : f32 to vector<1x256xf32>
    %697 = arith.select %118, %695, %696 : vector<1x256xi1>, vector<1x256xf32>
    %698 = arith.addf %686, %697 : vector<1x256xf32>
    %c0_390 = arith.constant 0 : index
    %c46 = arith.constant 46 : index
    %699 = memref.load %arg9[%c0_390, %c46] : memref<2x49xf32, #tpu.memory_space<smem>>
    %c0_391 = arith.constant 0 : index
    %c177 = arith.constant 177 : index
    %700 = vector.load %arg12[%c0_391, %c177] : memref<2x512xf32, #tpu.memory_space<vmem>>, vector<1x256xf32>
    %701 = vector.broadcast %699 : f32 to vector<1x256xf32>
    %702 = arith.mulf %701, %700 : vector<1x256xf32>
    %c1_392 = arith.constant 1 : index
    %c46_393 = arith.constant 46 : index
    %703 = memref.load %arg9[%c1_392, %c46_393] : memref<2x49xf32, #tpu.memory_space<smem>>
    %c1_394 = arith.constant 1 : index
    %c177_395 = arith.constant 177 : index
    %704 = vector.load %arg12[%c1_394, %c177_395] : memref<2x512xf32, #tpu.memory_space<vmem>>, vector<1x256xf32>
    %705 = vector.broadcast %703 : f32 to vector<1x256xf32>
    %706 = arith.mulf %705, %704 : vector<1x256xf32>
    %707 = arith.addf %702, %706 : vector<1x256xf32>
    %cst_396 = arith.constant 0.000000e+00 : f32
    %708 = vector.broadcast %cst_396 : f32 to vector<1x256xf32>
    %709 = arith.select %127, %707, %708 : vector<1x256xi1>, vector<1x256xf32>
    %710 = arith.addf %698, %709 : vector<1x256xf32>
    %c0_397 = arith.constant 0 : index
    %c47 = arith.constant 47 : index
    %711 = memref.load %arg9[%c0_397, %c47] : memref<2x49xf32, #tpu.memory_space<smem>>
    %c0_398 = arith.constant 0 : index
    %c178 = arith.constant 178 : index
    %712 = vector.load %arg12[%c0_398, %c178] : memref<2x512xf32, #tpu.memory_space<vmem>>, vector<1x256xf32>
    %713 = vector.broadcast %711 : f32 to vector<1x256xf32>
    %714 = arith.mulf %713, %712 : vector<1x256xf32>
    %c1_399 = arith.constant 1 : index
    %c47_400 = arith.constant 47 : index
    %715 = memref.load %arg9[%c1_399, %c47_400] : memref<2x49xf32, #tpu.memory_space<smem>>
    %c1_401 = arith.constant 1 : index
    %c178_402 = arith.constant 178 : index
    %716 = vector.load %arg12[%c1_401, %c178_402] : memref<2x512xf32, #tpu.memory_space<vmem>>, vector<1x256xf32>
    %717 = vector.broadcast %715 : f32 to vector<1x256xf32>
    %718 = arith.mulf %717, %716 : vector<1x256xf32>
    %719 = arith.addf %714, %718 : vector<1x256xf32>
    %cst_403 = arith.constant 0.000000e+00 : f32
    %720 = vector.broadcast %cst_403 : f32 to vector<1x256xf32>
    %721 = arith.select %136, %719, %720 : vector<1x256xi1>, vector<1x256xf32>
    %722 = arith.addf %710, %721 : vector<1x256xf32>
    %c0_404 = arith.constant 0 : index
    %c48 = arith.constant 48 : index
    %723 = memref.load %arg9[%c0_404, %c48] : memref<2x49xf32, #tpu.memory_space<smem>>
    %c0_405 = arith.constant 0 : index
    %c179 = arith.constant 179 : index
    %724 = vector.load %arg12[%c0_405, %c179] : memref<2x512xf32, #tpu.memory_space<vmem>>, vector<1x256xf32>
    %725 = vector.broadcast %723 : f32 to vector<1x256xf32>
    %726 = arith.mulf %725, %724 : vector<1x256xf32>
    %c1_406 = arith.constant 1 : index
    %c48_407 = arith.constant 48 : index
    %727 = memref.load %arg9[%c1_406, %c48_407] : memref<2x49xf32, #tpu.memory_space<smem>>
    %c1_408 = arith.constant 1 : index
    %c179_409 = arith.constant 179 : index
    %728 = vector.load %arg12[%c1_408, %c179_409] : memref<2x512xf32, #tpu.memory_space<vmem>>, vector<1x256xf32>
    %729 = vector.broadcast %727 : f32 to vector<1x256xf32>
    %730 = arith.mulf %729, %728 : vector<1x256xf32>
    %731 = arith.addf %726, %730 : vector<1x256xf32>
    %cst_410 = arith.constant 0.000000e+00 : f32
    %732 = vector.broadcast %cst_410 : f32 to vector<1x256xf32>
    %733 = arith.select %145, %731, %732 : vector<1x256xi1>, vector<1x256xf32>
    %734 = arith.addf %722, %733 : vector<1x256xf32>
    %c1_411 = arith.constant 1 : index
    %735 = memref.load %arg10[%c1_411] : memref<2xf32, #tpu.memory_space<smem>>
    %736 = vector.broadcast %735 : f32 to vector<1x256xf32>
    %737 = arith.addf %734, %736 : vector<1x256xf32>
    %cst_412 = arith.constant 3.000000e+00 : f32
    %738 = vector.broadcast %cst_412 : f32 to vector<1x256xf32>
    %739 = arith.addf %737, %738 : vector<1x256xf32>
    %cst_413 = arith.constant 0.000000e+00 : f32
    %cst_414 = arith.constant 6.000000e+00 : f32
    %740 = vector.broadcast %cst_413 : f32 to vector<1x256xf32>
    %741 = arith.maximumf %740, %739 : vector<1x256xf32>
    %742 = vector.broadcast %cst_414 : f32 to vector<1x256xf32>
    %743 = arith.minimumf %742, %741 : vector<1x256xf32>
    %cst_415 = arith.constant 0.166666672 : f32
    %744 = vector.broadcast %cst_415 : f32 to vector<1x256xf32>
    %745 = arith.mulf %743, %744 : vector<1x256xf32>
    %746 = vector.broadcast %745 : vector<1x256xf32> to vector<32x256xf32>
    %747 = arith.mulf %38, %746 : vector<32x256xf32>
    %748 = arith.truncf %747 : vector<32x256xf32> to vector<32x256xbf16>
    %c0_416 = arith.constant 0 : index
    %c0_417 = arith.constant 0 : index
    %749 = vector.load %arg7[%c0_416, %c0_417] : memref<128x32xbf16, #tpu.memory_space<vmem>>, vector<128x32xbf16>
    %cst_418 = arith.constant dense<0.000000e+00> : vector<128x256xf32>
    %750 = tpu.matmul %749, %748, %cst_418 {dimension_numbers = #tpu.dot_dimension_numbers<[1], [0], [0], [1], [0, 0, 1, 1], [], []>} : vector<128x32xbf16>, vector<32x256xbf16>, vector<128x256xf32> -> vector<128x256xf32>
    %c0_419 = arith.constant 0 : index
    %c0_420 = arith.constant 0 : index
    %751 = vector.load %arg8[%c0_419, %c0_420] : memref<128x1xf32, #tpu.memory_space<vmem>>, vector<128x1xf32>
    %752 = vector.broadcast %751 : vector<128x1xf32> to vector<128x256xf32>
    %753 = arith.addf %750, %752 : vector<128x256xf32>
    %c0_421 = arith.constant 0 : index
    %c0_422 = arith.constant 0 : index
    %c0_423 = arith.constant 0 : index
    %754 = vector.load %arg11[%c0_421, %c0_422, %c0_423] : memref<1x128x256xf32, #tpu.memory_space<vmem>>, vector<1x128x256xf32>
    %755 = vector.shape_cast %754 : vector<1x128x256xf32> to vector<128x256xf32>
    %756 = vector.shape_cast %753 : vector<128x256xf32> to vector<1x128x256xf32>
    tpu.vector_store %arg11[%c0_421, %c0_422, %c0_423], %756 {strides = array<i32>} : memref<1x128x256xf32, #tpu.memory_space<vmem>>, vector<1x128x256xf32>,
    return
  }
  func.func @transform_0(%arg0: i32) -> (i32, i32, i32) {
    %c0_i32 = arith.constant 0 : i32
    %c0_i32_0 = arith.constant 0 : i32
    %c0_i32_1 = arith.constant 0 : i32
    return %arg0, %c0_i32, %c0_i32_0 : i32, i32, i32
  }
  func.func @transform_1(%arg0: i32) -> (i32, i32) {
    %c0_i32 = arith.constant 0 : i32
    %c0_i32_0 = arith.constant 0 : i32
    %c0_i32_1 = arith.constant 0 : i32
    return %c0_i32, %c0_i32_0 : i32, i32
  }
  func.func @transform_2(%arg0: i32) -> (i32, i32) {
    %c0_i32 = arith.constant 0 : i32
    %c0_i32_0 = arith.constant 0 : i32
    %c0_i32_1 = arith.constant 0 : i32
    return %c0_i32, %c0_i32_0 : i32, i32
  }
  func.func @transform_3(%arg0: i32) -> (i32, i32) {
    %c0_i32 = arith.constant 0 : i32
    %c0_i32_0 = arith.constant 0 : i32
    %c0_i32_1 = arith.constant 0 : i32
    return %c0_i32, %c0_i32_0 : i32, i32
  }
  func.func @transform_4(%arg0: i32) -> (i32, i32) {
    %c0_i32 = arith.constant 0 : i32
    %c0_i32_0 = arith.constant 0 : i32
    %c0_i32_1 = arith.constant 0 : i32
    return %c0_i32, %c0_i32_0 : i32, i32
  }
  func.func @transform_5(%arg0: i32) -> (i32, i32) {
    %c0_i32 = arith.constant 0 : i32
    %c0_i32_0 = arith.constant 0 : i32
    %c0_i32_1 = arith.constant 0 : i32
    return %c0_i32, %c0_i32_0 : i32, i32
  }
  func.func @transform_6(%arg0: i32) -> (i32, i32) {
    %c0_i32 = arith.constant 0 : i32
    %c0_i32_0 = arith.constant 0 : i32
    %c0_i32_1 = arith.constant 0 : i32
    return %c0_i32, %c0_i32_0 : i32, i32
  }
  func.func @transform_7(%arg0: i32) -> (i32, i32) {
    %c0_i32 = arith.constant 0 : i32
    %c0_i32_0 = arith.constant 0 : i32
    %c0_i32_1 = arith.constant 0 : i32
    return %c0_i32, %c0_i32_0 : i32, i32
  }
  func.func @transform_8(%arg0: i32) -> (i32, i32) {
    %c0_i32 = arith.constant 0 : i32
    %c0_i32_0 = arith.constant 0 : i32
    %c0_i32_1 = arith.constant 0 : i32
    return %c0_i32, %c0_i32_0 : i32, i32
  }
  func.func @transform_9(%arg0: i32) -> i32 {
    %c0_i32 = arith.constant 0 : i32
    %c0_i32_0 = arith.constant 0 : i32
    return %c0_i32 : i32
  }
  func.func @transform_10(%arg0: i32) -> (i32, i32, i32) {
    %c0_i32 = arith.constant 0 : i32
    %c0_i32_0 = arith.constant 0 : i32
    %c0_i32_1 = arith.constant 0 : i32
    return %arg0, %c0_i32, %c0_i32_0 : i32, i32, i32
  }
}

</mosaic_0001>

<llo_original>
// kernel: squeeze.8
$region0: #{squeeze.8}
  %s0 = inlined_call_operand.vmem [shape: f32[1,2,7,7], index: 0, kind: input, shape index: {}]
  %s1 = inlined_call_operand.vmem [shape: f32[2,49], index: 1, kind: output, shape index: {}]
  $region1: #{squeeze.8} parent=0
    #allocation0 [shape = 'u8[4096]{0}', space=vmem, size = 0x1000, scoped, tag = 'scoped mem for output reshape']
    %s2 = smov 3
    %v3 = vld [vmem:[%s0] ss:$8 sm:%s2]
    %vm4 = vcmask 56320
    %5 = vst.msk [vmem:[#allocation0] sm:$0x3] %vm4, %v3
    %s6 = scalar_lea.vmem %s0, 6
    %s7 = smov 3
    %v8 = vld [vmem:[%s6] ss:$8 sm:%s7]
    %9 = vrot.lane.b32.xlu0 %v8, 42
    %v10 = vpop.permute.xlu0 %9
    %vm11 = vcmask 400720
    %12 = vst.msk [vmem:[#allocation0] sm:$0x3] %vm11, %v10
    %s13 = scalar_lea.vmem %s0, 5
    %s14 = smov 3
    %v15 = vld [vmem:[%s13] ss:$8 sm:%s14]
    %16 = vrot.lane.b32.xlu0 %v15, 35
    %v17 = vpop.permute.xlu0 %16
    %vm18 = vcmask 343320
    %19 = vst.msk [vmem:[#allocation0] sm:$0x3] %vm18, %v17
    %s20 = scalar_lea.vmem %s0, 4
    %s21 = smov 3
    %v22 = vld [vmem:[%s20] ss:$8 sm:%s21]
    %23 = vrot.lane.b32.xlu0 %v22, 28
    %v24 = vpop.permute.xlu0 %23
    %vm25 = vcmask 285920
    %26 = vst.msk [vmem:[#allocation0] sm:$0x3] %vm25, %v24
    %s27 = scalar_lea.vmem %s0, 3
    %s28 = smov 3
    %v29 = vld [vmem:[%s27] ss:$8 sm:%s28]
    %30 = vrot.lane.b32.xlu0 %v29, 21
    %v31 = vpop.permute.xlu0 %30
    %vm32 = vcmask 228520
    %33 = vst.msk [vmem:[#allocation0] sm:$0x3] %vm32, %v31
    %s34 = scalar_lea.vmem %s0, 2
    %s35 = smov 3
    %v36 = vld [vmem:[%s34] ss:$8 sm:%s35]
    %37 = vrot.lane.b32.xlu0 %v36, 14
    %v38 = vpop.permute.xlu0 %37
    %vm39 = vcmask 171120
    %40 = vst.msk [vmem:[#allocation0] sm:$0x3] %vm39, %v38
    %s41 = scalar_lea.vmem %s0, 1
    %s42 = smov 3
    %v43 = vld [vmem:[%s41] ss:$8 sm:%s42]
    %44 = vrot.lane.b32.xlu0 %v43, 7
    %v45 = vpop.permute.xlu0 %44
    %vm46 = vcmask 113720
    %47 = vst.msk [vmem:[#allocation0] sm:$0x3] %vm46, %v45
    %s49 = ssub.s32 4, 1
    %v50 = vld [vmem:[#allocation0] sm:%s49]
    %s52 = ssub.s32 4, 1
    %53 = vst [vmem:[%s1] sm:%s52] %v50

// kernel: cbanet_forward.1
$region0: #{cbanet_forward.1}
  #allocation0 [shape = 'u32[]', space=smem, size = 0x4, offset = 0x4, fixed_abs, tag = 'smem constant byte address 0x4 - core index']
  #allocation1 [shape = 'u32[72,128]{1,0:T(1,128)}', space=vmem, size = 0x9000, scoped, tag = 'internal scratch']
  #allocation2 [shape = 'f32[2,512]{1,0:T(2,128)}', space=vmem, size = 0x1000, scoped, tag = 'scratch operand']
  %s0 = inlined_call_operand.vmem [shape: f32[2,32,256], index: 0, kind: input, shape index: {}]
  %s1 = inlined_call_operand.vmem [shape: f32[32,8], index: 1, kind: input, shape index: {}]
  %s2 = inlined_call_operand.vmem [shape: f32[1,8], index: 2, kind: input, shape index: {}]
  %s3 = inlined_call_operand.vmem [shape: f32[32,8], index: 3, kind: input, shape index: {}]
  %s4 = inlined_call_operand.vmem [shape: f32[32,1], index: 4, kind: input, shape index: {}]
  %s5 = inlined_call_operand.vmem [shape: f32[32,1], index: 5, kind: input, shape index: {}]
  %s6 = inlined_call_operand.vmem [shape: bf16[128,32], index: 6, kind: input, shape index: {}]
  %s7 = inlined_call_operand.vmem [shape: f32[128,1], index: 7, kind: input, shape index: {}]
  %s8 = inlined_call_operand.vmem [shape: f32[2,49], index: 8, kind: input, shape index: {}]
  %s9 = inlined_call_operand.vmem [shape: f32[2], index: 9, kind: input, shape index: {}]
  %s10 = inlined_call_operand.vmem [shape: f32[2,128,256], index: 10, kind: output, shape index: {}]
  %s11 = sld [smem:[#allocation0]]
  $region81: #{cbanet_forward.1} parent=0
    _
  %s13 = ssub.s32 1, %s11
  %s14 = scalar_select 0, %s13, %s11
  $region1: #{cbanet_forward.1} parent=0
    #allocation3 [shape = 'u8[1024]{0}', space=smem, size = 0x400, scoped, tag = 'input window, operand 8, single buffered']
    #allocation4 [shape = 's32[2]{0}', space=sflag, size = 0x8, scoped, tag = 'scoped memory for cbanet_forward.1']
    #allocation5 [shape = 'u8[512]{0}', space=smem, size = 0x200, scoped, tag = 'input window, operand 9, single buffered']
    #allocation6 [shape = 's32[1]{0}', space=sflag, size = 0x4, scoped, tag = 'scoped memory for cbanet_forward.1']
    %15 = vsyncpa [#allocation4], 0
    %16 = vsyncpa [#allocation6], 0
    loop: start=0, step=1, limit=4
    $region2: #{cbanet_forward.1} parent=1 // loop_pre_header
      _
    $region3: #{cbanet_forward.1} parent=1 // loop_header
      %s18 = sphi 0, %s22
      %p19 = scmp.ge.s32.totalorder %s18, 4
      %s28 = sphi 0, %s30
      %s31 = sphi 0, %s28
      %s32 = sphi 0, %s31
      %s48 = sphi 0, %s32
      %s52 = sphi 0, %s52
      %s54 = sphi 0, %s52
      %s55 = sphi 0, %s54
      %s69 = sphi 0, %s55
      %s73 = sphi 0, %s73
      %s75 = sphi 0, %s73
      %s76 = sphi 0, %s75
      %s90 = sphi 0, %s76
      %s94 = sphi 0, %s94
      %s96 = sphi 0, %s94
      %s97 = sphi 0, %s96
      %s111 = sphi 0, %s97
      %s115 = sphi 0, %s115
      %s117 = sphi 0, %s115
      %s118 = sphi 0, %s117
      %s132 = sphi 0, %s118
      %s136 = sphi 0, %s136
      %s138 = sphi 0, %s136
      %s139 = sphi 0, %s138
      %s153 = sphi 0, %s139
      %s157 = sphi 0, %s157
      %s159 = sphi 0, %s157
      %s160 = sphi 0, %s159
      %s174 = sphi 0, %s160
      %s178 = sphi 0, %s178
      %s180 = sphi 0, %s178
      %s181 = sphi 0, %s180
      %s195 = sphi 0, %s181
      %s199 = sphi 0, %s199
      %s201 = sphi 0, %s199
      %s202 = sphi 0, %s201
      %s216 = sphi 0, %s202
      %s220 = sphi 0, %s220
      %s222 = sphi 0, %s220
      %s223 = sphi 0, %s222
      %s237 = sphi 0, %s223
      %s243 = sphi 0, %s245
      %s246 = sphi 0, %s243
      %s247 = sphi 0, %s246
      %s263 = sphi 0, %s247
    $region4: #{cbanet_forward.1} parent=1 // loop_header_branch
      %21 = sbr.rel (%p19) target = $region8
    $region5: #{cbanet_forward.1} parent=1 // loop_body
      %s23 = ssub.s32 %s18, 1
      %s24 = ssub.s32 %s18, 2
      %s25 = sadd.s32 %s18, 1
      %s26 = ssub.s32 %s18, %s25
      %p27 = scmp.eq.s32.totalorder %s26, 0
      %s29 = sadd.s32 %s28, 1
      %s30 = scalar_select %p27, %s28, %s29
      %p33 = pneg %p27
      %p34 = scmp.eq.s32.totalorder %s18, 1
      %p35 = por %p33, %p34
      %p36 = scmp.ne.s32.totalorder %s28, %s31
      %p37 = scmp.eq.s32.totalorder %s18, 0
      %p38 = por %p36, %p37
      %p39 = scmp.ne.s32.totalorder %s28, %s31
      %p40 = scmp.eq.s32.totalorder %s23, 1
      %p41 = por %p39, %p40
      %p42 = scmp.ne.s32.totalorder %s31, %s32
      %p43 = scmp.eq.s32.totalorder %s23, 0
      %p44 = por %p42, %p43
      %p45 = scmp.ne.s32.totalorder %s31, %s32
      %p46 = scmp.eq.s32.totalorder %s24, 1
      %p47 = por %p45, %p46
      %p49 = scmp.ne.s32.totalorder %s32, %s48
      %p50 = scmp.eq.s32.totalorder %s24, 0
      %p51 = por %p49, %p50
      %s53 = sadd.s32 %s52, 1
      %p56 = scmp.eq.s32.totalorder %s18, 1
      %p57 = scmp.ne.s32.totalorder %s52, %s54
      %p58 = scmp.eq.s32.totalorder %s18, 0
      %p59 = por %p57, %p58
      %p60 = scmp.ne.s32.totalorder %s52, %s54
      %p61 = scmp.eq.s32.totalorder %s23, 1
      %p62 = por %p60, %p61
      %p63 = scmp.ne.s32.totalorder %s54, %s55
      %p64 = scmp.eq.s32.totalorder %s23, 0
      %p65 = por %p63, %p64
      %p66 = scmp.ne.s32.totalorder %s54, %s55
      %p67 = scmp.eq.s32.totalorder %s24, 1
      %p68 = por %p66, %p67
      %p70 = scmp.ne.s32.totalorder %s55, %s69
      %p71 = scmp.eq.s32.totalorder %s24, 0
      %p72 = por %p70, %p71
      %s74 = sadd.s32 %s73, 1
      %p77 = scmp.eq.s32.totalorder %s18, 1
      %p78 = scmp.ne.s32.totalorder %s73, %s75
      %p79 = scmp.eq.s32.totalorder %s18, 0
      %p80 = por %p78, %p79
      %p81 = scmp.ne.s32.totalorder %s73, %s75
      %p82 = scmp.eq.s32.totalorder %s23, 1
      %p83 = por %p81, %p82
      %p84 = scmp.ne.s32.totalorder %s75, %s76
      %p85 = scmp.eq.s32.totalorder %s23, 0
      %p86 = por %p84, %p85
      %p87 = scmp.ne.s32.totalorder %s75, %s76
      %p88 = scmp.eq.s32.totalorder %s24, 1
      %p89 = por %p87, %p88
      %p91 = scmp.ne.s32.totalorder %s76, %s90
      %p92 = scmp.eq.s32.totalorder %s24, 0
      %p93 = por %p91, %p92
      %s95 = sadd.s32 %s94, 1
      %p98 = scmp.eq.s32.totalorder %s18, 1
      %p99 = scmp.ne.s32.totalorder %s94, %s96
      %p100 = scmp.eq.s32.totalorder %s18, 0
      %p101 = por %p99, %p100
      %p102 = scmp.ne.s32.totalorder %s94, %s96
      %p103 = scmp.eq.s32.totalorder %s23, 1
      %p104 = por %p102, %p103
      %p105 = scmp.ne.s32.totalorder %s96, %s97
      %p106 = scmp.eq.s32.totalorder %s23, 0
      %p107 = por %p105, %p106
      %p108 = scmp.ne.s32.totalorder %s96, %s97
      %p109 = scmp.eq.s32.totalorder %s24, 1
      %p110 = por %p108, %p109
      %p112 = scmp.ne.s32.totalorder %s97, %s111
      %p113 = scmp.eq.s32.totalorder %s24, 0
      %p114 = por %p112, %p113
      %s116 = sadd.s32 %s115, 1
      %p119 = scmp.eq.s32.totalorder %s18, 1
      %p120 = scmp.ne.s32.totalorder %s115, %s117
      %p121 = scmp.eq.s32.totalorder %s18, 0
      %p122 = por %p120, %p121
      %p123 = scmp.ne.s32.totalorder %s115, %s117
      %p124 = scmp.eq.s32.totalorder %s23, 1
      %p125 = por %p123, %p124
      %p126 = scmp.ne.s32.totalorder %s117, %s118
      %p127 = scmp.eq.s32.totalorder %s23, 0
      %p128 = por %p126, %p127
      %p129 = scmp.ne.s32.totalorder %s117, %s118
      %p130 = scmp.eq.s32.totalorder %s24, 1
      %p131 = por %p129, %p130
      %p133 = scmp.ne.s32.totalorder %s118, %s132
      %p134 = scmp.eq.s32.totalorder %s24, 0
      %p135 = por %p133, %p134
      %s137 = sadd.s32 %s136, 1
      %p140 = scmp.eq.s32.totalorder %s18, 1
      %p141 = scmp.ne.s32.totalorder %s136, %s138
      %p142 = scmp.eq.s32.totalorder %s18, 0
      %p143 = por %p141, %p142
      %p144 = scmp.ne.s32.totalorder %s136, %s138
      %p145 = scmp.eq.s32.totalorder %s23, 1
      %p146 = por %p144, %p145
      %p147 = scmp.ne.s32.totalorder %s138, %s139
      %p148 = scmp.eq.s32.totalorder %s23, 0
      %p149 = por %p147, %p148
      %p150 = scmp.ne.s32.totalorder %s138, %s139
      %p151 = scmp.eq.s32.totalorder %s24, 1
      %p152 = por %p150, %p151
      %p154 = scmp.ne.s32.totalorder %s139, %s153
      %p155 = scmp.eq.s32.totalorder %s24, 0
      %p156 = por %p154, %p155
      %s158 = sadd.s32 %s157, 1
      %p161 = scmp.eq.s32.totalorder %s18, 1
      %p162 = scmp.ne.s32.totalorder %s157, %s159
      %p163 = scmp.eq.s32.totalorder %s18, 0
      %p164 = por %p162, %p163
      %p165 = scmp.ne.s32.totalorder %s157, %s159
      %p166 = scmp.eq.s32.totalorder %s23, 1
      %p167 = por %p165, %p166
      %p168 = scmp.ne.s32.totalorder %s159, %s160
      %p169 = scmp.eq.s32.totalorder %s23, 0
      %p170 = por %p168, %p169
      %p171 = scmp.ne.s32.totalorder %s159, %s160
      %p172 = scmp.eq.s32.totalorder %s24, 1
      %p173 = por %p171, %p172
      %p175 = scmp.ne.s32.totalorder %s160, %s174
      %p176 = scmp.eq.s32.totalorder %s24, 0
      %p177 = por %p175, %p176
      %s179 = sadd.s32 %s178, 1
      %p182 = scmp.eq.s32.totalorder %s18, 1
      %p183 = scmp.ne.s32.totalorder %s178, %s180
      %p184 = scmp.eq.s32.totalorder %s18, 0
      %p185 = por %p183, %p184
      %p186 = scmp.ne.s32.totalorder %s178, %s180
      %p187 = scmp.eq.s32.totalorder %s23, 1
      %p188 = por %p186, %p187
      %p189 = scmp.ne.s32.totalorder %s180, %s181
      %p190 = scmp.eq.s32.totalorder %s23, 0
      %p191 = por %p189, %p190
      %p192 = scmp.ne.s32.totalorder %s180, %s181
      %p193 = scmp.eq.s32.totalorder %s24, 1
      %p194 = por %p192, %p193
      %p196 = scmp.ne.s32.totalorder %s181, %s195
      %p197 = scmp.eq.s32.totalorder %s24, 0
      %p198 = por %p196, %p197
      %s200 = sadd.s32 %s199, 1
      %p203 = scmp.eq.s32.totalorder %s18, 1
      %p204 = scmp.ne.s32.totalorder %s199, %s201
      %p205 = scmp.eq.s32.totalorder %s18, 0
      %p206 = por %p204, %p205
      %p207 = scmp.ne.s32.totalorder %s199, %s201
      %p208 = scmp.eq.s32.totalorder %s23, 1
      %p209 = por %p207, %p208
      %p210 = scmp.ne.s32.totalorder %s201, %s202
      %p211 = scmp.eq.s32.totalorder %s23, 0
      %p212 = por %p210, %p211
      %p213 = scmp.ne.s32.totalorder %s201, %s202
      %p214 = scmp.eq.s32.totalorder %s24, 1
      %p215 = por %p213, %p214
      %p217 = scmp.ne.s32.totalorder %s202, %s216
      %p218 = scmp.eq.s32.totalorder %s24, 0
      %p219 = por %p217, %p218
      %s221 = sadd.s32 %s220, 1
      %p224 = scmp.eq.s32.totalorder %s18, 1
      %p225 = scmp.ne.s32.totalorder %s220, %s222
      %p226 = scmp.eq.s32.totalorder %s18, 0
      %p227 = por %p225, %p226
      %p228 = scmp.ne.s32.totalorder %s220, %s222
      %p229 = scmp.eq.s32.totalorder %s23, 1
      %p230 = por %p228, %p229
      %p231 = scmp.ne.s32.totalorder %s222, %s223
      %p232 = scmp.eq.s32.totalorder %s23, 0
      %p233 = por %p231, %p232
      %p234 = scmp.ne.s32.totalorder %s222, %s223
      %p235 = scmp.eq.s32.totalorder %s24, 1
      %p236 = por %p234, %p235
      %p238 = scmp.ne.s32.totalorder %s223, %s237
      %p239 = scmp.eq.s32.totalorder %s24, 0
      %p240 = por %p238, %p239
      %s241 = ssub.s32 %s18, %s25
      %p242 = scmp.eq.s32.totalorder %s241, 0
      %s244 = sadd.s32 %s243, 1
      %s245 = scalar_select %p242, %s243, %s244
      %p248 = pneg %p242
      %p249 = scmp.eq.s32.totalorder %s18, 1
      %p250 = por %p248, %p249
      %p251 = scmp.ne.s32.totalorder %s243, %s246
      %p252 = scmp.eq.s32.totalorder %s18, 0
      %p253 = por %p251, %p252
      %p254 = scmp.ne.s32.totalorder %s243, %s246
      %p255 = scmp.eq.s32.totalorder %s23, 1
      %p256 = por %p254, %p255
      %p257 = scmp.ne.s32.totalorder %s246, %s247
      %p258 = scmp.eq.s32.totalorder %s23, 0
      %p259 = por %p257, %p258
      %p260 = scmp.ne.s32.totalorder %s246, %s247
      %p261 = scmp.eq.s32.totalorder %s24, 1
      %p262 = por %p260, %p261
      %p264 = scmp.ne.s32.totalorder %s247, %s263
      %p265 = scmp.eq.s32.totalorder %s24, 0
      %p266 = por %p264, %p265
      %p267 = scmp.le.s32.totalorder 1, %s18
      %p268 = scmp.lt.s32.totalorder %s18, 3
      %p269 = pnand %p267, %p268
      %p270 = pneg %p269
      // Predicated region
      $region9: #{cbanet_forward.1} parent=5 // pred_check
        _
      $region10: #{cbanet_forward.1} parent=5 // pred_check_branch
        %272 = sbr.rel (%p269) target = $region12
      $region11: #{cbanet_forward.1} parent=5 // pred_region
        %s273 = ssub.s32 %s18, 1
        // Predicated region
        $region13: #{cbanet_forward.1} parent=11 // pred_check
          %p274 = pneg %p65
        $region14: #{cbanet_forward.1} parent=11 // pred_check_branch
          %276 = sbr.rel (%p274) target = $region16
        $region15: #{cbanet_forward.1} parent=11 // pred_region
          _
        $region16: #{cbanet_forward.1} parent=11 // pred_fallthru
          _
        // Predicated region
        $region17: #{cbanet_forward.1} parent=11 // pred_check
          %p277 = pneg %p86
        $region18: #{cbanet_forward.1} parent=11 // pred_check_branch
          %279 = sbr.rel (%p277) target = $region20
        $region19: #{cbanet_forward.1} parent=11 // pred_region
          _
        $region20: #{cbanet_forward.1} parent=11 // pred_fallthru
          _
        // Predicated region
        $region21: #{cbanet_forward.1} parent=11 // pred_check
          %p280 = pneg %p107
        $region22: #{cbanet_forward.1} parent=11 // pred_check_branch
          %282 = sbr.rel (%p280) target = $region24
        $region23: #{cbanet_forward.1} parent=11 // pred_region
          _
        $region24: #{cbanet_forward.1} parent=11 // pred_fallthru
          _
        // Predicated region
        $region25: #{cbanet_forward.1} parent=11 // pred_check
          %p283 = pneg %p128
        $region26: #{cbanet_forward.1} parent=11 // pred_check_branch
          %285 = sbr.rel (%p283) target = $region28
        $region27: #{cbanet_forward.1} parent=11 // pred_region
          _
        $region28: #{cbanet_forward.1} parent=11 // pred_fallthru
          _
        // Predicated region
        $region29: #{cbanet_forward.1} parent=11 // pred_check
          %p286 = pneg %p149
        $region30: #{cbanet_forward.1} parent=11 // pred_check_branch
          %288 = sbr.rel (%p286) target = $region32
        $region31: #{cbanet_forward.1} parent=11 // pred_region
          _
        $region32: #{cbanet_forward.1} parent=11 // pred_fallthru
          _
        // Predicated region
        $region33: #{cbanet_forward.1} parent=11 // pred_check
          %p289 = pneg %p170
        $region34: #{cbanet_forward.1} parent=11 // pred_check_branch
          %291 = sbr.rel (%p289) target = $region36
        $region35: #{cbanet_forward.1} parent=11 // pred_region
          _
        $region36: #{cbanet_forward.1} parent=11 // pred_fallthru
          _
        // Predicated region
        $region37: #{cbanet_forward.1} parent=11 // pred_check
          %p292 = pneg %p191
        $region38: #{cbanet_forward.1} parent=11 // pred_check_branch
          %294 = sbr.rel (%p292) target = $region40
        $region39: #{cbanet_forward.1} parent=11 // pred_region
          _
        $region40: #{cbanet_forward.1} parent=11 // pred_fallthru
          _
        // Predicated region
        $region41: #{cbanet_forward.1} parent=11 // pred_check
          %p295 = pneg %p212
        $region42: #{cbanet_forward.1} parent=11 // pred_check_branch
          %297 = sbr.rel (%p295) target = $region44
        $region43: #{cbanet_forward.1} parent=11 // pred_region
          %299 = vsyncadd [#allocation4], 0
          %s301 = sshll.u32 %s8, 4
          %s302 = int_to_ptr.vmem [resolvable:$true] %s301
          %304 = dma.vmem_to_smem %s302, 32, [#allocation3], [#allocation4]
        $region44: #{cbanet_forward.1} parent=11 // pred_fallthru
          _
        // Predicated region
        $region45: #{cbanet_forward.1} parent=11 // pred_check
          %p305 = pneg %p233
        $region46: #{cbanet_forward.1} parent=11 // pred_check_branch
          %307 = sbr.rel (%p305) target = $region48
        $region47: #{cbanet_forward.1} parent=11 // pred_region
          %309 = vsyncadd [#allocation6], 0
          %s311 = sshll.u32 %s9, 4
          %s312 = int_to_ptr.vmem [resolvable:$true] %s311
          %314 = dma.vmem_to_smem %s312, 16, [#allocation5], [#allocation6]
        $region48: #{cbanet_forward.1} parent=11 // pred_fallthru
          _
      $region12: #{cbanet_forward.1} parent=5 // pred_fallthru
        _
      %p315 = scmp.lt.s32.totalorder %s18, 2
      // Predicated region
      $region49: #{cbanet_forward.1} parent=5 // pred_check
        %p316 = pneg %p315
      $region50: #{cbanet_forward.1} parent=5 // pred_check_branch
        %318 = sbr.rel (%p316) target = $region52
      $region51: #{cbanet_forward.1} parent=5 // pred_region
        // Predicated region
        $region53: #{cbanet_forward.1} parent=51 // pred_check
          %p319 = pneg %p38
        $region54: #{cbanet_forward.1} parent=51 // pred_check_branch
          %321 = sbr.rel (%p319) target = $region56
        $region55: #{cbanet_forward.1} parent=51 // pred_region
          %p322 = scmp.lt.s32.totalorder %s18, 1
          %s323 = scalar_select %p322, %s18, 1
          %s324 = smul.addr %s323, 8
          %s325 = smul.addr %s324, 8
          %s326 = scalar_lea.vmem %s0, %s325
        $region56: #{cbanet_forward.1} parent=51 // pred_fallthru
          _
      $region52: #{cbanet_forward.1} parent=5 // pred_fallthru
        _
      %p327 = scmp.le.s32.totalorder 1, %s18
      %p328 = scmp.lt.s32.totalorder %s18, 3
      %p329 = pnand %p327, %p328
      %p330 = pneg %p329
      // Predicated region
      $region57: #{cbanet_forward.1} parent=5 // pred_check
        _
      $region58: #{cbanet_forward.1} parent=5 // pred_check_branch
        %332 = sbr.rel (%p329) target = $region60
      $region59: #{cbanet_forward.1} parent=5 // pred_region
        %s333 = ssub.s32 %s18, 1
        // Predicated region
        $region61: #{cbanet_forward.1} parent=59 // pred_check
          %p334 = pneg %p212
        $region62: #{cbanet_forward.1} parent=59 // pred_check_branch
          %336 = sbr.rel (%p334) target = $region64
        $region63: #{cbanet_forward.1} parent=59 // pred_region
          %338 = dma.done [#allocation4], 32
        $region64: #{cbanet_forward.1} parent=59 // pred_fallthru
          _
        // Predicated region
        $region65: #{cbanet_forward.1} parent=59 // pred_check
          %p339 = pneg %p233
        $region66: #{cbanet_forward.1} parent=59 // pred_check_branch
          %341 = sbr.rel (%p339) target = $region68
        $region67: #{cbanet_forward.1} parent=59 // pred_region
          %343 = dma.done [#allocation6], 16
        $region68: #{cbanet_forward.1} parent=59 // pred_fallthru
          _
        %344 = sfence
        %p345 = scmp.lt.s32.totalorder %s23, 1
        %s346 = scalar_select %p345, %s23, 1
        %s347 = smul.addr %s346, 8
        %s348 = smul.addr %s347, 8
        %s349 = scalar_lea.vmem %s0, %s348
        %p350 = pneg %p44
        %p351 = pneg %p41
        %p352 = pneg %p65
        %p353 = pneg %p62
        %p354 = pneg %p86
        %p355 = pneg %p83
        %p356 = pneg %p107
        %p357 = pneg %p104
        %p358 = pneg %p128
        %p359 = pneg %p125
        %p360 = pneg %p149
        %p361 = pneg %p146
        %p362 = pneg %p170
        %p363 = pneg %p167
        %p364 = pneg %p191
        %p365 = pneg %p188
        %p366 = pneg %p212
        %p367 = pneg %p209
        %p368 = pneg %p233
        %p369 = pneg %p230
        %p370 = pneg %p259
        %p371 = pneg %p256
        %p372 = scmp.lt.s32.totalorder %s23, 1
        %s373 = scalar_select %p372, %s23, 1
        %s374 = smul.addr %s373, 32
        %s375 = smul.addr %s374, 8
        %s376 = scalar_lea.vmem %s10, %s375
        %p377 = scmp.lt.s32.totalorder %s23, 1
        %s378 = scalar_select %p377, %s23, 1
        %s379 = smul.addr %s378, 8
        %s380 = smul.addr %s379, 8
        %s381 = scalar_lea.vmem %s0, %s380
        %p382 = scmp.lt.s32.totalorder %s23, 1
        %s383 = scalar_select %p382, %s23, 1
        %s384 = smul.addr %s383, 32
        %s385 = smul.addr %s384, 8
        %s386 = scalar_lea.vmem %s10, %s385
        %v388 = vld [vmem:[%s381] sm:$0xff]
        %v389 = vld [vmem:[%s381 + $0x8] sm:$0xff]
        %v390 = vld [vmem:[%s381 + $0x10] sm:$0xff]
        %v391 = vld [vmem:[%s381 + $0x18] sm:$0xff]
        %v392 = vld [vmem:[%s381 + $0x20] sm:$0xff]
        %v393 = vld [vmem:[%s381 + $0x28] sm:$0xff]
        %v394 = vld [vmem:[%s381 + $0x30] sm:$0xff]
        %v395 = vld [vmem:[%s381 + $0x38] sm:$0xff]
        %v396 = vadd.f32 %v388, %v389
        %397 = vadd.xlane.f32.xlu0 %v396
        %v398 = vpop.xlane.xlu0 %397
        %v399 = vadd.f32 %v390, %v391
        %400 = vadd.xlane.f32.xlu0 %v399
        %v401 = vpop.xlane.xlu0 %400
        %v402 = vadd.f32 %v392, %v393
        %403 = vadd.xlane.f32.xlu0 %v402
        %v404 = vpop.xlane.xlu0 %403
        %v405 = vadd.f32 %v394, %v395
        %406 = vadd.xlane.f32.xlu0 %v405
        %v407 = vpop.xlane.xlu0 %406
        %v408 = vrcp.pop 256.0
        %v409 = vmul.f32 256.0, %v408
        %v410 = vsub.f32 1.0, %v409
        %v411 = vmul.f32 %v408, %v410
        %v412 = vadd.f32 %v408, %v411
        %vm413 = vweird.f32 %v408
        %v414 = vsel %vm413, %v408, %v412
        %v415 = vmul.f32 %v398, %v414
        %v416 = vmul.f32 %v401, %v414
        %v417 = vmul.f32 %v404, %v414
        %v418 = vmul.f32 %v407, %v414
        %v419 = vld [vmem:[%s1] sm:$0xff]
        %v420 = vld [vmem:[%s1 + $0x8] sm:$0xff]
        %v421 = vld [vmem:[%s1 + $0x10] sm:$0xff]
        %v422 = vld [vmem:[%s1 + $0x18] sm:$0xff]
        %v423 = vmul.f32 %v419, %v415
        %v424 = vmul.f32 %v420, %v416
        %v425 = vmul.f32 %v421, %v417
        %v426 = vmul.f32 %v422, %v418
        %vm427 = vcmask 64512
        %v428 = vsel %vm427, %v423, 0.0
        %v429 = vsel %vm427, %v424, 0.0
        %v430 = vadd.f32 %v428, %v429
        %v431 = vsel %vm427, %v425, 0.0
        %v432 = vadd.f32 %v430, %v431
        %v433 = vsel %vm427, %v426, 0.0
        %v434 = vadd.f32 %v432, %v433
        %v435 = vrot.slane %v434, 4
        %v436 = vadd.f32 %v434, %v435
        %v437 = vrot.slane %v436, 2
        %v438 = vadd.f32 %v436, %v437
        %v439 = vrot.slane %v438, 1
        %v440 = vadd.f32 %v438, %v439
        %v441 = vld [vmem:[%s2] sm:$0x1]
        %v442 = vadd.f32 %v440, %v441
        %v443 = vadd.f32 %v442, 3.0
        %v444 = vmax.f32 %v443, 0.0
        %v445 = vmin.f32 %v444, 6.0
        %v446 = vmul.f32 %v445, 0.16666667
        %v447 = vmul.f32 %v442, %v446
        %v448 = vld [vmem:[%s3] sm:$0xff]
        %v449 = vld [vmem:[%s3 + $0x8] sm:$0xff]
        %v450 = vld [vmem:[%s3 + $0x10] sm:$0xff]
        %v451 = vld [vmem:[%s3 + $0x18] sm:$0xff]
        %v452 = vperm.slane %v447, 0
        %v453 = vmul.f32 %v448, %v452
        %v454 = vmul.f32 %v449, %v452
        %v455 = vmul.f32 %v450, %v452
        %v456 = vmul.f32 %v451, %v452
        %v457 = vsel %vm427, %v453, 0.0
        %458 = vadd.xlane.f32.xlu0 %v457
        %v459 = vpop.xlane.xlu0 %458
        %v460 = vsel %vm427, %v454, 0.0
        %461 = vadd.xlane.f32.xlu0 %v460
        %v462 = vpop.xlane.xlu0 %461
        %v463 = vsel %vm427, %v455, 0.0
        %464 = vadd.xlane.f32.xlu0 %v463
        %v465 = vpop.xlane.xlu0 %464
        %v466 = vsel %vm427, %v456, 0.0
        %467 = vadd.xlane.f32.xlu0 %v466
        %v468 = vpop.xlane.xlu0 %467
        %v469 = vld [vmem:[%s4] sm:$0xff]
        %v470 = vld [vmem:[%s4 + $0x8] sm:$0xff]
        %v471 = vld [vmem:[%s4 + $0x10] sm:$0xff]
        %v472 = vld [vmem:[%s4 + $0x18] sm:$0xff]
        %v473 = vadd.f32 %v459, %v469
        %v474 = vadd.f32 %v462, %v470
        %v475 = vadd.f32 %v465, %v471
        %v476 = vadd.f32 %v468, %v472
        %v477 = vadd.f32 %v473, 3.0
        %v478 = vadd.f32 %v474, 3.0
        %v479 = vadd.f32 %v475, 3.0
        %v480 = vadd.f32 %v476, 3.0
        %v481 = vmax.f32 %v477, 0.0
        %v482 = vmax.f32 %v478, 0.0
        %v483 = vmax.f32 %v479, 0.0
        %v484 = vmax.f32 %v480, 0.0
        %v485 = vmin.f32 %v481, 6.0
        %v486 = vmin.f32 %v482, 6.0
        %v487 = vmin.f32 %v483, 6.0
        %v488 = vmin.f32 %v484, 6.0
        %v489 = vmul.f32 %v485, 0.16666667
        %v490 = vmul.f32 %v486, 0.16666667
        %v491 = vmul.f32 %v487, 0.16666667
        %v492 = vmul.f32 %v488, 0.16666667
        %494 = vset.pattern.permute.xlu0 0
        %495 = vperm.xlu0 %494, %v489
        %v496 = vpop.permute.xlu0 %495
        %499 = vset.pattern.permute.xlu0 0
        %500 = vperm.xlu0 %499, %v490
        %v501 = vpop.permute.xlu0 %500
        %504 = vset.pattern.permute.xlu0 0
        %505 = vperm.xlu0 %504, %v491
        %v506 = vpop.permute.xlu0 %505
        %509 = vset.pattern.permute.xlu0 0
        %510 = vperm.xlu0 %509, %v492
        %v511 = vpop.permute.xlu0 %510
        %v513 = vmul.f32 %v388, %v496
        %v514 = vmul.f32 %v389, %v496
        %v515 = vmul.f32 %v390, %v501
        %v516 = vmul.f32 %v391, %v501
        %v517 = vmul.f32 %v392, %v506
        %v518 = vmul.f32 %v393, %v506
        %v519 = vmul.f32 %v394, %v511
        %v520 = vmul.f32 %v395, %v511
        %v521 = vadd.f32 %v513, %v515
        %v522 = vadd.f32 %v521, %v517
        %v523 = vadd.f32 %v522, %v519
        %v524 = vrot.slane %v523, 4
        %v525 = vadd.f32 %v523, %v524
        %v526 = vrot.slane %v525, 2
        %v527 = vadd.f32 %v525, %v526
        %v528 = vrot.slane %v527, 1
        %v529 = vadd.f32 %v527, %v528
        %v530 = vadd.f32 %v514, %v516
        %v531 = vadd.f32 %v530, %v518
        %v532 = vadd.f32 %v531, %v520
        %v533 = vrot.slane %v532, 4
        %v534 = vadd.f32 %v532, %v533
        %v535 = vrot.slane %v534, 2
        %v536 = vadd.f32 %v534, %v535
        %v537 = vrot.slane %v536, 1
        %v538 = vadd.f32 %v536, %v537
        %v539 = vrcp.pop 32.0
        %v540 = vmul.f32 32.0, %v539
        %v541 = vsub.f32 1.0, %v540
        %v542 = vmul.f32 %v539, %v541
        %v543 = vadd.f32 %v539, %v542
        %vm544 = vweird.f32 %v539
        %v545 = vsel %vm544, %v539, %v543
        %v546 = vmul.f32 %v529, %v545
        %v547 = vmul.f32 %v538, %v545
        %v548 = vld [vmem:[%s5] sm:$0xff]
        %v549 = vld [vmem:[%s5 + $0x8] sm:$0xff]
        %v550 = vld [vmem:[%s5 + $0x10] sm:$0xff]
        %v551 = vld [vmem:[%s5 + $0x18] sm:$0xff]
        %553 = vset.pattern.permute.xlu0 0
        %554 = vperm.xlu0 %553, %v548
        %v555 = vpop.permute.xlu0 %554
        %558 = vset.pattern.permute.xlu0 0
        %559 = vperm.xlu0 %558, %v549
        %v560 = vpop.permute.xlu0 %559
        %563 = vset.pattern.permute.xlu0 0
        %564 = vperm.xlu0 %563, %v550
        %v565 = vpop.permute.xlu0 %564
        %568 = vset.pattern.permute.xlu0 0
        %569 = vperm.xlu0 %568, %v551
        %v570 = vpop.permute.xlu0 %569
        %v572 = vmul.f32 %v513, %v555
        %v573 = vmul.f32 %v514, %v555
        %v574 = vmul.f32 %v515, %v560
        %v575 = vmul.f32 %v516, %v560
        %v576 = vmul.f32 %v517, %v565
        %v577 = vmul.f32 %v518, %v565
        %v578 = vmul.f32 %v519, %v570
        %v579 = vmul.f32 %v520, %v570
        %v580 = vadd.f32 %v572, %v574
        %v581 = vadd.f32 %v580, %v576
        %v582 = vadd.f32 %v581, %v578
        %v583 = vrot.slane %v582, 4
        %v584 = vadd.f32 %v582, %v583
        %v585 = vrot.slane %v584, 2
        %v586 = vadd.f32 %v584, %v585
        %v587 = vrot.slane %v586, 1
        %v588 = vadd.f32 %v586, %v587
        %v589 = vadd.f32 %v573, %v575
        %v590 = vadd.f32 %v589, %v577
        %v591 = vadd.f32 %v590, %v579
        %v592 = vrot.slane %v591, 4
        %v593 = vadd.f32 %v591, %v592
        %v594 = vrot.slane %v593, 2
        %v595 = vadd.f32 %v593, %v594
        %v596 = vrot.slane %v595, 1
        %v597 = vadd.f32 %v595, %v596
        %s598 = sld [smem:[#allocation5]]
        %v599 = vstv %s598
        %v600 = vadd.f32 %v588, %v599
        %v601 = vadd.f32 %v597, %v599
        %v602 = vadd.f32 %v600, 3.0
        %v603 = vadd.f32 %v601, 3.0
        %v604 = vmax.f32 %v602, 0.0
        %v605 = vmax.f32 %v603, 0.0
        %v606 = vmin.f32 %v604, 6.0
        %v607 = vmin.f32 %v605, 6.0
        %v608 = vmul.f32 %v606, 0.16666667
        %v609 = vmul.f32 %v607, 0.16666667
        %v610 = vmul.f32 %v600, %v608
        %v611 = vmul.f32 %v601, %v609
        %612 = vst [vmem:[#allocation2] sm:$0x3] 0.0
        %613 = vst [vmem:[#allocation2 + $0x6] sm:$0x3] 0.0
        %v616 = vrot.slane %v547, 7
        %vm617 = vcmask 1040384
        %v618 = vsel %vm617, %v546, %v616
        %v620 = vlaneseq
        %vm621 = vcmp.ge.s32.totalorder %v620, 0
        %vm622 = vcmp.lt.s32.totalorder %v620, 256
        %vm623 = vmand %vm621, %vm622
        %s624 = scalar_lea.vmem [#allocation2], 2
        %625 = vst.msk [vmem:[%s624] ss:$2 sm:$0x3] %vm623, %v618
        %v628 = vrot.slane %v611, 7
        %v629 = vsel %vm617, %v610, %v628
        %s631 = scalar_lea.vmem [#allocation2], 3
        %632 = vst.msk [vmem:[%s631] ss:$2 sm:$0x3] %vm623, %v629
        %v633 = vlaneseq
        %v634 = vand.u32 %v633, 127
        %v635 = vadd.s32 %v634, 128
        %vm636 = vcmp.lt.s32.totalorder %v634, 0
        %v637 = vsub.s32 0, %v634
        %v638 = vsel %vm636, %v637, %v634
        %v639 = vshrl.u32 %v638, 4
        %v640 = vand.u32 %v638, 15
        %v641 = vsub.s32 0, %v640
        %v642 = vsel %vm636, %v641, %v640
        %vm643 = vcmp.lt.s32.totalorder %v635, 0
        %v644 = vsub.s32 0, %v635
        %v645 = vsel %vm643, %v644, %v635
        %v646 = vshrl.u32 %v645, 4
        %v647 = vand.u32 %v645, 15
        %v648 = vsub.s32 0, %v647
        %v649 = vsel %vm643, %v648, %v647
        %vm650 = vcmp.ne.s32.totalorder %v642, 0
        %vm651 = vcmp.ne.s32.totalorder %v649, 0
        %vm652 = vcmp.lt.s32.totalorder %v642, 0
        %vm653 = vcmp.lt.s32.totalorder %v649, 0
        %vm654 = vmand %vm652, %vm650
        %vm655 = vmand %vm653, %vm651
        %v656 = vadd.s32 %v642, 16
        %v657 = vadd.s32 %v649, 16
        %v658 = vsel %vm654, %v656, %v642
        %v659 = vsel %vm655, %v657, %v649
        %v660 = vadd.s32 %v658, 4294967293
        %v661 = vadd.s32 %v659, 4294967293
        %vm662 = vcmp.ge.s32.totalorder %v660, 0
        %vm663 = vcmp.ge.s32.totalorder %v661, 0
        %vm664 = vcmp.lt.s32.totalorder %v660, 16
        %vm665 = vcmp.lt.s32.totalorder %v661, 16
        %vm666 = vmand %vm662, %vm664
        %vm667 = vmand %vm663, %vm665
        %v668 = vadd.s32 %v658, 4294967294
        %v669 = vadd.s32 %v659, 4294967294
        %vm670 = vcmp.ge.s32.totalorder %v668, 0
        %vm671 = vcmp.ge.s32.totalorder %v669, 0
        %vm672 = vcmp.lt.s32.totalorder %v668, 16
        %vm673 = vcmp.lt.s32.totalorder %v669, 16
        %vm674 = vmand %vm670, %vm672
        %vm675 = vmand %vm671, %vm673
        %v676 = vadd.s32 %v658, 4294967295
        %v677 = vadd.s32 %v659, 4294967295
        %vm678 = vcmp.ge.s32.totalorder %v676, 0
        %vm679 = vcmp.ge.s32.totalorder %v677, 0
        %vm680 = vcmp.lt.s32.totalorder %v676, 16
        %vm681 = vcmp.lt.s32.totalorder %v677, 16
        %vm682 = vmand %vm678, %vm680
        %vm683 = vmand %vm679, %vm681
        %vm684 = vcmp.ge.s32.totalorder %v658, 0
        %vm685 = vcmp.ge.s32.totalorder %v659, 0
        %vm686 = vcmp.lt.s32.totalorder %v658, 16
        %vm687 = vcmp.lt.s32.totalorder %v659, 16
        %vm688 = vmand %vm684, %vm686
        %vm689 = vmand %vm685, %vm687
        %v690 = vadd.s32 %v658, 1
        %v691 = vadd.s32 %v659, 1
        %vm692 = vcmp.ge.s32.totalorder %v690, 0
        %vm693 = vcmp.ge.s32.totalorder %v691, 0
        %vm694 = vcmp.lt.s32.totalorder %v690, 16
        %vm695 = vcmp.lt.s32.totalorder %v691, 16
        %vm696 = vmand %vm692, %vm694
        %vm697 = vmand %vm693, %vm695
        %v698 = vadd.s32 %v658, 2
        %v699 = vadd.s32 %v659, 2
        %vm700 = vcmp.ge.s32.totalorder %v698, 0
        %vm701 = vcmp.ge.s32.totalorder %v699, 0
        %vm702 = vcmp.lt.s32.totalorder %v698, 16
        %vm703 = vcmp.lt.s32.totalorder %v699, 16
        %vm704 = vmand %vm700, %vm702
        %vm705 = vmand %vm701, %vm703
        %v706 = vadd.s32 %v658, 3
        %v707 = vadd.s32 %v659, 3
        %vm708 = vcmp.ge.s32.totalorder %v706, 0
        %vm709 = vcmp.ge.s32.totalorder %v707, 0
        %vm710 = vcmp.lt.s32.totalorder %v706, 16
        %vm711 = vcmp.lt.s32.totalorder %v707, 16
        %vm712 = vmand %vm708, %vm710
        %vm713 = vmand %vm709, %vm711
        %s714 = sld [smem:[#allocation3]]
        %v715 = vld [vmem:[#allocation2] ss:$2 sm:$0x7]
        %v716 = vstv %s714
        %v717 = vmul.f32 %v716, %v715
        %s718 = sld [smem:[#allocation3 + $0x80]]
        %s719 = scalar_lea.vmem [#allocation2], 1
        %v720 = vld [vmem:[%s719] ss:$2 sm:$0x7]
        %v721 = vstv %s718
        %v722 = vmul.f32 %v721, %v720
        %v723 = vadd.f32 %v717, %v722
        %v725 = vperm.slane %v723, 0
        %v726 = vperm.slane %v723, 1
        %v727 = vperm.slane %v723, 2
        %728 = vrot.lane.b32.xlu0 %v725, 51
        %v729 = vpop.permute.xlu0 %728
        %730 = vrot.lane.b32.xlu0 %v726, 51
        %v731 = vpop.permute.xlu0 %730
        %732 = vrot.lane.b32.xlu0 %v727, 51
        %v733 = vpop.permute.xlu0 %732
        %vm734 = vcmask 416768
        %v735 = vsel %vm734, %v729, %v731
        %v736 = vsel %vm734, %v731, %v733
        %v739 = vsel %vm666, %v735, 0.0
        %v740 = vsel %vm667, %v736, 0.0
        %v741 = vadd.f32 %v739, 0.0
        %v742 = vadd.f32 %v740, 0.0
        %s743 = sld [smem:[#allocation3 + $0x1]]
        %v744 = vstv %s743
        %v745 = vmul.f32 %v744, %v715
        %s746 = sld [smem:[#allocation3 + $0x81]]
        %v747 = vstv %s746
        %v748 = vmul.f32 %v747, %v720
        %v749 = vadd.f32 %v745, %v748
        %v751 = vperm.slane %v749, 0
        %v752 = vperm.slane %v749, 1
        %v753 = vperm.slane %v749, 2
        %754 = vrot.lane.b32.xlu0 %v751, 50
        %v755 = vpop.permute.xlu0 %754
        %756 = vrot.lane.b32.xlu0 %v752, 50
        %v757 = vpop.permute.xlu0 %756
        %758 = vrot.lane.b32.xlu0 %v753, 50
        %v759 = vpop.permute.xlu0 %758
        %vm760 = vcmask 408576
        %v761 = vsel %vm760, %v755, %v757
        %v762 = vsel %vm760, %v757, %v759
        %v765 = vsel %vm674, %v761, 0.0
        %v766 = vsel %vm675, %v762, 0.0
        %v767 = vadd.f32 %v741, %v765
        %v768 = vadd.f32 %v742, %v766
        %s769 = sld [smem:[#allocation3 + $0x2]]
        %v770 = vstv %s769
        %v771 = vmul.f32 %v770, %v715
        %s772 = sld [smem:[#allocation3 + $0x82]]
        %v773 = vstv %s772
        %v774 = vmul.f32 %v773, %v720
        %v775 = vadd.f32 %v771, %v774
        %v777 = vperm.slane %v775, 0
        %v778 = vperm.slane %v775, 1
        %v779 = vperm.slane %v775, 2
        %780 = vrot.lane.b32.xlu0 %v777, 49
        %v781 = vpop.permute.xlu0 %780
        %782 = vrot.lane.b32.xlu0 %v778, 49
        %v783 = vpop.permute.xlu0 %782
        %784 = vrot.lane.b32.xlu0 %v779, 49
        %v785 = vpop.permute.xlu0 %784
        %vm786 = vcmask 400384
        %v787 = vsel %vm786, %v781, %v783
        %v788 = vsel %vm786, %v783, %v785
        %v791 = vsel %vm682, %v787, 0.0
        %v792 = vsel %vm683, %v788, 0.0
        %v793 = vadd.f32 %v767, %v791
        %v794 = vadd.f32 %v768, %v792
        %s795 = sld [smem:[#allocation3 + $0x3]]
        %v796 = vstv %s795
        %v797 = vmul.f32 %v796, %v715
        %s798 = sld [smem:[#allocation3 + $0x83]]
        %v799 = vstv %s798
        %v800 = vmul.f32 %v799, %v720
        %v801 = vadd.f32 %v797, %v800
        %v803 = vperm.slane %v801, 0
        %v804 = vperm.slane %v801, 1
        %v805 = vperm.slane %v801, 2
        %806 = vrot.lane.b32.xlu0 %v803, 48
        %v807 = vpop.permute.xlu0 %806
        %808 = vrot.lane.b32.xlu0 %v804, 48
        %v809 = vpop.permute.xlu0 %808
        %810 = vrot.lane.b32.xlu0 %v805, 48
        %v811 = vpop.permute.xlu0 %810
        %vm812 = vcmask 392192
        %v813 = vsel %vm812, %v807, %v809
        %v814 = vsel %vm812, %v809, %v811
        %v817 = vsel %vm688, %v813, 0.0
        %v818 = vsel %vm689, %v814, 0.0
        %v819 = vadd.f32 %v793, %v817
        %v820 = vadd.f32 %v794, %v818
        %s821 = sld [smem:[#allocation3 + $0x4]]
        %v822 = vstv %s821
        %v823 = vmul.f32 %v822, %v715
        %s824 = sld [smem:[#allocation3 + $0x84]]
        %v825 = vstv %s824
        %v826 = vmul.f32 %v825, %v720
        %v827 = vadd.f32 %v823, %v826
        %v829 = vperm.slane %v827, 0
        %v830 = vperm.slane %v827, 1
        %v831 = vperm.slane %v827, 2
        %832 = vrot.lane.b32.xlu0 %v829, 47
        %v833 = vpop.permute.xlu0 %832
        %834 = vrot.lane.b32.xlu0 %v830, 47
        %v835 = vpop.permute.xlu0 %834
        %836 = vrot.lane.b32.xlu0 %v831, 47
        %v837 = vpop.permute.xlu0 %836
        %vm838 = vcmask 384000
        %v839 = vsel %vm838, %v833, %v835
        %v840 = vsel %vm838, %v835, %v837
        %v843 = vsel %vm696, %v839, 0.0
        %v844 = vsel %vm697, %v840, 0.0
        %v845 = vadd.f32 %v819, %v843
        %v846 = vadd.f32 %v820, %v844
        %s847 = sld [smem:[#allocation3 + $0x5]]
        %v848 = vstv %s847
        %v849 = vmul.f32 %v848, %v715
        %s850 = sld [smem:[#allocation3 + $0x85]]
        %v851 = vstv %s850
        %v852 = vmul.f32 %v851, %v720
        %v853 = vadd.f32 %v849, %v852
        %v855 = vperm.slane %v853, 0
        %v856 = vperm.slane %v853, 1
        %v857 = vperm.slane %v853, 2
        %858 = vrot.lane.b32.xlu0 %v855, 46
        %v859 = vpop.permute.xlu0 %858
        %860 = vrot.lane.b32.xlu0 %v856, 46
        %v861 = vpop.permute.xlu0 %860
        %862 = vrot.lane.b32.xlu0 %v857, 46
        %v863 = vpop.permute.xlu0 %862
        %vm864 = vcmask 375808
        %v865 = vsel %vm864, %v859, %v861
        %v866 = vsel %vm864, %v861, %v863
        %v869 = vsel %vm704, %v865, 0.0
        %v870 = vsel %vm705, %v866, 0.0
        %v871 = vadd.f32 %v845, %v869
        %v872 = vadd.f32 %v846, %v870
        %s873 = sld [smem:[#allocation3 + $0x6]]
        %v874 = vstv %s873
        %v875 = vmul.f32 %v874, %v715
        %s876 = sld [smem:[#allocation3 + $0x86]]
        %v877 = vstv %s876
        %v878 = vmul.f32 %v877, %v720
        %v879 = vadd.f32 %v875, %v878
        %v881 = vperm.slane %v879, 0
        %v882 = vperm.slane %v879, 1
        %v883 = vperm.slane %v879, 2
        %884 = vrot.lane.b32.xlu0 %v881, 45
        %v885 = vpop.permute.xlu0 %884
        %886 = vrot.lane.b32.xlu0 %v882, 45
        %v887 = vpop.permute.xlu0 %886
        %888 = vrot.lane.b32.xlu0 %v883, 45
        %v889 = vpop.permute.xlu0 %888
        %vm890 = vcmask 367616
        %v891 = vsel %vm890, %v885, %v887
        %v892 = vsel %vm890, %v887, %v889
        %v895 = vsel %vm712, %v891, 0.0
        %v896 = vsel %vm713, %v892, 0.0
        %v897 = vadd.f32 %v871, %v895
        %v898 = vadd.f32 %v872, %v896
        %s899 = sld [smem:[#allocation3 + $0x7]]
        %v900 = vstv %s899
        %v901 = vmul.f32 %v900, %v715
        %s902 = sld [smem:[#allocation3 + $0x87]]
        %v903 = vstv %s902
        %v904 = vmul.f32 %v903, %v720
        %v905 = vadd.f32 %v901, %v904
        %v907 = vperm.slane %v905, 0
        %v908 = vperm.slane %v905, 1
        %v909 = vperm.slane %v905, 2
        %910 = vrot.lane.b32.xlu0 %v907, 35
        %v911 = vpop.permute.xlu0 %910
        %912 = vrot.lane.b32.xlu0 %v908, 35
        %v913 = vpop.permute.xlu0 %912
        %914 = vrot.lane.b32.xlu0 %v909, 35
        %v915 = vpop.permute.xlu0 %914
        %vm916 = vcmask 285696
        %v917 = vsel %vm916, %v911, %v913
        %v918 = vsel %vm916, %v913, %v915
        %v921 = vsel %vm666, %v917, 0.0
        %v922 = vsel %vm667, %v918, 0.0
        %v923 = vadd.f32 %v897, %v921
        %v924 = vadd.f32 %v898, %v922
        %s925 = sld [smem:[#allocation3 + $0x8]]
        %v926 = vstv %s925
        %v927 = vmul.f32 %v926, %v715
        %s928 = sld [smem:[#allocation3 + $0x88]]
        %v929 = vstv %s928
        %v930 = vmul.f32 %v929, %v720
        %v931 = vadd.f32 %v927, %v930
        %v933 = vperm.slane %v931, 0
        %v934 = vperm.slane %v931, 1
        %v935 = vperm.slane %v931, 2
        %936 = vrot.lane.b32.xlu0 %v933, 34
        %v937 = vpop.permute.xlu0 %936
        %938 = vrot.lane.b32.xlu0 %v934, 34
        %v939 = vpop.permute.xlu0 %938
        %940 = vrot.lane.b32.xlu0 %v935, 34
        %v941 = vpop.permute.xlu0 %940
        %vm942 = vcmask 277504
        %v943 = vsel %vm942, %v937, %v939
        %v944 = vsel %vm942, %v939, %v941
        %v947 = vsel %vm674, %v943, 0.0
        %v948 = vsel %vm675, %v944, 0.0
        %v949 = vadd.f32 %v923, %v947
        %v950 = vadd.f32 %v924, %v948
        %s951 = sld [smem:[#allocation3 + $0x9]]
        %v952 = vstv %s951
        %v953 = vmul.f32 %v952, %v715
        %s954 = sld [smem:[#allocation3 + $0x89]]
        %v955 = vstv %s954
        %v956 = vmul.f32 %v955, %v720
        %v957 = vadd.f32 %v953, %v956
        %v959 = vperm.slane %v957, 0
        %v960 = vperm.slane %v957, 1
        %v961 = vperm.slane %v957, 2
        %962 = vrot.lane.b32.xlu0 %v959, 33
        %v963 = vpop.permute.xlu0 %962
        %964 = vrot.lane.b32.xlu0 %v960, 33
        %v965 = vpop.permute.xlu0 %964
        %966 = vrot.lane.b32.xlu0 %v961, 33
        %v967 = vpop.permute.xlu0 %966
        %vm968 = vcmask 269312
        %v969 = vsel %vm968, %v963, %v965
        %v970 = vsel %vm968, %v965, %v967
        %v973 = vsel %vm682, %v969, 0.0
        %v974 = vsel %vm683, %v970, 0.0
        %v975 = vadd.f32 %v949, %v973
        %v976 = vadd.f32 %v950, %v974
        %s977 = sld [smem:[#allocation3 + $0xa]]
        %v978 = vstv %s977
        %v979 = vmul.f32 %v978, %v715
        %s980 = sld [smem:[#allocation3 + $0x8a]]
        %v981 = vstv %s980
        %v982 = vmul.f32 %v981, %v720
        %v983 = vadd.f32 %v979, %v982
        %v985 = vperm.slane %v983, 0
        %v986 = vperm.slane %v983, 1
        %v987 = vperm.slane %v983, 2
        %988 = vrot.lane.b32.xlu0 %v985, 32
        %v989 = vpop.permute.xlu0 %988
        %990 = vrot.lane.b32.xlu0 %v986, 32
        %v991 = vpop.permute.xlu0 %990
        %992 = vrot.lane.b32.xlu0 %v987, 32
        %v993 = vpop.permute.xlu0 %992
        %vm994 = vcmask 261120
        %v995 = vsel %vm994, %v989, %v991
        %v996 = vsel %vm994, %v991, %v993
        %v999 = vsel %vm688, %v995, 0.0
        %v1000 = vsel %vm689, %v996, 0.0
        %v1001 = vadd.f32 %v975, %v999
        %v1002 = vadd.f32 %v976, %v1000
        %s1003 = sld [smem:[#allocation3 + $0xb]]
        %v1004 = vstv %s1003
        %v1005 = vmul.f32 %v1004, %v715
        %s1006 = sld [smem:[#allocation3 + $0x8b]]
        %v1007 = vstv %s1006
        %v1008 = vmul.f32 %v1007, %v720
        %v1009 = vadd.f32 %v1005, %v1008
        %v1011 = vperm.slane %v1009, 0
        %v1012 = vperm.slane %v1009, 1
        %v1013 = vperm.slane %v1009, 2
        %1014 = vrot.lane.b32.xlu0 %v1011, 31
        %v1015 = vpop.permute.xlu0 %1014
        %1016 = vrot.lane.b32.xlu0 %v1012, 31
        %v1017 = vpop.permute.xlu0 %1016
        %1018 = vrot.lane.b32.xlu0 %v1013, 31
        %v1019 = vpop.permute.xlu0 %1018
        %vm1020 = vcmask 252928
        %v1021 = vsel %vm1020, %v1015, %v1017
        %v1022 = vsel %vm1020, %v1017, %v1019
        %v1025 = vsel %vm696, %v1021, 0.0
        %v1026 = vsel %vm697, %v1022, 0.0
        %v1027 = vadd.f32 %v1001, %v1025
        %v1028 = vadd.f32 %v1002, %v1026
        %s1029 = sld [smem:[#allocation3 + $0xc]]
        %v1030 = vstv %s1029
        %v1031 = vmul.f32 %v1030, %v715
        %s1032 = sld [smem:[#allocation3 + $0x8c]]
        %v1033 = vstv %s1032
        %v1034 = vmul.f32 %v1033, %v720
        %v1035 = vadd.f32 %v1031, %v1034
        %v1037 = vperm.slane %v1035, 0
        %v1038 = vperm.slane %v1035, 1
        %v1039 = vperm.slane %v1035, 2
        %1040 = vrot.lane.b32.xlu0 %v1037, 30
        %v1041 = vpop.permute.xlu0 %1040
        %1042 = vrot.lane.b32.xlu0 %v1038, 30
        %v1043 = vpop.permute.xlu0 %1042
        %1044 = vrot.lane.b32.xlu0 %v1039, 30
        %v1045 = vpop.permute.xlu0 %1044
        %vm1046 = vcmask 244736
        %v1047 = vsel %vm1046, %v1041, %v1043
        %v1048 = vsel %vm1046, %v1043, %v1045
        %v1051 = vsel %vm704, %v1047, 0.0
        %v1052 = vsel %vm705, %v1048, 0.0
        %v1053 = vadd.f32 %v1027, %v1051
        %v1054 = vadd.f32 %v1028, %v1052
        %s1055 = sld [smem:[#allocation3 + $0xd]]
        %v1056 = vstv %s1055
        %v1057 = vmul.f32 %v1056, %v715
        %s1058 = sld [smem:[#allocation3 + $0x8d]]
        %v1059 = vstv %s1058
        %v1060 = vmul.f32 %v1059, %v720
        %v1061 = vadd.f32 %v1057, %v1060
        %v1063 = vperm.slane %v1061, 0
        %v1064 = vperm.slane %v1061, 1
        %v1065 = vperm.slane %v1061, 2
        %1066 = vrot.lane.b32.xlu0 %v1063, 29
        %v1067 = vpop.permute.xlu0 %1066
        %1068 = vrot.lane.b32.xlu0 %v1064, 29
        %v1069 = vpop.permute.xlu0 %1068
        %1070 = vrot.lane.b32.xlu0 %v1065, 29
        %v1071 = vpop.permute.xlu0 %1070
        %vm1072 = vcmask 236544
        %v1073 = vsel %vm1072, %v1067, %v1069
        %v1074 = vsel %vm1072, %v1069, %v1071
        %v1077 = vsel %vm712, %v1073, 0.0
        %v1078 = vsel %vm713, %v1074, 0.0
        %v1079 = vadd.f32 %v1053, %v1077
        %v1080 = vadd.f32 %v1054, %v1078
        %s1081 = sld [smem:[#allocation3 + $0xe]]
        %v1082 = vstv %s1081
        %v1083 = vmul.f32 %v1082, %v715
        %s1084 = sld [smem:[#allocation3 + $0x8e]]
        %v1085 = vstv %s1084
        %v1086 = vmul.f32 %v1085, %v720
        %v1087 = vadd.f32 %v1083, %v1086
        %v1089 = vperm.slane %v1087, 0
        %v1090 = vperm.slane %v1087, 1
        %v1091 = vperm.slane %v1087, 2
        %1092 = vrot.lane.b32.xlu0 %v1089, 19
        %v1093 = vpop.permute.xlu0 %1092
        %1094 = vrot.lane.b32.xlu0 %v1090, 19
        %v1095 = vpop.permute.xlu0 %1094
        %1096 = vrot.lane.b32.xlu0 %v1091, 19
        %v1097 = vpop.permute.xlu0 %1096
        %vm1098 = vcmask 154624
        %v1099 = vsel %vm1098, %v1093, %v1095
        %v1100 = vsel %vm1098, %v1095, %v1097
        %v1103 = vsel %vm666, %v1099, 0.0
        %v1104 = vsel %vm667, %v1100, 0.0
        %v1105 = vadd.f32 %v1079, %v1103
        %v1106 = vadd.f32 %v1080, %v1104
        %s1107 = sld [smem:[#allocation3 + $0xf]]
        %v1108 = vstv %s1107
        %v1109 = vmul.f32 %v1108, %v715
        %s1110 = sld [smem:[#allocation3 + $0x8f]]
        %v1111 = vstv %s1110
        %v1112 = vmul.f32 %v1111, %v720
        %v1113 = vadd.f32 %v1109, %v1112
        %v1115 = vperm.slane %v1113, 0
        %v1116 = vperm.slane %v1113, 1
        %v1117 = vperm.slane %v1113, 2
        %1118 = vrot.lane.b32.xlu0 %v1115, 18
        %v1119 = vpop.permute.xlu0 %1118
        %1120 = vrot.lane.b32.xlu0 %v1116, 18
        %v1121 = vpop.permute.xlu0 %1120
        %1122 = vrot.lane.b32.xlu0 %v1117, 18
        %v1123 = vpop.permute.xlu0 %1122
        %vm1124 = vcmask 146432
        %v1125 = vsel %vm1124, %v1119, %v1121
        %v1126 = vsel %vm1124, %v1121, %v1123
        %v1129 = vsel %vm674, %v1125, 0.0
        %v1130 = vsel %vm675, %v1126, 0.0
        %v1131 = vadd.f32 %v1105, %v1129
        %v1132 = vadd.f32 %v1106, %v1130
        %s1133 = sld [smem:[#allocation3 + $0x10]]
        %v1134 = vstv %s1133
        %v1135 = vmul.f32 %v1134, %v715
        %s1136 = sld [smem:[#allocation3 + $0x90]]
        %v1137 = vstv %s1136
        %v1138 = vmul.f32 %v1137, %v720
        %v1139 = vadd.f32 %v1135, %v1138
        %v1141 = vperm.slane %v1139, 0
        %v1142 = vperm.slane %v1139, 1
        %v1143 = vperm.slane %v1139, 2
        %1144 = vrot.lane.b32.xlu0 %v1141, 17
        %v1145 = vpop.permute.xlu0 %1144
        %1146 = vrot.lane.b32.xlu0 %v1142, 17
        %v1147 = vpop.permute.xlu0 %1146
        %1148 = vrot.lane.b32.xlu0 %v1143, 17
        %v1149 = vpop.permute.xlu0 %1148
        %vm1150 = vcmask 138240
        %v1151 = vsel %vm1150, %v1145, %v1147
        %v1152 = vsel %vm1150, %v1147, %v1149
        %v1155 = vsel %vm682, %v1151, 0.0
        %v1156 = vsel %vm683, %v1152, 0.0
        %v1157 = vadd.f32 %v1131, %v1155
        %v1158 = vadd.f32 %v1132, %v1156
        %s1159 = sld [smem:[#allocation3 + $0x11]]
        %v1160 = vstv %s1159
        %v1161 = vmul.f32 %v1160, %v715
        %s1162 = sld [smem:[#allocation3 + $0x91]]
        %v1163 = vstv %s1162
        %v1164 = vmul.f32 %v1163, %v720
        %v1165 = vadd.f32 %v1161, %v1164
        %v1167 = vperm.slane %v1165, 0
        %v1168 = vperm.slane %v1165, 1
        %v1169 = vperm.slane %v1165, 2
        %1170 = vrot.lane.b32.xlu0 %v1167, 16
        %v1171 = vpop.permute.xlu0 %1170
        %1172 = vrot.lane.b32.xlu0 %v1168, 16
        %v1173 = vpop.permute.xlu0 %1172
        %1174 = vrot.lane.b32.xlu0 %v1169, 16
        %v1175 = vpop.permute.xlu0 %1174
        %vm1176 = vcmask 130048
        %v1177 = vsel %vm1176, %v1171, %v1173
        %v1178 = vsel %vm1176, %v1173, %v1175
        %v1181 = vsel %vm688, %v1177, 0.0
        %v1182 = vsel %vm689, %v1178, 0.0
        %v1183 = vadd.f32 %v1157, %v1181
        %v1184 = vadd.f32 %v1158, %v1182
        %s1185 = sld [smem:[#allocation3 + $0x12]]
        %v1186 = vstv %s1185
        %v1187 = vmul.f32 %v1186, %v715
        %s1188 = sld [smem:[#allocation3 + $0x92]]
        %v1189 = vstv %s1188
        %v1190 = vmul.f32 %v1189, %v720
        %v1191 = vadd.f32 %v1187, %v1190
        %v1193 = vperm.slane %v1191, 0
        %v1194 = vperm.slane %v1191, 1
        %v1195 = vperm.slane %v1191, 2
        %1196 = vrot.lane.b32.xlu0 %v1193, 15
        %v1197 = vpop.permute.xlu0 %1196
        %1198 = vrot.lane.b32.xlu0 %v1194, 15
        %v1199 = vpop.permute.xlu0 %1198
        %1200 = vrot.lane.b32.xlu0 %v1195, 15
        %v1201 = vpop.permute.xlu0 %1200
        %vm1202 = vcmask 121856
        %v1203 = vsel %vm1202, %v1197, %v1199
        %v1204 = vsel %vm1202, %v1199, %v1201
        %v1207 = vsel %vm696, %v1203, 0.0
        %v1208 = vsel %vm697, %v1204, 0.0
        %v1209 = vadd.f32 %v1183, %v1207
        %v1210 = vadd.f32 %v1184, %v1208
        %s1211 = sld [smem:[#allocation3 + $0x13]]
        %v1212 = vstv %s1211
        %v1213 = vmul.f32 %v1212, %v715
        %s1214 = sld [smem:[#allocation3 + $0x93]]
        %v1215 = vstv %s1214
        %v1216 = vmul.f32 %v1215, %v720
        %v1217 = vadd.f32 %v1213, %v1216
        %v1219 = vperm.slane %v1217, 0
        %v1220 = vperm.slane %v1217, 1
        %v1221 = vperm.slane %v1217, 2
        %1222 = vrot.lane.b32.xlu0 %v1219, 14
        %v1223 = vpop.permute.xlu0 %1222
        %1224 = vrot.lane.b32.xlu0 %v1220, 14
        %v1225 = vpop.permute.xlu0 %1224
        %1226 = vrot.lane.b32.xlu0 %v1221, 14
        %v1227 = vpop.permute.xlu0 %1226
        %vm1228 = vcmask 113664
        %v1229 = vsel %vm1228, %v1223, %v1225
        %v1230 = vsel %vm1228, %v1225, %v1227
        %v1233 = vsel %vm704, %v1229, 0.0
        %v1234 = vsel %vm705, %v1230, 0.0
        %v1235 = vadd.f32 %v1209, %v1233
        %v1236 = vadd.f32 %v1210, %v1234
        %s1237 = sld [smem:[#allocation3 + $0x14]]
        %v1238 = vstv %s1237
        %v1239 = vmul.f32 %v1238, %v715
        %s1240 = sld [smem:[#allocation3 + $0x94]]
        %v1241 = vstv %s1240
        %v1242 = vmul.f32 %v1241, %v720
        %v1243 = vadd.f32 %v1239, %v1242
        %v1245 = vperm.slane %v1243, 0
        %v1246 = vperm.slane %v1243, 1
        %v1247 = vperm.slane %v1243, 2
        %1248 = vrot.lane.b32.xlu0 %v1245, 13
        %v1249 = vpop.permute.xlu0 %1248
        %1250 = vrot.lane.b32.xlu0 %v1246, 13
        %v1251 = vpop.permute.xlu0 %1250
        %1252 = vrot.lane.b32.xlu0 %v1247, 13
        %v1253 = vpop.permute.xlu0 %1252
        %vm1254 = vcmask 105472
        %v1255 = vsel %vm1254, %v1249, %v1251
        %v1256 = vsel %vm1254, %v1251, %v1253
        %v1259 = vsel %vm712, %v1255, 0.0
        %v1260 = vsel %vm713, %v1256, 0.0
        %v1261 = vadd.f32 %v1235, %v1259
        %v1262 = vadd.f32 %v1236, %v1260
        %s1263 = sld [smem:[#allocation3 + $0x15]]
        %v1264 = vstv %s1263
        %v1265 = vmul.f32 %v1264, %v715
        %s1266 = sld [smem:[#allocation3 + $0x95]]
        %v1267 = vstv %s1266
        %v1268 = vmul.f32 %v1267, %v720
        %v1269 = vadd.f32 %v1265, %v1268
        %v1271 = vperm.slane %v1269, 0
        %v1272 = vperm.slane %v1269, 1
        %v1273 = vperm.slane %v1269, 2
        %1274 = vrot.lane.b32.xlu0 %v1271, 3
        %v1275 = vpop.permute.xlu0 %1274
        %1276 = vrot.lane.b32.xlu0 %v1272, 3
        %v1277 = vpop.permute.xlu0 %1276
        %1278 = vrot.lane.b32.xlu0 %v1273, 3
        %v1279 = vpop.permute.xlu0 %1278
        %vm1280 = vcmask 23552
        %v1281 = vsel %vm1280, %v1275, %v1277
        %v1282 = vsel %vm1280, %v1277, %v1279
        %v1285 = vsel %vm666, %v1281, 0.0
        %v1286 = vsel %vm667, %v1282, 0.0
        %v1287 = vadd.f32 %v1261, %v1285
        %v1288 = vadd.f32 %v1262, %v1286
        %s1289 = sld [smem:[#allocation3 + $0x16]]
        %v1290 = vstv %s1289
        %v1291 = vmul.f32 %v1290, %v715
        %s1292 = sld [smem:[#allocation3 + $0x96]]
        %v1293 = vstv %s1292
        %v1294 = vmul.f32 %v1293, %v720
        %v1295 = vadd.f32 %v1291, %v1294
        %v1297 = vperm.slane %v1295, 0
        %v1298 = vperm.slane %v1295, 1
        %v1299 = vperm.slane %v1295, 2
        %1300 = vrot.lane.b32.xlu0 %v1297, 2
        %v1301 = vpop.permute.xlu0 %1300
        %1302 = vrot.lane.b32.xlu0 %v1298, 2
        %v1303 = vpop.permute.xlu0 %1302
        %1304 = vrot.lane.b32.xlu0 %v1299, 2
        %v1305 = vpop.permute.xlu0 %1304
        %vm1306 = vcmask 15360
        %v1307 = vsel %vm1306, %v1301, %v1303
        %v1308 = vsel %vm1306, %v1303, %v1305
        %v1311 = vsel %vm674, %v1307, 0.0
        %v1312 = vsel %vm675, %v1308, 0.0
        %v1313 = vadd.f32 %v1287, %v1311
        %v1314 = vadd.f32 %v1288, %v1312
        %s1315 = sld [smem:[#allocation3 + $0x17]]
        %v1316 = vstv %s1315
        %v1317 = vmul.f32 %v1316, %v715
        %s1318 = sld [smem:[#allocation3 + $0x97]]
        %v1319 = vstv %s1318
        %v1320 = vmul.f32 %v1319, %v720
        %v1321 = vadd.f32 %v1317, %v1320
        %v1323 = vperm.slane %v1321, 0
        %v1324 = vperm.slane %v1321, 1
        %v1325 = vperm.slane %v1321, 2
        %1326 = vrot.lane.b32.xlu0 %v1323, 1
        %v1327 = vpop.permute.xlu0 %1326
        %1328 = vrot.lane.b32.xlu0 %v1324, 1
        %v1329 = vpop.permute.xlu0 %1328
        %1330 = vrot.lane.b32.xlu0 %v1325, 1
        %v1331 = vpop.permute.xlu0 %1330
        %vm1332 = vcmask 7168
        %v1333 = vsel %vm1332, %v1327, %v1329
        %v1334 = vsel %vm1332, %v1329, %v1331
        %v1337 = vsel %vm682, %v1333, 0.0
        %v1338 = vsel %vm683, %v1334, 0.0
        %v1339 = vadd.f32 %v1313, %v1337
        %v1340 = vadd.f32 %v1314, %v1338
        %s1341 = sld [smem:[#allocation3 + $0x18]]
        %v1342 = vld [vmem:[%s624] ss:$2 sm:$0x3]
        %v1343 = vstv %s1341
        %v1344 = vmul.f32 %v1343, %v1342
        %s1345 = sld [smem:[#allocation3 + $0x98]]
        %v1346 = vld [vmem:[%s631] ss:$2 sm:$0x3]
        %v1347 = vstv %s1345
        %v1348 = vmul.f32 %v1347, %v1346
        %v1349 = vadd.f32 %v1344, %v1348
        %v1351 = vperm.slane %v1349, 0
        %v1352 = vperm.slane %v1349, 1
        %v1355 = vsel %vm688, %v1351, 0.0
        %v1356 = vsel %vm689, %v1352, 0.0
        %v1357 = vadd.f32 %v1339, %v1355
        %v1358 = vadd.f32 %v1340, %v1356
        %s1359 = sld [smem:[#allocation3 + $0x19]]
        %s1360 = scalar_lea.vmem [#allocation2], 2
        %v1361 = vld [vmem:[%s1360] ss:$2 sm:$0x7]
        %v1362 = vstv %s1359
        %v1363 = vmul.f32 %v1362, %v1361
        %s1364 = sld [smem:[#allocation3 + $0x99]]
        %s1365 = scalar_lea.vmem [#allocation2], 3
        %v1366 = vld [vmem:[%s1365] ss:$2 sm:$0x7]
        %v1367 = vstv %s1364
        %v1368 = vmul.f32 %v1367, %v1366
        %v1369 = vadd.f32 %v1363, %v1368
        %v1371 = vperm.slane %v1369, 0
        %v1372 = vperm.slane %v1369, 1
        %v1373 = vperm.slane %v1369, 2
        %1374 = vrot.lane.b32.xlu0 %v1371, 127
        %v1375 = vpop.permute.xlu0 %1374
        %1376 = vrot.lane.b32.xlu0 %v1372, 127
        %v1377 = vpop.permute.xlu0 %1376
        %1378 = vrot.lane.b32.xlu0 %v1373, 127
        %v1379 = vpop.permute.xlu0 %1378
        %vm1380 = vcmask 1039360
        %v1381 = vsel %vm1380, %v1375, %v1377
        %v1382 = vsel %vm1380, %v1377, %v1379
        %v1385 = vsel %vm696, %v1381, 0.0
        %v1386 = vsel %vm697, %v1382, 0.0
        %v1387 = vadd.f32 %v1357, %v1385
        %v1388 = vadd.f32 %v1358, %v1386
        %s1389 = sld [smem:[#allocation3 + $0x1a]]
        %v1390 = vstv %s1389
        %v1391 = vmul.f32 %v1390, %v1361
        %s1392 = sld [smem:[#allocation3 + $0x9a]]
        %v1393 = vstv %s1392
        %v1394 = vmul.f32 %v1393, %v1366
        %v1395 = vadd.f32 %v1391, %v1394
        %v1397 = vperm.slane %v1395, 0
        %v1398 = vperm.slane %v1395, 1
        %v1399 = vperm.slane %v1395, 2
        %1400 = vrot.lane.b32.xlu0 %v1397, 126
        %v1401 = vpop.permute.xlu0 %1400
        %1402 = vrot.lane.b32.xlu0 %v1398, 126
        %v1403 = vpop.permute.xlu0 %1402
        %1404 = vrot.lane.b32.xlu0 %v1399, 126
        %v1405 = vpop.permute.xlu0 %1404
        %vm1406 = vcmask 1031168
        %v1407 = vsel %vm1406, %v1401, %v1403
        %v1408 = vsel %vm1406, %v1403, %v1405
        %v1411 = vsel %vm704, %v1407, 0.0
        %v1412 = vsel %vm705, %v1408, 0.0
        %v1413 = vadd.f32 %v1387, %v1411
        %v1414 = vadd.f32 %v1388, %v1412
        %s1415 = sld [smem:[#allocation3 + $0x1b]]
        %v1416 = vstv %s1415
        %v1417 = vmul.f32 %v1416, %v1361
        %s1418 = sld [smem:[#allocation3 + $0x9b]]
        %v1419 = vstv %s1418
        %v1420 = vmul.f32 %v1419, %v1366
        %v1421 = vadd.f32 %v1417, %v1420
        %v1423 = vperm.slane %v1421, 0
        %v1424 = vperm.slane %v1421, 1
        %v1425 = vperm.slane %v1421, 2
        %1426 = vrot.lane.b32.xlu0 %v1423, 125
        %v1427 = vpop.permute.xlu0 %1426
        %1428 = vrot.lane.b32.xlu0 %v1424, 125
        %v1429 = vpop.permute.xlu0 %1428
        %1430 = vrot.lane.b32.xlu0 %v1425, 125
        %v1431 = vpop.permute.xlu0 %1430
        %vm1432 = vcmask 1022976
        %v1433 = vsel %vm1432, %v1427, %v1429
        %v1434 = vsel %vm1432, %v1429, %v1431
        %v1437 = vsel %vm712, %v1433, 0.0
        %v1438 = vsel %vm713, %v1434, 0.0
        %v1439 = vadd.f32 %v1413, %v1437
        %v1440 = vadd.f32 %v1414, %v1438
        %s1441 = sld [smem:[#allocation3 + $0x1c]]
        %v1442 = vstv %s1441
        %v1443 = vmul.f32 %v1442, %v1361
        %s1444 = sld [smem:[#allocation3 + $0x9c]]
        %v1445 = vstv %s1444
        %v1446 = vmul.f32 %v1445, %v1366
        %v1447 = vadd.f32 %v1443, %v1446
        %v1449 = vperm.slane %v1447, 0
        %v1450 = vperm.slane %v1447, 1
        %v1451 = vperm.slane %v1447, 2
        %1452 = vrot.lane.b32.xlu0 %v1449, 115
        %v1453 = vpop.permute.xlu0 %1452
        %1454 = vrot.lane.b32.xlu0 %v1450, 115
        %v1455 = vpop.permute.xlu0 %1454
        %1456 = vrot.lane.b32.xlu0 %v1451, 115
        %v1457 = vpop.permute.xlu0 %1456
        %vm1458 = vcmask 941056
        %v1459 = vsel %vm1458, %v1453, %v1455
        %v1460 = vsel %vm1458, %v1455, %v1457
        %v1463 = vsel %vm666, %v1459, 0.0
        %v1464 = vsel %vm667, %v1460, 0.0
        %v1465 = vadd.f32 %v1439, %v1463
        %v1466 = vadd.f32 %v1440, %v1464
        %s1467 = sld [smem:[#allocation3 + $0x1d]]
        %v1468 = vstv %s1467
        %v1469 = vmul.f32 %v1468, %v1361
        %s1470 = sld [smem:[#allocation3 + $0x9d]]
        %v1471 = vstv %s1470
        %v1472 = vmul.f32 %v1471, %v1366
        %v1473 = vadd.f32 %v1469, %v1472
        %v1475 = vperm.slane %v1473, 0
        %v1476 = vperm.slane %v1473, 1
        %v1477 = vperm.slane %v1473, 2
        %1478 = vrot.lane.b32.xlu0 %v1475, 114
        %v1479 = vpop.permute.xlu0 %1478
        %1480 = vrot.lane.b32.xlu0 %v1476, 114
        %v1481 = vpop.permute.xlu0 %1480
        %1482 = vrot.lane.b32.xlu0 %v1477, 114
        %v1483 = vpop.permute.xlu0 %1482
        %vm1484 = vcmask 932864
        %v1485 = vsel %vm1484, %v1479, %v1481
        %v1486 = vsel %vm1484, %v1481, %v1483
        %v1489 = vsel %vm674, %v1485, 0.0
        %v1490 = vsel %vm675, %v1486, 0.0
        %v1491 = vadd.f32 %v1465, %v1489
        %v1492 = vadd.f32 %v1466, %v1490
        %s1493 = sld [smem:[#allocation3 + $0x1e]]
        %v1494 = vstv %s1493
        %v1495 = vmul.f32 %v1494, %v1361
        %s1496 = sld [smem:[#allocation3 + $0x9e]]
        %v1497 = vstv %s1496
        %v1498 = vmul.f32 %v1497, %v1366
        %v1499 = vadd.f32 %v1495, %v1498
        %v1501 = vperm.slane %v1499, 0
        %v1502 = vperm.slane %v1499, 1
        %v1503 = vperm.slane %v1499, 2
        %1504 = vrot.lane.b32.xlu0 %v1501, 113
        %v1505 = vpop.permute.xlu0 %1504
        %1506 = vrot.lane.b32.xlu0 %v1502, 113
        %v1507 = vpop.permute.xlu0 %1506
        %1508 = vrot.lane.b32.xlu0 %v1503, 113
        %v1509 = vpop.permute.xlu0 %1508
        %vm1510 = vcmask 924672
        %v1511 = vsel %vm1510, %v1505, %v1507
        %v1512 = vsel %vm1510, %v1507, %v1509
        %v1515 = vsel %vm682, %v1511, 0.0
        %v1516 = vsel %vm683, %v1512, 0.0
        %v1517 = vadd.f32 %v1491, %v1515
        %v1518 = vadd.f32 %v1492, %v1516
        %s1519 = sld [smem:[#allocation3 + $0x1f]]
        %v1520 = vstv %s1519
        %v1521 = vmul.f32 %v1520, %v1361
        %s1522 = sld [smem:[#allocation3 + $0x9f]]
        %v1523 = vstv %s1522
        %v1524 = vmul.f32 %v1523, %v1366
        %v1525 = vadd.f32 %v1521, %v1524
        %v1527 = vperm.slane %v1525, 0
        %v1528 = vperm.slane %v1525, 1
        %v1529 = vperm.slane %v1525, 2
        %1530 = vrot.lane.b32.xlu0 %v1527, 112
        %v1531 = vpop.permute.xlu0 %1530
        %1532 = vrot.lane.b32.xlu0 %v1528, 112
        %v1533 = vpop.permute.xlu0 %1532
        %1534 = vrot.lane.b32.xlu0 %v1529, 112
        %v1535 = vpop.permute.xlu0 %1534
        %vm1536 = vcmask 916480
        %v1537 = vsel %vm1536, %v1531, %v1533
        %v1538 = vsel %vm1536, %v1533, %v1535
        %v1541 = vsel %vm688, %v1537, 0.0
        %v1542 = vsel %vm689, %v1538, 0.0
        %v1543 = vadd.f32 %v1517, %v1541
        %v1544 = vadd.f32 %v1518, %v1542
        %s1545 = sld [smem:[#allocation3 + $0x20]]
        %v1546 = vstv %s1545
        %v1547 = vmul.f32 %v1546, %v1361
        %s1548 = sld [smem:[#allocation3 + $0xa0]]
        %v1549 = vstv %s1548
        %v1550 = vmul.f32 %v1549, %v1366
        %v1551 = vadd.f32 %v1547, %v1550
        %v1553 = vperm.slane %v1551, 0
        %v1554 = vperm.slane %v1551, 1
        %v1555 = vperm.slane %v1551, 2
        %1556 = vrot.lane.b32.xlu0 %v1553, 111
        %v1557 = vpop.permute.xlu0 %1556
        %1558 = vrot.lane.b32.xlu0 %v1554, 111
        %v1559 = vpop.permute.xlu0 %1558
        %1560 = vrot.lane.b32.xlu0 %v1555, 111
        %v1561 = vpop.permute.xlu0 %1560
        %vm1562 = vcmask 908288
        %v1563 = vsel %vm1562, %v1557, %v1559
        %v1564 = vsel %vm1562, %v1559, %v1561
        %v1567 = vsel %vm696, %v1563, 0.0
        %v1568 = vsel %vm697, %v1564, 0.0
        %v1569 = vadd.f32 %v1543, %v1567
        %v1570 = vadd.f32 %v1544, %v1568
        %s1571 = sld [smem:[#allocation3 + $0x21]]
        %v1572 = vstv %s1571
        %v1573 = vmul.f32 %v1572, %v1361
        %s1574 = sld [smem:[#allocation3 + $0xa1]]
        %v1575 = vstv %s1574
        %v1576 = vmul.f32 %v1575, %v1366
        %v1577 = vadd.f32 %v1573, %v1576
        %v1579 = vperm.slane %v1577, 0
        %v1580 = vperm.slane %v1577, 1
        %v1581 = vperm.slane %v1577, 2
        %1582 = vrot.lane.b32.xlu0 %v1579, 110
        %v1583 = vpop.permute.xlu0 %1582
        %1584 = vrot.lane.b32.xlu0 %v1580, 110
        %v1585 = vpop.permute.xlu0 %1584
        %1586 = vrot.lane.b32.xlu0 %v1581, 110
        %v1587 = vpop.permute.xlu0 %1586
        %vm1588 = vcmask 900096
        %v1589 = vsel %vm1588, %v1583, %v1585
        %v1590 = vsel %vm1588, %v1585, %v1587
        %v1593 = vsel %vm704, %v1589, 0.0
        %v1594 = vsel %vm705, %v1590, 0.0
        %v1595 = vadd.f32 %v1569, %v1593
        %v1596 = vadd.f32 %v1570, %v1594
        %s1597 = sld [smem:[#allocation3 + $0x22]]
        %v1598 = vstv %s1597
        %v1599 = vmul.f32 %v1598, %v1361
        %s1600 = sld [smem:[#allocation3 + $0xa2]]
        %v1601 = vstv %s1600
        %v1602 = vmul.f32 %v1601, %v1366
        %v1603 = vadd.f32 %v1599, %v1602
        %v1605 = vperm.slane %v1603, 0
        %v1606 = vperm.slane %v1603, 1
        %v1607 = vperm.slane %v1603, 2
        %1608 = vrot.lane.b32.xlu0 %v1605, 109
        %v1609 = vpop.permute.xlu0 %1608
        %1610 = vrot.lane.b32.xlu0 %v1606, 109
        %v1611 = vpop.permute.xlu0 %1610
        %1612 = vrot.lane.b32.xlu0 %v1607, 109
        %v1613 = vpop.permute.xlu0 %1612
        %vm1614 = vcmask 891904
        %v1615 = vsel %vm1614, %v1609, %v1611
        %v1616 = vsel %vm1614, %v1611, %v1613
        %v1619 = vsel %vm712, %v1615, 0.0
        %v1620 = vsel %vm713, %v1616, 0.0
        %v1621 = vadd.f32 %v1595, %v1619
        %v1622 = vadd.f32 %v1596, %v1620
        %s1623 = sld [smem:[#allocation3 + $0x23]]
        %v1624 = vstv %s1623
        %v1625 = vmul.f32 %v1624, %v1361
        %s1626 = sld [smem:[#allocation3 + $0xa3]]
        %v1627 = vstv %s1626
        %v1628 = vmul.f32 %v1627, %v1366
        %v1629 = vadd.f32 %v1625, %v1628
        %v1631 = vperm.slane %v1629, 0
        %v1632 = vperm.slane %v1629, 1
        %v1633 = vperm.slane %v1629, 2
        %1634 = vrot.lane.b32.xlu0 %v1631, 99
        %v1635 = vpop.permute.xlu0 %1634
        %1636 = vrot.lane.b32.xlu0 %v1632, 99
        %v1637 = vpop.permute.xlu0 %1636
        %1638 = vrot.lane.b32.xlu0 %v1633, 99
        %v1639 = vpop.permute.xlu0 %1638
        %vm1640 = vcmask 809984
        %v1641 = vsel %vm1640, %v1635, %v1637
        %v1642 = vsel %vm1640, %v1637, %v1639
        %v1645 = vsel %vm666, %v1641, 0.0
        %v1646 = vsel %vm667, %v1642, 0.0
        %v1647 = vadd.f32 %v1621, %v1645
        %v1648 = vadd.f32 %v1622, %v1646
        %s1649 = sld [smem:[#allocation3 + $0x24]]
        %v1650 = vstv %s1649
        %v1651 = vmul.f32 %v1650, %v1361
        %s1652 = sld [smem:[#allocation3 + $0xa4]]
        %v1653 = vstv %s1652
        %v1654 = vmul.f32 %v1653, %v1366
        %v1655 = vadd.f32 %v1651, %v1654
        %v1657 = vperm.slane %v1655, 0
        %v1658 = vperm.slane %v1655, 1
        %v1659 = vperm.slane %v1655, 2
        %1660 = vrot.lane.b32.xlu0 %v1657, 98
        %v1661 = vpop.permute.xlu0 %1660
        %1662 = vrot.lane.b32.xlu0 %v1658, 98
        %v1663 = vpop.permute.xlu0 %1662
        %1664 = vrot.lane.b32.xlu0 %v1659, 98
        %v1665 = vpop.permute.xlu0 %1664
        %vm1666 = vcmask 801792
        %v1667 = vsel %vm1666, %v1661, %v1663
        %v1668 = vsel %vm1666, %v1663, %v1665
        %v1671 = vsel %vm674, %v1667, 0.0
        %v1672 = vsel %vm675, %v1668, 0.0
        %v1673 = vadd.f32 %v1647, %v1671
        %v1674 = vadd.f32 %v1648, %v1672
        %s1675 = sld [smem:[#allocation3 + $0x25]]
        %v1676 = vstv %s1675
        %v1677 = vmul.f32 %v1676, %v1361
        %s1678 = sld [smem:[#allocation3 + $0xa5]]
        %v1679 = vstv %s1678
        %v1680 = vmul.f32 %v1679, %v1366
        %v1681 = vadd.f32 %v1677, %v1680
        %v1683 = vperm.slane %v1681, 0
        %v1684 = vperm.slane %v1681, 1
        %v1685 = vperm.slane %v1681, 2
        %1686 = vrot.lane.b32.xlu0 %v1683, 97
        %v1687 = vpop.permute.xlu0 %1686
        %1688 = vrot.lane.b32.xlu0 %v1684, 97
        %v1689 = vpop.permute.xlu0 %1688
        %1690 = vrot.lane.b32.xlu0 %v1685, 97
        %v1691 = vpop.permute.xlu0 %1690
        %vm1692 = vcmask 793600
        %v1693 = vsel %vm1692, %v1687, %v1689
        %v1694 = vsel %vm1692, %v1689, %v1691
        %v1697 = vsel %vm682, %v1693, 0.0
        %v1698 = vsel %vm683, %v1694, 0.0
        %v1699 = vadd.f32 %v1673, %v1697
        %v1700 = vadd.f32 %v1674, %v1698
        %s1701 = sld [smem:[#allocation3 + $0x26]]
        %v1702 = vstv %s1701
        %v1703 = vmul.f32 %v1702, %v1361
        %s1704 = sld [smem:[#allocation3 + $0xa6]]
        %v1705 = vstv %s1704
        %v1706 = vmul.f32 %v1705, %v1366
        %v1707 = vadd.f32 %v1703, %v1706
        %v1709 = vperm.slane %v1707, 0
        %v1710 = vperm.slane %v1707, 1
        %v1711 = vperm.slane %v1707, 2
        %1712 = vrot.lane.b32.xlu0 %v1709, 96
        %v1713 = vpop.permute.xlu0 %1712
        %1714 = vrot.lane.b32.xlu0 %v1710, 96
        %v1715 = vpop.permute.xlu0 %1714
        %1716 = vrot.lane.b32.xlu0 %v1711, 96
        %v1717 = vpop.permute.xlu0 %1716
        %vm1718 = vcmask 785408
        %v1719 = vsel %vm1718, %v1713, %v1715
        %v1720 = vsel %vm1718, %v1715, %v1717
        %v1723 = vsel %vm688, %v1719, 0.0
        %v1724 = vsel %vm689, %v1720, 0.0
        %v1725 = vadd.f32 %v1699, %v1723
        %v1726 = vadd.f32 %v1700, %v1724
        %s1727 = sld [smem:[#allocation3 + $0x27]]
        %v1728 = vstv %s1727
        %v1729 = vmul.f32 %v1728, %v1361
        %s1730 = sld [smem:[#allocation3 + $0xa7]]
        %v1731 = vstv %s1730
        %v1732 = vmul.f32 %v1731, %v1366
        %v1733 = vadd.f32 %v1729, %v1732
        %v1735 = vperm.slane %v1733, 0
        %v1736 = vperm.slane %v1733, 1
        %v1737 = vperm.slane %v1733, 2
        %1738 = vrot.lane.b32.xlu0 %v1735, 95
        %v1739 = vpop.permute.xlu0 %1738
        %1740 = vrot.lane.b32.xlu0 %v1736, 95
        %v1741 = vpop.permute.xlu0 %1740
        %1742 = vrot.lane.b32.xlu0 %v1737, 95
        %v1743 = vpop.permute.xlu0 %1742
        %vm1744 = vcmask 777216
        %v1745 = vsel %vm1744, %v1739, %v1741
        %v1746 = vsel %vm1744, %v1741, %v1743
        %v1749 = vsel %vm696, %v1745, 0.0
        %v1750 = vsel %vm697, %v1746, 0.0
        %v1751 = vadd.f32 %v1725, %v1749
        %v1752 = vadd.f32 %v1726, %v1750
        %s1753 = sld [smem:[#allocation3 + $0x28]]
        %v1754 = vstv %s1753
        %v1755 = vmul.f32 %v1754, %v1361
        %s1756 = sld [smem:[#allocation3 + $0xa8]]
        %v1757 = vstv %s1756
        %v1758 = vmul.f32 %v1757, %v1366
        %v1759 = vadd.f32 %v1755, %v1758
        %v1761 = vperm.slane %v1759, 0
        %v1762 = vperm.slane %v1759, 1
        %v1763 = vperm.slane %v1759, 2
        %1764 = vrot.lane.b32.xlu0 %v1761, 94
        %v1765 = vpop.permute.xlu0 %1764
        %1766 = vrot.lane.b32.xlu0 %v1762, 94
        %v1767 = vpop.permute.xlu0 %1766
        %1768 = vrot.lane.b32.xlu0 %v1763, 94
        %v1769 = vpop.permute.xlu0 %1768
        %vm1770 = vcmask 769024
        %v1771 = vsel %vm1770, %v1765, %v1767
        %v1772 = vsel %vm1770, %v1767, %v1769
        %v1775 = vsel %vm704, %v1771, 0.0
        %v1776 = vsel %vm705, %v1772, 0.0
        %v1777 = vadd.f32 %v1751, %v1775
        %v1778 = vadd.f32 %v1752, %v1776
        %s1779 = sld [smem:[#allocation3 + $0x29]]
        %v1780 = vstv %s1779
        %v1781 = vmul.f32 %v1780, %v1361
        %s1782 = sld [smem:[#allocation3 + $0xa9]]
        %v1783 = vstv %s1782
        %v1784 = vmul.f32 %v1783, %v1366
        %v1785 = vadd.f32 %v1781, %v1784
        %v1787 = vperm.slane %v1785, 0
        %v1788 = vperm.slane %v1785, 1
        %v1789 = vperm.slane %v1785, 2
        %1790 = vrot.lane.b32.xlu0 %v1787, 93
        %v1791 = vpop.permute.xlu0 %1790
        %1792 = vrot.lane.b32.xlu0 %v1788, 93
        %v1793 = vpop.permute.xlu0 %1792
        %1794 = vrot.lane.b32.xlu0 %v1789, 93
        %v1795 = vpop.permute.xlu0 %1794
        %vm1796 = vcmask 760832
        %v1797 = vsel %vm1796, %v1791, %v1793
        %v1798 = vsel %vm1796, %v1793, %v1795
        %v1801 = vsel %vm712, %v1797, 0.0
        %v1802 = vsel %vm713, %v1798, 0.0
        %v1803 = vadd.f32 %v1777, %v1801
        %v1804 = vadd.f32 %v1778, %v1802
        %s1805 = sld [smem:[#allocation3 + $0x2a]]
        %v1806 = vstv %s1805
        %v1807 = vmul.f32 %v1806, %v1361
        %s1808 = sld [smem:[#allocation3 + $0xaa]]
        %v1809 = vstv %s1808
        %v1810 = vmul.f32 %v1809, %v1366
        %v1811 = vadd.f32 %v1807, %v1810
        %v1813 = vperm.slane %v1811, 0
        %v1814 = vperm.slane %v1811, 1
        %v1815 = vperm.slane %v1811, 2
        %1816 = vrot.lane.b32.xlu0 %v1813, 83
        %v1817 = vpop.permute.xlu0 %1816
        %1818 = vrot.lane.b32.xlu0 %v1814, 83
        %v1819 = vpop.permute.xlu0 %1818
        %1820 = vrot.lane.b32.xlu0 %v1815, 83
        %v1821 = vpop.permute.xlu0 %1820
        %vm1822 = vcmask 678912
        %v1823 = vsel %vm1822, %v1817, %v1819
        %v1824 = vsel %vm1822, %v1819, %v1821
        %v1827 = vsel %vm666, %v1823, 0.0
        %v1828 = vsel %vm667, %v1824, 0.0
        %v1829 = vadd.f32 %v1803, %v1827
        %v1830 = vadd.f32 %v1804, %v1828
        %s1831 = sld [smem:[#allocation3 + $0x2b]]
        %v1832 = vstv %s1831
        %v1833 = vmul.f32 %v1832, %v1361
        %s1834 = sld [smem:[#allocation3 + $0xab]]
        %v1835 = vstv %s1834
        %v1836 = vmul.f32 %v1835, %v1366
        %v1837 = vadd.f32 %v1833, %v1836
        %v1839 = vperm.slane %v1837, 0
        %v1840 = vperm.slane %v1837, 1
        %v1841 = vperm.slane %v1837, 2
        %1842 = vrot.lane.b32.xlu0 %v1839, 82
        %v1843 = vpop.permute.xlu0 %1842
        %1844 = vrot.lane.b32.xlu0 %v1840, 82
        %v1845 = vpop.permute.xlu0 %1844
        %1846 = vrot.lane.b32.xlu0 %v1841, 82
        %v1847 = vpop.permute.xlu0 %1846
        %vm1848 = vcmask 670720
        %v1849 = vsel %vm1848, %v1843, %v1845
        %v1850 = vsel %vm1848, %v1845, %v1847
        %v1853 = vsel %vm674, %v1849, 0.0
        %v1854 = vsel %vm675, %v1850, 0.0
        %v1855 = vadd.f32 %v1829, %v1853
        %v1856 = vadd.f32 %v1830, %v1854
        %s1857 = sld [smem:[#allocation3 + $0x2c]]
        %v1858 = vstv %s1857
        %v1859 = vmul.f32 %v1858, %v1361
        %s1860 = sld [smem:[#allocation3 + $0xac]]
        %v1861 = vstv %s1860
        %v1862 = vmul.f32 %v1861, %v1366
        %v1863 = vadd.f32 %v1859, %v1862
        %v1865 = vperm.slane %v1863, 0
        %v1866 = vperm.slane %v1863, 1
        %v1867 = vperm.slane %v1863, 2
        %1868 = vrot.lane.b32.xlu0 %v1865, 81
        %v1869 = vpop.permute.xlu0 %1868
        %1870 = vrot.lane.b32.xlu0 %v1866, 81
        %v1871 = vpop.permute.xlu0 %1870
        %1872 = vrot.lane.b32.xlu0 %v1867, 81
        %v1873 = vpop.permute.xlu0 %1872
        %vm1874 = vcmask 662528
        %v1875 = vsel %vm1874, %v1869, %v1871
        %v1876 = vsel %vm1874, %v1871, %v1873
        %v1879 = vsel %vm682, %v1875, 0.0
        %v1880 = vsel %vm683, %v1876, 0.0
        %v1881 = vadd.f32 %v1855, %v1879
        %v1882 = vadd.f32 %v1856, %v1880
        %s1883 = sld [smem:[#allocation3 + $0x2d]]
        %v1884 = vstv %s1883
        %v1885 = vmul.f32 %v1884, %v1361
        %s1886 = sld [smem:[#allocation3 + $0xad]]
        %v1887 = vstv %s1886
        %v1888 = vmul.f32 %v1887, %v1366
        %v1889 = vadd.f32 %v1885, %v1888
        %v1891 = vperm.slane %v1889, 0
        %v1892 = vperm.slane %v1889, 1
        %v1893 = vperm.slane %v1889, 2
        %1894 = vrot.lane.b32.xlu0 %v1891, 80
        %v1895 = vpop.permute.xlu0 %1894
        %1896 = vrot.lane.b32.xlu0 %v1892, 80
        %v1897 = vpop.permute.xlu0 %1896
        %1898 = vrot.lane.b32.xlu0 %v1893, 80
        %v1899 = vpop.permute.xlu0 %1898
        %vm1900 = vcmask 654336
        %v1901 = vsel %vm1900, %v1895, %v1897
        %v1902 = vsel %vm1900, %v1897, %v1899
        %v1905 = vsel %vm688, %v1901, 0.0
        %v1906 = vsel %vm689, %v1902, 0.0
        %v1907 = vadd.f32 %v1881, %v1905
        %v1908 = vadd.f32 %v1882, %v1906
        %s1909 = sld [smem:[#allocation3 + $0x2e]]
        %v1910 = vstv %s1909
        %v1911 = vmul.f32 %v1910, %v1361
        %s1912 = sld [smem:[#allocation3 + $0xae]]
        %v1913 = vstv %s1912
        %v1914 = vmul.f32 %v1913, %v1366
        %v1915 = vadd.f32 %v1911, %v1914
        %v1917 = vperm.slane %v1915, 0
        %v1918 = vperm.slane %v1915, 1
        %v1919 = vperm.slane %v1915, 2
        %1920 = vrot.lane.b32.xlu0 %v1917, 79
        %v1921 = vpop.permute.xlu0 %1920
        %1922 = vrot.lane.b32.xlu0 %v1918, 79
        %v1923 = vpop.permute.xlu0 %1922
        %1924 = vrot.lane.b32.xlu0 %v1919, 79
        %v1925 = vpop.permute.xlu0 %1924
        %vm1926 = vcmask 646144
        %v1927 = vsel %vm1926, %v1921, %v1923
        %v1928 = vsel %vm1926, %v1923, %v1925
        %v1931 = vsel %vm696, %v1927, 0.0
        %v1932 = vsel %vm697, %v1928, 0.0
        %v1933 = vadd.f32 %v1907, %v1931
        %v1934 = vadd.f32 %v1908, %v1932
        %s1935 = sld [smem:[#allocation3 + $0x2f]]
        %v1936 = vstv %s1935
        %v1937 = vmul.f32 %v1936, %v1361
        %s1938 = sld [smem:[#allocation3 + $0xaf]]
        %v1939 = vstv %s1938
        %v1940 = vmul.f32 %v1939, %v1366
        %v1941 = vadd.f32 %v1937, %v1940
        %v1943 = vperm.slane %v1941, 0
        %v1944 = vperm.slane %v1941, 1
        %v1945 = vperm.slane %v1941, 2
        %1946 = vrot.lane.b32.xlu0 %v1943, 78
        %v1947 = vpop.permute.xlu0 %1946
        %1948 = vrot.lane.b32.xlu0 %v1944, 78
        %v1949 = vpop.permute.xlu0 %1948
        %1950 = vrot.lane.b32.xlu0 %v1945, 78
        %v1951 = vpop.permute.xlu0 %1950
        %vm1952 = vcmask 637952
        %v1953 = vsel %vm1952, %v1947, %v1949
        %v1954 = vsel %vm1952, %v1949, %v1951
        %v1957 = vsel %vm704, %v1953, 0.0
        %v1958 = vsel %vm705, %v1954, 0.0
        %v1959 = vadd.f32 %v1933, %v1957
        %v1960 = vadd.f32 %v1934, %v1958
        %s1961 = sld [smem:[#allocation3 + $0x30]]
        %v1962 = vstv %s1961
        %v1963 = vmul.f32 %v1962, %v1361
        %s1964 = sld [smem:[#allocation3 + $0xb0]]
        %v1965 = vstv %s1964
        %v1966 = vmul.f32 %v1965, %v1366
        %v1967 = vadd.f32 %v1963, %v1966
        %v1969 = vperm.slane %v1967, 0
        %v1970 = vperm.slane %v1967, 1
        %v1971 = vperm.slane %v1967, 2
        %1972 = vrot.lane.b32.xlu0 %v1969, 77
        %v1973 = vpop.permute.xlu0 %1972
        %1974 = vrot.lane.b32.xlu0 %v1970, 77
        %v1975 = vpop.permute.xlu0 %1974
        %1976 = vrot.lane.b32.xlu0 %v1971, 77
        %v1977 = vpop.permute.xlu0 %1976
        %vm1978 = vcmask 629760
        %v1979 = vsel %vm1978, %v1973, %v1975
        %v1980 = vsel %vm1978, %v1975, %v1977
        %v1983 = vsel %vm712, %v1979, 0.0
        %v1984 = vsel %vm713, %v1980, 0.0
        %v1985 = vadd.f32 %v1959, %v1983
        %v1986 = vadd.f32 %v1960, %v1984
        %s1987 = sld [smem:[#allocation5 + $0x1]]
        %v1988 = vstv %s1987
        %v1989 = vadd.f32 %v1985, %v1988
        %v1990 = vadd.f32 %v1986, %v1988
        %v1991 = vadd.f32 %v1989, 3.0
        %v1992 = vadd.f32 %v1990, 3.0
        %v1993 = vmax.f32 %v1991, 0.0
        %v1994 = vmax.f32 %v1992, 0.0
        %v1995 = vmin.f32 %v1993, 6.0
        %v1996 = vmin.f32 %v1994, 6.0
        %v1997 = vmul.f32 %v1995, 0.16666667
        %v1998 = vmul.f32 %v1996, 0.16666667
        %v1999 = vperm.slane %v1997, 0
        %v2000 = vperm.slane %v1998, 0
        %v2001 = vmul.f32 %v513, %v1999
        %v2002 = vmul.f32 %v514, %v2000
        %v2003 = vmul.f32 %v515, %v1999
        %v2004 = vmul.f32 %v516, %v2000
        %v2005 = vmul.f32 %v517, %v1999
        %v2006 = vmul.f32 %v518, %v2000
        %v2007 = vmul.f32 %v519, %v1999
        %v2008 = vmul.f32 %v520, %v2000
        %v2009 = vpack.c.bf16 %v2003, %v2001
        %v2010 = vpack.c.bf16 %v2004, %v2002
        %v2011 = vpack.c.bf16 %v2007, %v2005
        %v2012 = vpack.c.bf16 %v2008, %v2006
        %v2013 = vld [vmem:[%s6] sm:$0xf]
        %v2014 = vld [vmem:[%s6 + $0x4] sm:$0xf]
        %v2015 = vld [vmem:[%s6 + $0x8] sm:$0xf]
        %v2016 = vld [vmem:[%s6 + $0xc] sm:$0xf]
        %v2017 = vld [vmem:[%s6 + $0x10] sm:$0xf]
        %v2018 = vld [vmem:[%s6 + $0x14] sm:$0xf]
        %v2019 = vld [vmem:[%s6 + $0x18] sm:$0xf]
        %v2020 = vld [vmem:[%s6 + $0x1c] sm:$0xf]
        %v2021 = vld [vmem:[%s6 + $0x20] sm:$0xf]
        %v2022 = vld [vmem:[%s6 + $0x24] sm:$0xf]
        %v2023 = vld [vmem:[%s6 + $0x28] sm:$0xf]
        %v2024 = vld [vmem:[%s6 + $0x2c] sm:$0xf]
        %v2025 = vld [vmem:[%s6 + $0x30] sm:$0xf]
        %v2026 = vld [vmem:[%s6 + $0x34] sm:$0xf]
        %v2027 = vld [vmem:[%s6 + $0x38] sm:$0xf]
        %v2028 = vld [vmem:[%s6 + $0x3c] sm:$0xf]
        %v2029 = vld [vmem:[%s7] sm:$0xff]
        %v2030 = vld [vmem:[%s7 + $0x8] sm:$0xff]
        %v2031 = vld [vmem:[%s7 + $0x10] sm:$0xff]
        %v2032 = vld [vmem:[%s7 + $0x18] sm:$0xff]
        %v2033 = vld [vmem:[%s7 + $0x20] sm:$0xff]
        %v2034 = vld [vmem:[%s7 + $0x28] sm:$0xff]
        %v2035 = vld [vmem:[%s7 + $0x30] sm:$0xff]
        %v2036 = vld [vmem:[%s7 + $0x38] sm:$0xff]
        %v2037 = vld [vmem:[%s7 + $0x40] sm:$0xff]
        %v2038 = vld [vmem:[%s7 + $0x48] sm:$0xff]
        %v2039 = vld [vmem:[%s7 + $0x50] sm:$0xff]
        %v2040 = vld [vmem:[%s7 + $0x58] sm:$0xff]
        %v2041 = vld [vmem:[%s7 + $0x60] sm:$0xff]
        %v2042 = vld [vmem:[%s7 + $0x68] sm:$0xff]
        %v2043 = vld [vmem:[%s7 + $0x70] sm:$0xff]
        %v2044 = vld [vmem:[%s7 + $0x78] sm:$0xff]
        %2046 = vset.pattern.permute.xlu0 0
        %2047 = vperm.xlu0 %2046, %v2029
        %v2048 = vpop.permute.xlu0 %2047
        %2051 = vset.pattern.permute.xlu0 0
        %2052 = vperm.xlu0 %2051, %v2030
        %v2053 = vpop.permute.xlu0 %2052
        %2056 = vset.pattern.permute.xlu0 0
        %2057 = vperm.xlu0 %2056, %v2031
        %v2058 = vpop.permute.xlu0 %2057
        %2061 = vset.pattern.permute.xlu0 0
        %2062 = vperm.xlu0 %2061, %v2032
        %v2063 = vpop.permute.xlu0 %2062
        %2066 = vset.pattern.permute.xlu0 0
        %2067 = vperm.xlu0 %2066, %v2033
        %v2068 = vpop.permute.xlu0 %2067
        %2071 = vset.pattern.permute.xlu0 0
        %2072 = vperm.xlu0 %2071, %v2034
        %v2073 = vpop.permute.xlu0 %2072
        %2076 = vset.pattern.permute.xlu0 0
        %2077 = vperm.xlu0 %2076, %v2035
        %v2078 = vpop.permute.xlu0 %2077
        %2081 = vset.pattern.permute.xlu0 0
        %2082 = vperm.xlu0 %2081, %v2036
        %v2083 = vpop.permute.xlu0 %2082
        %2086 = vset.pattern.permute.xlu0 0
        %2087 = vperm.xlu0 %2086, %v2037
        %v2088 = vpop.permute.xlu0 %2087
        %2091 = vset.pattern.permute.xlu0 0
        %2092 = vperm.xlu0 %2091, %v2038
        %v2093 = vpop.permute.xlu0 %2092
        %2096 = vset.pattern.permute.xlu0 0
        %2097 = vperm.xlu0 %2096, %v2039
        %v2098 = vpop.permute.xlu0 %2097
        %2101 = vset.pattern.permute.xlu0 0
        %2102 = vperm.xlu0 %2101, %v2040
        %v2103 = vpop.permute.xlu0 %2102
        %2106 = vset.pattern.permute.xlu0 0
        %2107 = vperm.xlu0 %2106, %v2041
        %v2108 = vpop.permute.xlu0 %2107
        %2111 = vset.pattern.permute.xlu0 0
        %2112 = vperm.xlu0 %2111, %v2042
        %v2113 = vpop.permute.xlu0 %2112
        %2116 = vset.pattern.permute.xlu0 0
        %2117 = vperm.xlu0 %2116, %v2043
        %v2118 = vpop.permute.xlu0 %2117
        %2121 = vset.pattern.permute.xlu0 0
        %2122 = vperm.xlu0 %2121, %v2044
        %v2123 = vpop.permute.xlu0 %2122
        %v2141 = vunpack.c.l.b16 %v2013
        %v2142 = vunpack.c.l.b16 %v2014
        %v2143 = vunpack.c.l.b16 %v2015
        %v2144 = vunpack.c.l.b16 %v2016
        %v2145 = vunpack.c.l.b16 %v2017
        %v2146 = vunpack.c.l.b16 %v2018
        %v2147 = vunpack.c.l.b16 %v2019
        %v2148 = vunpack.c.l.b16 %v2020
        %v2149 = vunpack.c.l.b16 %v2021
        %v2150 = vunpack.c.l.b16 %v2022
        %v2151 = vunpack.c.l.b16 %v2023
        %v2152 = vunpack.c.l.b16 %v2024
        %v2153 = vunpack.c.l.b16 %v2025
        %v2154 = vunpack.c.l.b16 %v2026
        %v2155 = vunpack.c.l.b16 %v2027
        %v2156 = vunpack.c.l.b16 %v2028
        %v2157 = vpack.c.b16 %v2142, %v2141
        %v2158 = vpack.c.b16 %v2144, %v2143
        %v2159 = vpack.c.b16 %v2146, %v2145
        %v2160 = vpack.c.b16 %v2148, %v2147
        %v2161 = vpack.c.b16 %v2150, %v2149
        %v2162 = vpack.c.b16 %v2152, %v2151
        %v2163 = vpack.c.b16 %v2154, %v2153
        %v2164 = vpack.c.b16 %v2156, %v2155
        %v2166 = vsel %vm994, %v2157, 0
        %v2169 = vsel %vm994, %v2158, 0
        %v2172 = vsel %vm994, %v2159, 0
        %v2175 = vsel %vm994, %v2160, 0
        %v2178 = vsel %vm994, %v2161, 0
        %v2181 = vsel %vm994, %v2162, 0
        %v2184 = vsel %vm994, %v2163, 0
        %v2187 = vsel %vm994, %v2164, 0
        %2189 = vmatpush.bf16.msra.mxu0 0
        %2190 = vmatpush.bf16.msra.mxu0 0
        %2191 = vmatpush.bf16.msra.mxu0 0
        %2192 = vmatpush.bf16.msra.mxu0 0
        %2193 = vmatpush.bf16.msra.mxu0 0
        %2194 = vmatpush.bf16.msra.mxu0 0
        %2195 = vmatpush.bf16.msra.mxu0 %v2011
        %2196 = vmatpush.bf16.msra.mxu0 %v2009
        %2197 = vmatmul.bf16.gmra.mxu0 %v2166
        %v2198 = vpop.f32.mrf.mxu0
        %v2199 = vadd.f32 %v2048, %v2198
        %v2200 = vpop.f32.mrf.mxu0
        %v2201 = vadd.f32 %v2053, %v2200
        %2202 = vmatmul.bf16.gmra.mxu0 %v2169
        %v2203 = vpop.f32.mrf.mxu0
        %v2204 = vadd.f32 %v2058, %v2203
        %v2205 = vpop.f32.mrf.mxu0
        %v2206 = vadd.f32 %v2063, %v2205
        %2207 = vmatmul.bf16.gmra.mxu0 %v2172
        %v2208 = vpop.f32.mrf.mxu0
        %v2209 = vadd.f32 %v2068, %v2208
        %v2210 = vpop.f32.mrf.mxu0
        %v2211 = vadd.f32 %v2073, %v2210
        %2212 = vmatmul.bf16.gmra.mxu0 %v2175
        %v2213 = vpop.f32.mrf.mxu0
        %v2214 = vadd.f32 %v2078, %v2213
        %v2215 = vpop.f32.mrf.mxu0
        %v2216 = vadd.f32 %v2083, %v2215
        %2217 = vmatmul.bf16.gmra.mxu0 %v2178
        %v2218 = vpop.f32.mrf.mxu0
        %v2219 = vadd.f32 %v2088, %v2218
        %v2220 = vpop.f32.mrf.mxu0
        %v2221 = vadd.f32 %v2093, %v2220
        %2222 = vmatmul.bf16.gmra.mxu0 %v2181
        %v2223 = vpop.f32.mrf.mxu0
        %v2224 = vadd.f32 %v2098, %v2223
        %v2225 = vpop.f32.mrf.mxu0
        %v2226 = vadd.f32 %v2103, %v2225
        %2227 = vmatmul.bf16.gmra.mxu0 %v2184
        %v2228 = vpop.f32.mrf.mxu0
        %v2229 = vadd.f32 %v2108, %v2228
        %v2230 = vpop.f32.mrf.mxu0
        %v2231 = vadd.f32 %v2113, %v2230
        %2232 = vmatmul.bf16.gmra.mxu0 %v2187
        %v2233 = vpop.f32.mrf.mxu0
        %v2234 = vadd.f32 %v2118, %v2233
        %v2235 = vpop.f32.mrf.mxu0
        %v2236 = vadd.f32 %v2123, %v2235
        %2237 = vdwg.mxu0
        %2238 = vmatpush.bf16.msra.mxu0 0
        %2239 = vmatpush.bf16.msra.mxu0 0
        %2240 = vmatpush.bf16.msra.mxu0 0
        %2241 = vmatpush.bf16.msra.mxu0 0
        %2242 = vmatpush.bf16.msra.mxu0 0
        %2243 = vmatpush.bf16.msra.mxu0 0
        %2244 = vmatpush.bf16.msra.mxu0 %v2012
        %2245 = vmatpush.bf16.msra.mxu0 %v2010
        %2246 = vmatmul.bf16.gmra.mxu0 %v2166
        %v2247 = vpop.f32.mrf.mxu0
        %v2248 = vadd.f32 %v2048, %v2247
        %v2249 = vpop.f32.mrf.mxu0
        %v2250 = vadd.f32 %v2053, %v2249
        %2251 = vmatmul.bf16.gmra.mxu0 %v2169
        %v2252 = vpop.f32.mrf.mxu0
        %v2253 = vadd.f32 %v2058, %v2252
        %v2254 = vpop.f32.mrf.mxu0
        %v2255 = vadd.f32 %v2063, %v2254
        %2256 = vmatmul.bf16.gmra.mxu0 %v2172
        %v2257 = vpop.f32.mrf.mxu0
        %v2258 = vadd.f32 %v2068, %v2257
        %v2259 = vpop.f32.mrf.mxu0
        %v2260 = vadd.f32 %v2073, %v2259
        %2261 = vmatmul.bf16.gmra.mxu0 %v2175
        %v2262 = vpop.f32.mrf.mxu0
        %v2263 = vadd.f32 %v2078, %v2262
        %v2264 = vpop.f32.mrf.mxu0
        %v2265 = vadd.f32 %v2083, %v2264
        %2266 = vmatmul.bf16.gmra.mxu0 %v2178
        %v2267 = vpop.f32.mrf.mxu0
        %v2268 = vadd.f32 %v2088, %v2267
        %v2269 = vpop.f32.mrf.mxu0
        %v2270 = vadd.f32 %v2093, %v2269
        %2271 = vmatmul.bf16.gmra.mxu0 %v2181
        %v2272 = vpop.f32.mrf.mxu0
        %v2273 = vadd.f32 %v2098, %v2272
        %v2274 = vpop.f32.mrf.mxu0
        %v2275 = vadd.f32 %v2103, %v2274
        %2276 = vmatmul.bf16.gmra.mxu0 %v2184
        %v2277 = vpop.f32.mrf.mxu0
        %v2278 = vadd.f32 %v2108, %v2277
        %v2279 = vpop.f32.mrf.mxu0
        %v2280 = vadd.f32 %v2113, %v2279
        %2281 = vmatmul.bf16.gmra.mxu0 %v2187
        %v2282 = vpop.f32.mrf.mxu0
        %v2283 = vadd.f32 %v2118, %v2282
        %v2284 = vpop.f32.mrf.mxu0
        %v2285 = vadd.f32 %v2123, %v2284
        %2286 = vdwg.mxu0
        %2287 = vst [vmem:[%s386] sm:$0xff] %v2199
        %2288 = vst [vmem:[%s386 + $0x8] sm:$0xff] %v2248
        %2289 = vst [vmem:[%s386 + $0x10] sm:$0xff] %v2201
        %2290 = vst [vmem:[%s386 + $0x18] sm:$0xff] %v2250
        %2291 = vst [vmem:[%s386 + $0x20] sm:$0xff] %v2204
        %2292 = vst [vmem:[%s386 + $0x28] sm:$0xff] %v2253
        %2293 = vst [vmem:[%s386 + $0x30] sm:$0xff] %v2206
        %2294 = vst [vmem:[%s386 + $0x38] sm:$0xff] %v2255
        %2295 = vst [vmem:[%s386 + $0x40] sm:$0xff] %v2209
        %2296 = vst [vmem:[%s386 + $0x48] sm:$0xff] %v2258
        %2297 = vst [vmem:[%s386 + $0x50] sm:$0xff] %v2211
        %2298 = vst [vmem:[%s386 + $0x58] sm:$0xff] %v2260
        %2299 = vst [vmem:[%s386 + $0x60] sm:$0xff] %v2214
        %2300 = vst [vmem:[%s386 + $0x68] sm:$0xff] %v2263
        %2301 = vst [vmem:[%s386 + $0x70] sm:$0xff] %v2216
        %2302 = vst [vmem:[%s386 + $0x78] sm:$0xff] %v2265
        %2303 = vst [vmem:[%s386 + $0x80] sm:$0xff] %v2219
        %2304 = vst [vmem:[%s386 + $0x88] sm:$0xff] %v2268
        %2305 = vst [vmem:[%s386 + $0x90] sm:$0xff] %v2221
        %2306 = vst [vmem:[%s386 + $0x98] sm:$0xff] %v2270
        %2307 = vst [vmem:[%s386 + $0xa0] sm:$0xff] %v2224
        %2308 = vst [vmem:[%s386 + $0xa8] sm:$0xff] %v2273
        %2309 = vst [vmem:[%s386 + $0xb0] sm:$0xff] %v2226
        %2310 = vst [vmem:[%s386 + $0xb8] sm:$0xff] %v2275
        %2311 = vst [vmem:[%s386 + $0xc0] sm:$0xff] %v2229
        %2312 = vst [vmem:[%s386 + $0xc8] sm:$0xff] %v2278
        %2313 = vst [vmem:[%s386 + $0xd0] sm:$0xff] %v2231
        %2314 = vst [vmem:[%s386 + $0xd8] sm:$0xff] %v2280
        %2315 = vst [vmem:[%s386 + $0xe0] sm:$0xff] %v2234
        %2316 = vst [vmem:[%s386 + $0xe8] sm:$0xff] %v2283
        %2317 = vst [vmem:[%s386 + $0xf0] sm:$0xff] %v2236
        %2318 = vst [vmem:[%s386 + $0xf8] sm:$0xff] %v2285
        %p2319 = scmp.lt.s32.totalorder %s23, 1
        %s2320 = scalar_select %p2319, %s23, 1
        %s2321 = smul.addr %s2320, 32
        %s2322 = smul.addr %s2321, 8
        %s2323 = scalar_lea.vmem %s10, %s2322
        // Predicated region
        $region69: #{cbanet_forward.1} parent=59 // pred_check
          %p2324 = pneg %p256
        $region70: #{cbanet_forward.1} parent=59 // pred_check_branch
          %2326 = sbr.rel (%p2324) target = $region72
        $region71: #{cbanet_forward.1} parent=59 // pred_region
          _
        $region72: #{cbanet_forward.1} parent=59 // pred_fallthru
          _
      $region60: #{cbanet_forward.1} parent=5 // pred_fallthru
        _
      %p2327 = scmp.le.s32.totalorder 2, %s18
      // Predicated region
      $region73: #{cbanet_forward.1} parent=5 // pred_check
        %p2328 = pneg %p2327
      $region74: #{cbanet_forward.1} parent=5 // pred_check_branch
        %2330 = sbr.rel (%p2328) target = $region76
      $region75: #{cbanet_forward.1} parent=5 // pred_region
        %s2331 = ssub.s32 %s18, 2
        // Predicated region
        $region77: #{cbanet_forward.1} parent=75 // pred_check
          %p2332 = pneg %p262
        $region78: #{cbanet_forward.1} parent=75 // pred_check_branch
          %2334 = sbr.rel (%p2332) target = $region80
        $region79: #{cbanet_forward.1} parent=75 // pred_region
          %p2335 = scmp.lt.s32.totalorder %s24, 1
          %s2336 = scalar_select %p2335, %s24, 1
          %s2337 = smul.addr %s2336, 32
          %s2338 = smul.addr %s2337, 8
          %s2339 = scalar_lea.vmem %s10, %s2338
        $region80: #{cbanet_forward.1} parent=75 // pred_fallthru
          _
      $region76: #{cbanet_forward.1} parent=5 // pred_fallthru
        _
    $region6: #{cbanet_forward.1} parent=1 // loop_footer
      %s22 = sadd.s32 1, %s18
    $region7: #{cbanet_forward.1} parent=1 // loop_footer_branch
      %17 = sbr.rel target = $region3
    $region8: #{cbanet_forward.1} parent=1 // loop_exit
      _
    %2340 = vsyncpa [#allocation4], 1
    %s2341 = scalar_lea.sflag [#allocation4], 1
    %2342 = vsyncpa %s2341, 1
    %2343 = vsyncpa [#allocation6], 1

</llo_original>
